<compile_context>
chip_gen: v7x
topology: tpu7x:2x2x1
jax: 0.10.0
libtpu: 0.0.40
codegen_flags: <defaults>
</compile_context>

<pallas_src>
import functools

import jax
import jax.numpy as jnp
from jax import lax
from jax.experimental import pallas as pl
from jax.experimental.pallas import tpu as pltpu


# ----------------------------- tiling helper ---------------------------------

def _pick_row_tile(nvox: int, budget_bytes: int = 512 * 1024) -> int:
    """Largest multiple of 128 that divides nvox and keeps one (nvox, tm) f32
    one-hot tile under `budget_bytes`.  Falls back to a single tile."""
    cap = max(128, (budget_bytes // (4 * nvox)) // 128 * 128)
    tm = min(nvox, cap)
    tm = (tm // 128) * 128
    while tm >= 128 and nvox % tm != 0:
        tm -= 128
    if tm < 128:
        tm = nvox
    return tm


# ----------------------------- Pallas kernel ---------------------------------

def _exp_kernel(disp_ref, ident_ref, out_ref, flow_sc, samp_sc, *,
                D, H, W, time_steps, tm):
    """Refs are (1, 3, NVOX) blocks (one batch element), channel-first."""
    NVOX = D * H * W
    n_tiles = NVOX // tm
    inv_scale = 1.0 / (2.0 ** time_steps)          # power of two -> exact

    flow_sc[...] = disp_ref[0] * inv_scale         # (3, NVOX)

    @pl.loop(0, time_steps)
    def _step(_):
        # sampled = grid_sample(flow, identity + flow), row-tiled over output voxels
        @pl.loop(0, n_tiles)
        def _tile(t):
            start = t * tm
            if tm % 128 == 0:
                start = pl.multiple_of(start, 128)

            flow_full = flow_sc[...]                         # (3, NVOX)  MXU LHS
            flow_t = flow_sc[:, pl.ds(start, tm)]            # (3, tm)
            ident_t = ident_ref[0, :, pl.ds(start, tm)]      # (3, tm)

            # normalized coords for this tile of output voxels (lane-dense rows)
            gx = ident_t[0:1] + flow_t[0:1]                  # (1, tm)  x -> width
            gy = ident_t[1:2] + flow_t[1:2]                  # (1, tm)  y -> height
            gz = ident_t[2:3] + flow_t[2:3]                  # (1, tm)  z -> depth

            # unnormalize (align_corners=False): pix = ((g + 1) * size - 1) / 2
            ix = ((gx + 1.0) * W - 1.0) * 0.5
            iy = ((gy + 1.0) * H - 1.0) * 0.5
            iz = ((gz + 1.0) * D - 1.0) * 0.5

            x0 = jnp.floor(ix); y0 = jnp.floor(iy); z0 = jnp.floor(iz)
            wx1 = ix - x0; wy1 = iy - y0; wz1 = iz - z0
            wx0 = 1.0 - wx1; wy0 = 1.0 - wy1; wz0 = 1.0 - wz1

            x0i = x0.astype(jnp.int32); x1i = x0i + 1
            y0i = y0.astype(jnp.int32); y1i = y0i + 1
            z0i = z0.astype(jnp.int32); z1i = z0i + 1

            corners = (
                (x0i, y0i, z0i, wx0 * wy0 * wz0),
                (x1i, y0i, z0i, wx1 * wy0 * wz0),
                (x0i, y1i, z0i, wx0 * wy1 * wz0),
                (x1i, y1i, z0i, wx1 * wy1 * wz0),
                (x0i, y0i, z1i, wx0 * wy0 * wz1),
                (x1i, y0i, z1i, wx1 * wy0 * wz1),
                (x0i, y1i, z1i, wx0 * wy1 * wz1),
                (x1i, y1i, z1i, wx1 * wy1 * wz1),
            )

            # source-voxel flat index along sublanes; tile's output voxels along lanes
            src = lax.broadcasted_iota(jnp.int32, (NVOX, tm), 0)

            acc = jnp.zeros((3, tm), jnp.float32)
            for xi, yi, zi, w in corners:
                # zeros padding mode: an out-of-range corner (e.g. x == W) may alias a
                # *different* valid flat idx, but its weight is zeroed here first, so
                # the aliased contribution is exactly 0.  Do not drop this masking.
                valid = ((xi >= 0) & (xi < W) &
                         (yi >= 0) & (yi < H) &
                         (zi >= 0) & (zi < D))
                wm = jnp.where(valid, w, 0.0)                # (1, tm)
                idx = zi * (H * W) + yi * W + xi             # (1, tm) flat src index
                oh = jnp.where(src == idx, wm, 0.0)          # (NVOX, tm) fused one-hot
                acc = acc + jnp.dot(flow_full, oh,
                                    preferred_element_type=jnp.float32)   # (3, tm)

            samp_sc[:, pl.ds(start, tm)] = acc

        flow_sc[...] = flow_sc[...] + samp_sc[...]

    out_ref[0] = flow_sc[...]                               # lane-dense (3, NVOX) store


# ------------------------------ wrapper ---------------------------------------

def exponential_pallas(displacement_field, identity, time_steps: int = 10):
    """displacement_field: (N, 3, D, H, W); identity: (N, D, H, W, 3)."""
    N, C, D, H, W = displacement_field.shape
    assert C == 3
    NVOX = D * H * W

    # channel-first, spatially flattened (no transpose needed for the NCDHW flow)
    disp_cf = displacement_field.reshape(N, 3, NVOX).astype(jnp.float32)
    ident_cf = jnp.transpose(identity, (0, 4, 1, 2, 3)).reshape(N, 3, NVOX).astype(jnp.float32)

    tm = _pick_row_tile(NVOX)
    kernel = functools.partial(_exp_kernel, D=D, H=H, W=W,
                               time_steps=time_steps, tm=tm)

    # TODO(synk): for N=1 on v7x, add a parallel leading grid axis over row tiles (or
    # corners) so the second TensorCore is used; with grid=(N,) only batch is sharded.
    # TODO(synk): for NVOX beyond a few thousand, replace the O(NVOX^2) one-hot matmul
    # gather with a true gather (jnp.take on VMEM flow / DMA gather).
    out = pl.pallas_call(
        kernel,
        out_shape=jax.ShapeDtypeStruct((N, 3, NVOX), jnp.float32),
        grid_spec=pltpu.PrefetchScalarGridSpec(
            num_scalar_prefetch=0,
            grid=(N,),
            in_specs=[pl.BlockSpec((1, 3, NVOX), lambda b: (b, 0, 0)),
                      pl.BlockSpec((1, 3, NVOX), lambda b: (b, 0, 0))],
            out_specs=pl.BlockSpec((1, 3, NVOX), lambda b: (b, 0, 0)),
            scratch_shapes=[pltpu.VMEM((3, NVOX), jnp.float32),   # running flow
                            pltpu.VMEM((3, NVOX), jnp.float32)],  # sampled flow
        ),
        compiler_params=pltpu.CompilerParams(
            dimension_semantics=("parallel",),
            vmem_limit_bytes=32 << 20,   # well under v7x's 64 MiB physical VMEM
        ),
    )(disp_cf, ident_cf)

    return out.reshape(N, 3, D, H, W)


# --------------------------- pure-JAX reference --------------------------------

def _grid_sample3d_one(inp_b, grid_b):
    """inp_b: (C, D, H, W); grid_b: (D, H, W, 3). bilinear, zeros, align_corners=False."""
    C, D, H, W = inp_b.shape
    gx, gy, gz = grid_b[..., 0], grid_b[..., 1], grid_b[..., 2]
    ix = ((gx + 1.0) * W - 1.0) * 0.5
    iy = ((gy + 1.0) * H - 1.0) * 0.5
    iz = ((gz + 1.0) * D - 1.0) * 0.5
    x0 = jnp.floor(ix).astype(jnp.int32); x1 = x0 + 1
    y0 = jnp.floor(iy).astype(jnp.int32); y1 = y0 + 1
    z0 = jnp.floor(iz).astype(jnp.int32); z1 = z0 + 1
    wx1 = ix - x0; wy1 = iy - y0; wz1 = iz - z0
    wx0 = 1.0 - wx1; wy0 = 1.0 - wy1; wz0 = 1.0 - wz1

    def corner(xi, yi, zi, w):
        valid = ((xi >= 0) & (xi < W) & (yi >= 0) & (yi < H) & (zi >= 0) & (zi < D))
        xc = jnp.clip(xi, 0, W - 1); yc = jnp.clip(yi, 0, H - 1); zc = jnp.clip(zi, 0, D - 1)
        v = inp_b[:, zc, yc, xc]
        return v * (w * valid.astype(w.dtype))[None]

    return (corner(x0, y0, z0, wx0 * wy0 * wz0) + corner(x1, y0, z0, wx1 * wy0 * wz0) +
            corner(x0, y1, z0, wx0 * wy1 * wz0) + corner(x1, y1, z0, wx1 * wy1 * wz0) +
            corner(x0, y0, z1, wx0 * wy0 * wz1) + corner(x1, y0, z1, wx1 * wy0 * wz1) +
            corner(x0, y1, z1, wx0 * wy1 * wz1) + corner(x1, y1, z1, wx1 * wy1 * wz1))


def exponential_ref(displacement_field, identity, time_steps: int = 10):
    flow = displacement_field / (2.0 ** time_steps)
    for _ in range(time_steps):
        grid = identity + jnp.transpose(flow, (0, 2, 3, 4, 1))
        flow = flow + jax.vmap(_grid_sample3d_one)(flow, grid)
    return flow


# ------------------------------- main ------------------------------------------

if __name__ == "__main__":
    N, C, D, H, W = 2, 3, 8, 8, 8
    TIME_STEPS = 10

    key = jax.random.PRNGKey(0)
    displacement = 0.2 * jax.random.normal(key, (N, C, D, H, W), dtype=jnp.float32)

    # identity sampling grid (align_corners=False convention), shape (N, D, H, W, 3)
    zs = (2.0 * jnp.arange(D, dtype=jnp.float32) + 1.0) / D - 1.0
    ys = (2.0 * jnp.arange(H, dtype=jnp.float32) + 1.0) / H - 1.0
    xs = (2.0 * jnp.arange(W, dtype=jnp.float32) + 1.0) / W - 1.0
    zz, yy, xx = jnp.meshgrid(zs, ys, xs, indexing="ij")
    identity = jnp.stack([xx, yy, zz], axis=-1)               # (D, H, W, 3): (x, y, z)
    identity = jnp.broadcast_to(identity, (N, D, H, W, 3))

    out = exponential_pallas(displacement, identity, time_steps=TIME_STEPS)
    out = jax.block_until_ready(out)

    ref = exponential_ref(displacement, identity, time_steps=TIME_STEPS)
    assert out.shape == (N, C, D, H, W)
    assert jnp.allclose(out, ref, rtol=1e-4, atol=1e-4), float(jnp.max(jnp.abs(out - ref)))

    print("KERNEL_OK")
</pallas_src>

<mosaic_0001>
module attributes {stable_mosaic.version = 11 : i64} {
  func.func @_exp_kernel(%arg0: i32, %arg1: memref<1x3x512xf32, #tpu.memory_space<vmem>>, %arg2: memref<1x3x512xf32, #tpu.memory_space<vmem>>, %arg3: memref<1x3x512xf32, #tpu.memory_space<vmem>>, %arg4: memref<3x512xf32, #tpu.memory_space<vmem>>, %arg5: memref<3x512xf32, #tpu.memory_space<vmem>>) attributes {dimension_semantics = [#tpu.dimension_semantics<parallel>], iteration_bounds = array<i64: 2>, scalar_prefetch = 0 : i64, scratch_operands = 2 : i64, tpu.core_type = #tpu.core_type<tc>, window_params = [{transform_indices = @transform_0, window_bounds = array<i64: 1, 3, 512>}, {transform_indices = @transform_1, window_bounds = array<i64: 1, 3, 512>}, {transform_indices = @transform_2, window_bounds = array<i64: 1, 3, 512>}]} {
    %c0 = arith.constant 0 : index
    %c0_0 = arith.constant 0 : index
    %c0_1 = arith.constant 0 : index
    %0 = vector.load %arg1[%c0, %c0_0, %c0_1] : memref<1x3x512xf32, #tpu.memory_space<vmem>>, vector<1x3x512xf32>
    %1 = vector.shape_cast %0 : vector<1x3x512xf32> to vector<3x512xf32>
    %cst = arith.constant 9.765625E-4 : f32
    %2 = vector.broadcast %cst : f32 to vector<3x512xf32>
    %3 = arith.mulf %1, %2 : vector<3x512xf32>
    %c0_2 = arith.constant 0 : index
    %c0_3 = arith.constant 0 : index
    %4 = vector.load %arg4[%c0_2, %c0_3] : memref<3x512xf32, #tpu.memory_space<vmem>>, vector<3x512xf32>
    tpu.vector_store %arg4[%c0_2, %c0_3], %3 {strides = array<i32>} : memref<3x512xf32, #tpu.memory_space<vmem>>, vector<3x512xf32>,
    %c0_i32 = arith.constant 0 : i32
    %c10_i32 = arith.constant 10 : i32
    %5 = arith.addi %c0_i32, %c10_i32 : i32
    %c1_i32 = arith.constant 1 : i32
    scf.for %arg6 = %c0_i32 to %5 step %c1_i32  : i32 {
      %c0_i32_9 = arith.constant 0 : i32
      %c2_i32 = arith.constant 2 : i32
      %10 = arith.addi %c0_i32_9, %c2_i32 : i32
      %c1_i32_10 = arith.constant 1 : i32
      scf.for %arg7 = %c0_i32_9 to %10 step %c1_i32_10  : i32 {
        %c1_i32_18 = arith.constant 1 : i32
        %15 = arith.muli %arg7, %c1_i32_18 : i32
        %c0_i32_19 = arith.constant 0 : i32
        %16 = arith.addi %c0_i32_19, %15 : i32
        %c256_i32 = arith.constant 256 : i32
        %17 = arith.muli %16, %c256_i32 : i32
        %18 = tpu.assume_multiple %17, 128 : i32
        %c0_20 = arith.constant 0 : index
        %c0_21 = arith.constant 0 : index
        %19 = vector.load %arg4[%c0_20, %c0_21] : memref<3x512xf32, #tpu.memory_space<vmem>>, vector<3x512xf32>
        %c0_22 = arith.constant 0 : index
        %20 = arith.index_cast %18 : i32 to index
        %21 = vector.load %arg4[%c0_22, %20] : memref<3x512xf32, #tpu.memory_space<vmem>>, vector<3x256xf32>
        %c0_23 = arith.constant 0 : index
        %c0_24 = arith.constant 0 : index
        %22 = arith.index_cast %18 : i32 to index
        %23 = vector.load %arg2[%c0_23, %c0_24, %22] : memref<1x3x512xf32, #tpu.memory_space<vmem>>, vector<1x3x256xf32>
        %24 = vector.shape_cast %23 : vector<1x3x256xf32> to vector<3x256xf32>
        %25 = vector.extract_strided_slice %24 {offsets = [0, 0], sizes = [1, 256], strides = [1, 1]} : vector<3x256xf32> to vector<1x256xf32>
        %26 = vector.extract_strided_slice %21 {offsets = [0, 0], sizes = [1, 256], strides = [1, 1]} : vector<3x256xf32> to vector<1x256xf32>
        %27 = arith.addf %25, %26 : vector<1x256xf32>
        %28 = vector.extract_strided_slice %24 {offsets = [1, 0], sizes = [1, 256], strides = [1, 1]} : vector<3x256xf32> to vector<1x256xf32>
        %29 = vector.extract_strided_slice %21 {offsets = [1, 0], sizes = [1, 256], strides = [1, 1]} : vector<3x256xf32> to vector<1x256xf32>
        %30 = arith.addf %28, %29 : vector<1x256xf32>
        %31 = vector.extract_strided_slice %24 {offsets = [2, 0], sizes = [1, 256], strides = [1, 1]} : vector<3x256xf32> to vector<1x256xf32>
        %32 = vector.extract_strided_slice %21 {offsets = [2, 0], sizes = [1, 256], strides = [1, 1]} : vector<3x256xf32> to vector<1x256xf32>
        %33 = arith.addf %31, %32 : vector<1x256xf32>
        %cst_25 = arith.constant 1.000000e+00 : f32
        %34 = vector.broadcast %cst_25 : f32 to vector<1x256xf32>
        %35 = arith.addf %27, %34 : vector<1x256xf32>
        %cst_26 = arith.constant 8.000000e+00 : f32
        %36 = vector.broadcast %cst_26 : f32 to vector<1x256xf32>
        %37 = arith.mulf %35, %36 : vector<1x256xf32>
        %cst_27 = arith.constant 1.000000e+00 : f32
        %38 = vector.broadcast %cst_27 : f32 to vector<1x256xf32>
        %39 = arith.subf %37, %38 : vector<1x256xf32>
        %cst_28 = arith.constant 5.000000e-01 : f32
        %40 = vector.broadcast %cst_28 : f32 to vector<1x256xf32>
        %41 = arith.mulf %39, %40 : vector<1x256xf32>
        %cst_29 = arith.constant 1.000000e+00 : f32
        %42 = vector.broadcast %cst_29 : f32 to vector<1x256xf32>
        %43 = arith.addf %30, %42 : vector<1x256xf32>
        %cst_30 = arith.constant 8.000000e+00 : f32
        %44 = vector.broadcast %cst_30 : f32 to vector<1x256xf32>
        %45 = arith.mulf %43, %44 : vector<1x256xf32>
        %cst_31 = arith.constant 1.000000e+00 : f32
        %46 = vector.broadcast %cst_31 : f32 to vector<1x256xf32>
        %47 = arith.subf %45, %46 : vector<1x256xf32>
        %cst_32 = arith.constant 5.000000e-01 : f32
        %48 = vector.broadcast %cst_32 : f32 to vector<1x256xf32>
        %49 = arith.mulf %47, %48 : vector<1x256xf32>
        %cst_33 = arith.constant 1.000000e+00 : f32
        %50 = vector.broadcast %cst_33 : f32 to vector<1x256xf32>
        %51 = arith.addf %33, %50 : vector<1x256xf32>
        %cst_34 = arith.constant 8.000000e+00 : f32
        %52 = vector.broadcast %cst_34 : f32 to vector<1x256xf32>
        %53 = arith.mulf %51, %52 : vector<1x256xf32>
        %cst_35 = arith.constant 1.000000e+00 : f32
        %54 = vector.broadcast %cst_35 : f32 to vector<1x256xf32>
        %55 = arith.subf %53, %54 : vector<1x256xf32>
        %cst_36 = arith.constant 5.000000e-01 : f32
        %56 = vector.broadcast %cst_36 : f32 to vector<1x256xf32>
        %57 = arith.mulf %55, %56 : vector<1x256xf32>
        %58 = math.floor %41 : vector<1x256xf32>
        %59 = math.floor %49 : vector<1x256xf32>
        %60 = math.floor %57 : vector<1x256xf32>
        %61 = arith.subf %41, %58 : vector<1x256xf32>
        %62 = arith.subf %49, %59 : vector<1x256xf32>
        %63 = arith.subf %57, %60 : vector<1x256xf32>
        %cst_37 = arith.constant 1.000000e+00 : f32
        %64 = vector.broadcast %cst_37 : f32 to vector<1x256xf32>
        %65 = arith.subf %64, %61 : vector<1x256xf32>
        %cst_38 = arith.constant 1.000000e+00 : f32
        %66 = vector.broadcast %cst_38 : f32 to vector<1x256xf32>
        %67 = arith.subf %66, %62 : vector<1x256xf32>
        %cst_39 = arith.constant 1.000000e+00 : f32
        %68 = vector.broadcast %cst_39 : f32 to vector<1x256xf32>
        %69 = arith.subf %68, %63 : vector<1x256xf32>
        %70 = arith.fptosi %58 : vector<1x256xf32> to vector<1x256xi32>
        %c1_i32_40 = arith.constant 1 : i32
        %71 = vector.broadcast %c1_i32_40 : i32 to vector<1x256xi32>
        %72 = arith.addi %70, %71 : vector<1x256xi32>
        %73 = arith.fptosi %59 : vector<1x256xf32> to vector<1x256xi32>
        %c1_i32_41 = arith.constant 1 : i32
        %74 = vector.broadcast %c1_i32_41 : i32 to vector<1x256xi32>
        %75 = arith.addi %73, %74 : vector<1x256xi32>
        %76 = arith.fptosi %60 : vector<1x256xf32> to vector<1x256xi32>
        %c1_i32_42 = arith.constant 1 : i32
        %77 = vector.broadcast %c1_i32_42 : i32 to vector<1x256xi32>
        %78 = arith.addi %76, %77 : vector<1x256xi32>
        %79 = arith.mulf %65, %67 : vector<1x256xf32>
        %80 = arith.mulf %79, %69 : vector<1x256xf32>
        %81 = arith.mulf %61, %67 : vector<1x256xf32>
        %82 = arith.mulf %81, %69 : vector<1x256xf32>
        %83 = arith.mulf %65, %62 : vector<1x256xf32>
        %84 = arith.mulf %83, %69 : vector<1x256xf32>
        %85 = arith.mulf %61, %62 : vector<1x256xf32>
        %86 = arith.mulf %85, %69 : vector<1x256xf32>
        %87 = arith.mulf %65, %67 : vector<1x256xf32>
        %88 = arith.mulf %87, %63 : vector<1x256xf32>
        %89 = arith.mulf %61, %67 : vector<1x256xf32>
        %90 = arith.mulf %89, %63 : vector<1x256xf32>
        %91 = arith.mulf %65, %62 : vector<1x256xf32>
        %92 = arith.mulf %91, %63 : vector<1x256xf32>
        %93 = arith.mulf %61, %62 : vector<1x256xf32>
        %94 = arith.mulf %93, %63 : vector<1x256xf32>
        %95 = tpu.iota {dimensions = array<i32: 0>} : vector<512x256xi32>
        %cst_43 = arith.constant 0.000000e+00 : f32
        %96 = vector.broadcast %cst_43 : f32 to vector<3x256xf32>
        %c0_i32_44 = arith.constant 0 : i32
        %97 = vector.broadcast %c0_i32_44 : i32 to vector<1x256xi32>
        %98 = arith.cmpi sge, %70, %97 : vector<1x256xi32>
        %c8_i32 = arith.constant 8 : i32
        %99 = vector.broadcast %c8_i32 : i32 to vector<1x256xi32>
        %100 = arith.cmpi slt, %70, %99 : vector<1x256xi32>
        %101 = arith.andi %98, %100 : vector<1x256xi1>
        %c0_i32_45 = arith.constant 0 : i32
        %102 = vector.broadcast %c0_i32_45 : i32 to vector<1x256xi32>
        %103 = arith.cmpi sge, %73, %102 : vector<1x256xi32>
        %104 = arith.andi %101, %103 : vector<1x256xi1>
        %c8_i32_46 = arith.constant 8 : i32
        %105 = vector.broadcast %c8_i32_46 : i32 to vector<1x256xi32>
        %106 = arith.cmpi slt, %73, %105 : vector<1x256xi32>
        %107 = arith.andi %104, %106 : vector<1x256xi1>
        %c0_i32_47 = arith.constant 0 : i32
        %108 = vector.broadcast %c0_i32_47 : i32 to vector<1x256xi32>
        %109 = arith.cmpi sge, %76, %108 : vector<1x256xi32>
        %110 = arith.andi %107, %109 : vector<1x256xi1>
        %c8_i32_48 = arith.constant 8 : i32
        %111 = vector.broadcast %c8_i32_48 : i32 to vector<1x256xi32>
        %112 = arith.cmpi slt, %76, %111 : vector<1x256xi32>
        %113 = arith.andi %110, %112 : vector<1x256xi1>
        %cst_49 = arith.constant 0.000000e+00 : f32
        %114 = vector.broadcast %cst_49 : f32 to vector<1x256xf32>
        %115 = arith.select %113, %80, %114 : vector<1x256xi1>, vector<1x256xf32>
        %c64_i32 = arith.constant 64 : i32
        %116 = vector.broadcast %c64_i32 : i32 to vector<1x256xi32>
        %117 = arith.muli %76, %116 : vector<1x256xi32>
        %c8_i32_50 = arith.constant 8 : i32
        %118 = vector.broadcast %c8_i32_50 : i32 to vector<1x256xi32>
        %119 = arith.muli %73, %118 : vector<1x256xi32>
        %120 = arith.addi %117, %119 : vector<1x256xi32>
        %121 = arith.addi %120, %70 : vector<1x256xi32>
        %122 = vector.broadcast %121 : vector<1x256xi32> to vector<512x256xi32>
        %123 = arith.cmpi eq, %95, %122 : vector<512x256xi32>
        %cst_51 = arith.constant 0.000000e+00 : f32
        %124 = vector.shape_cast %115 : vector<1x256xf32> to vector<1x256xf32>
        %125 = vector.broadcast %124 : vector<1x256xf32> to vector<512x256xf32>
        %126 = vector.broadcast %cst_51 : f32 to vector<512x256xf32>
        %127 = arith.select %123, %125, %126 : vector<512x256xi1>, vector<512x256xf32>
        %cst_52 = arith.constant dense<0.000000e+00> : vector<3x256xf32>
        %128 = tpu.matmul %19, %127, %cst_52 {dimension_numbers = #tpu.dot_dimension_numbers<[1], [0], [0], [1], [0, 0, 1, 1], [], []>} : vector<3x512xf32>, vector<512x256xf32>, vector<3x256xf32> -> vector<3x256xf32>
        %129 = arith.addf %96, %128 : vector<3x256xf32>
        %c0_i32_53 = arith.constant 0 : i32
        %130 = vector.broadcast %c0_i32_53 : i32 to vector<1x256xi32>
        %131 = arith.cmpi sge, %72, %130 : vector<1x256xi32>
        %c8_i32_54 = arith.constant 8 : i32
        %132 = vector.broadcast %c8_i32_54 : i32 to vector<1x256xi32>
        %133 = arith.cmpi slt, %72, %132 : vector<1x256xi32>
        %134 = arith.andi %131, %133 : vector<1x256xi1>
        %c0_i32_55 = arith.constant 0 : i32
        %135 = vector.broadcast %c0_i32_55 : i32 to vector<1x256xi32>
        %136 = arith.cmpi sge, %73, %135 : vector<1x256xi32>
        %137 = arith.andi %134, %136 : vector<1x256xi1>
        %c8_i32_56 = arith.constant 8 : i32
        %138 = vector.broadcast %c8_i32_56 : i32 to vector<1x256xi32>
        %139 = arith.cmpi slt, %73, %138 : vector<1x256xi32>
        %140 = arith.andi %137, %139 : vector<1x256xi1>
        %c0_i32_57 = arith.constant 0 : i32
        %141 = vector.broadcast %c0_i32_57 : i32 to vector<1x256xi32>
        %142 = arith.cmpi sge, %76, %141 : vector<1x256xi32>
        %143 = arith.andi %140, %142 : vector<1x256xi1>
        %c8_i32_58 = arith.constant 8 : i32
        %144 = vector.broadcast %c8_i32_58 : i32 to vector<1x256xi32>
        %145 = arith.cmpi slt, %76, %144 : vector<1x256xi32>
        %146 = arith.andi %143, %145 : vector<1x256xi1>
        %cst_59 = arith.constant 0.000000e+00 : f32
        %147 = vector.broadcast %cst_59 : f32 to vector<1x256xf32>
        %148 = arith.select %146, %82, %147 : vector<1x256xi1>, vector<1x256xf32>
        %c64_i32_60 = arith.constant 64 : i32
        %149 = vector.broadcast %c64_i32_60 : i32 to vector<1x256xi32>
        %150 = arith.muli %76, %149 : vector<1x256xi32>
        %c8_i32_61 = arith.constant 8 : i32
        %151 = vector.broadcast %c8_i32_61 : i32 to vector<1x256xi32>
        %152 = arith.muli %73, %151 : vector<1x256xi32>
        %153 = arith.addi %150, %152 : vector<1x256xi32>
        %154 = arith.addi %153, %72 : vector<1x256xi32>
        %155 = vector.broadcast %154 : vector<1x256xi32> to vector<512x256xi32>
        %156 = arith.cmpi eq, %95, %155 : vector<512x256xi32>
        %cst_62 = arith.constant 0.000000e+00 : f32
        %157 = vector.shape_cast %148 : vector<1x256xf32> to vector<1x256xf32>
        %158 = vector.broadcast %157 : vector<1x256xf32> to vector<512x256xf32>
        %159 = vector.broadcast %cst_62 : f32 to vector<512x256xf32>
        %160 = arith.select %156, %158, %159 : vector<512x256xi1>, vector<512x256xf32>
        %cst_63 = arith.constant dense<0.000000e+00> : vector<3x256xf32>
        %161 = tpu.matmul %19, %160, %cst_63 {dimension_numbers = #tpu.dot_dimension_numbers<[1], [0], [0], [1], [0, 0, 1, 1], [], []>} : vector<3x512xf32>, vector<512x256xf32>, vector<3x256xf32> -> vector<3x256xf32>
        %162 = arith.addf %129, %161 : vector<3x256xf32>
        %c0_i32_64 = arith.constant 0 : i32
        %163 = vector.broadcast %c0_i32_64 : i32 to vector<1x256xi32>
        %164 = arith.cmpi sge, %70, %163 : vector<1x256xi32>
        %c8_i32_65 = arith.constant 8 : i32
        %165 = vector.broadcast %c8_i32_65 : i32 to vector<1x256xi32>
        %166 = arith.cmpi slt, %70, %165 : vector<1x256xi32>
        %167 = arith.andi %164, %166 : vector<1x256xi1>
        %c0_i32_66 = arith.constant 0 : i32
        %168 = vector.broadcast %c0_i32_66 : i32 to vector<1x256xi32>
        %169 = arith.cmpi sge, %75, %168 : vector<1x256xi32>
        %170 = arith.andi %167, %169 : vector<1x256xi1>
        %c8_i32_67 = arith.constant 8 : i32
        %171 = vector.broadcast %c8_i32_67 : i32 to vector<1x256xi32>
        %172 = arith.cmpi slt, %75, %171 : vector<1x256xi32>
        %173 = arith.andi %170, %172 : vector<1x256xi1>
        %c0_i32_68 = arith.constant 0 : i32
        %174 = vector.broadcast %c0_i32_68 : i32 to vector<1x256xi32>
        %175 = arith.cmpi sge, %76, %174 : vector<1x256xi32>
        %176 = arith.andi %173, %175 : vector<1x256xi1>
        %c8_i32_69 = arith.constant 8 : i32
        %177 = vector.broadcast %c8_i32_69 : i32 to vector<1x256xi32>
        %178 = arith.cmpi slt, %76, %177 : vector<1x256xi32>
        %179 = arith.andi %176, %178 : vector<1x256xi1>
        %cst_70 = arith.constant 0.000000e+00 : f32
        %180 = vector.broadcast %cst_70 : f32 to vector<1x256xf32>
        %181 = arith.select %179, %84, %180 : vector<1x256xi1>, vector<1x256xf32>
        %c64_i32_71 = arith.constant 64 : i32
        %182 = vector.broadcast %c64_i32_71 : i32 to vector<1x256xi32>
        %183 = arith.muli %76, %182 : vector<1x256xi32>
        %c8_i32_72 = arith.constant 8 : i32
        %184 = vector.broadcast %c8_i32_72 : i32 to vector<1x256xi32>
        %185 = arith.muli %75, %184 : vector<1x256xi32>
        %186 = arith.addi %183, %185 : vector<1x256xi32>
        %187 = arith.addi %186, %70 : vector<1x256xi32>
        %188 = vector.broadcast %187 : vector<1x256xi32> to vector<512x256xi32>
        %189 = arith.cmpi eq, %95, %188 : vector<512x256xi32>
        %cst_73 = arith.constant 0.000000e+00 : f32
        %190 = vector.shape_cast %181 : vector<1x256xf32> to vector<1x256xf32>
        %191 = vector.broadcast %190 : vector<1x256xf32> to vector<512x256xf32>
        %192 = vector.broadcast %cst_73 : f32 to vector<512x256xf32>
        %193 = arith.select %189, %191, %192 : vector<512x256xi1>, vector<512x256xf32>
        %cst_74 = arith.constant dense<0.000000e+00> : vector<3x256xf32>
        %194 = tpu.matmul %19, %193, %cst_74 {dimension_numbers = #tpu.dot_dimension_numbers<[1], [0], [0], [1], [0, 0, 1, 1], [], []>} : vector<3x512xf32>, vector<512x256xf32>, vector<3x256xf32> -> vector<3x256xf32>
        %195 = arith.addf %162, %194 : vector<3x256xf32>
        %c0_i32_75 = arith.constant 0 : i32
        %196 = vector.broadcast %c0_i32_75 : i32 to vector<1x256xi32>
        %197 = arith.cmpi sge, %72, %196 : vector<1x256xi32>
        %c8_i32_76 = arith.constant 8 : i32
        %198 = vector.broadcast %c8_i32_76 : i32 to vector<1x256xi32>
        %199 = arith.cmpi slt, %72, %198 : vector<1x256xi32>
        %200 = arith.andi %197, %199 : vector<1x256xi1>
        %c0_i32_77 = arith.constant 0 : i32
        %201 = vector.broadcast %c0_i32_77 : i32 to vector<1x256xi32>
        %202 = arith.cmpi sge, %75, %201 : vector<1x256xi32>
        %203 = arith.andi %200, %202 : vector<1x256xi1>
        %c8_i32_78 = arith.constant 8 : i32
        %204 = vector.broadcast %c8_i32_78 : i32 to vector<1x256xi32>
        %205 = arith.cmpi slt, %75, %204 : vector<1x256xi32>
        %206 = arith.andi %203, %205 : vector<1x256xi1>
        %c0_i32_79 = arith.constant 0 : i32
        %207 = vector.broadcast %c0_i32_79 : i32 to vector<1x256xi32>
        %208 = arith.cmpi sge, %76, %207 : vector<1x256xi32>
        %209 = arith.andi %206, %208 : vector<1x256xi1>
        %c8_i32_80 = arith.constant 8 : i32
        %210 = vector.broadcast %c8_i32_80 : i32 to vector<1x256xi32>
        %211 = arith.cmpi slt, %76, %210 : vector<1x256xi32>
        %212 = arith.andi %209, %211 : vector<1x256xi1>
        %cst_81 = arith.constant 0.000000e+00 : f32
        %213 = vector.broadcast %cst_81 : f32 to vector<1x256xf32>
        %214 = arith.select %212, %86, %213 : vector<1x256xi1>, vector<1x256xf32>
        %c64_i32_82 = arith.constant 64 : i32
        %215 = vector.broadcast %c64_i32_82 : i32 to vector<1x256xi32>
        %216 = arith.muli %76, %215 : vector<1x256xi32>
        %c8_i32_83 = arith.constant 8 : i32
        %217 = vector.broadcast %c8_i32_83 : i32 to vector<1x256xi32>
        %218 = arith.muli %75, %217 : vector<1x256xi32>
        %219 = arith.addi %216, %218 : vector<1x256xi32>
        %220 = arith.addi %219, %72 : vector<1x256xi32>
        %221 = vector.broadcast %220 : vector<1x256xi32> to vector<512x256xi32>
        %222 = arith.cmpi eq, %95, %221 : vector<512x256xi32>
        %cst_84 = arith.constant 0.000000e+00 : f32
        %223 = vector.shape_cast %214 : vector<1x256xf32> to vector<1x256xf32>
        %224 = vector.broadcast %223 : vector<1x256xf32> to vector<512x256xf32>
        %225 = vector.broadcast %cst_84 : f32 to vector<512x256xf32>
        %226 = arith.select %222, %224, %225 : vector<512x256xi1>, vector<512x256xf32>
        %cst_85 = arith.constant dense<0.000000e+00> : vector<3x256xf32>
        %227 = tpu.matmul %19, %226, %cst_85 {dimension_numbers = #tpu.dot_dimension_numbers<[1], [0], [0], [1], [0, 0, 1, 1], [], []>} : vector<3x512xf32>, vector<512x256xf32>, vector<3x256xf32> -> vector<3x256xf32>
        %228 = arith.addf %195, %227 : vector<3x256xf32>
        %c0_i32_86 = arith.constant 0 : i32
        %229 = vector.broadcast %c0_i32_86 : i32 to vector<1x256xi32>
        %230 = arith.cmpi sge, %70, %229 : vector<1x256xi32>
        %c8_i32_87 = arith.constant 8 : i32
        %231 = vector.broadcast %c8_i32_87 : i32 to vector<1x256xi32>
        %232 = arith.cmpi slt, %70, %231 : vector<1x256xi32>
        %233 = arith.andi %230, %232 : vector<1x256xi1>
        %c0_i32_88 = arith.constant 0 : i32
        %234 = vector.broadcast %c0_i32_88 : i32 to vector<1x256xi32>
        %235 = arith.cmpi sge, %73, %234 : vector<1x256xi32>
        %236 = arith.andi %233, %235 : vector<1x256xi1>
        %c8_i32_89 = arith.constant 8 : i32
        %237 = vector.broadcast %c8_i32_89 : i32 to vector<1x256xi32>
        %238 = arith.cmpi slt, %73, %237 : vector<1x256xi32>
        %239 = arith.andi %236, %238 : vector<1x256xi1>
        %c0_i32_90 = arith.constant 0 : i32
        %240 = vector.broadcast %c0_i32_90 : i32 to vector<1x256xi32>
        %241 = arith.cmpi sge, %78, %240 : vector<1x256xi32>
        %242 = arith.andi %239, %241 : vector<1x256xi1>
        %c8_i32_91 = arith.constant 8 : i32
        %243 = vector.broadcast %c8_i32_91 : i32 to vector<1x256xi32>
        %244 = arith.cmpi slt, %78, %243 : vector<1x256xi32>
        %245 = arith.andi %242, %244 : vector<1x256xi1>
        %cst_92 = arith.constant 0.000000e+00 : f32
        %246 = vector.broadcast %cst_92 : f32 to vector<1x256xf32>
        %247 = arith.select %245, %88, %246 : vector<1x256xi1>, vector<1x256xf32>
        %c64_i32_93 = arith.constant 64 : i32
        %248 = vector.broadcast %c64_i32_93 : i32 to vector<1x256xi32>
        %249 = arith.muli %78, %248 : vector<1x256xi32>
        %c8_i32_94 = arith.constant 8 : i32
        %250 = vector.broadcast %c8_i32_94 : i32 to vector<1x256xi32>
        %251 = arith.muli %73, %250 : vector<1x256xi32>
        %252 = arith.addi %249, %251 : vector<1x256xi32>
        %253 = arith.addi %252, %70 : vector<1x256xi32>
        %254 = vector.broadcast %253 : vector<1x256xi32> to vector<512x256xi32>
        %255 = arith.cmpi eq, %95, %254 : vector<512x256xi32>
        %cst_95 = arith.constant 0.000000e+00 : f32
        %256 = vector.shape_cast %247 : vector<1x256xf32> to vector<1x256xf32>
        %257 = vector.broadcast %256 : vector<1x256xf32> to vector<512x256xf32>
        %258 = vector.broadcast %cst_95 : f32 to vector<512x256xf32>
        %259 = arith.select %255, %257, %258 : vector<512x256xi1>, vector<512x256xf32>
        %cst_96 = arith.constant dense<0.000000e+00> : vector<3x256xf32>
        %260 = tpu.matmul %19, %259, %cst_96 {dimension_numbers = #tpu.dot_dimension_numbers<[1], [0], [0], [1], [0, 0, 1, 1], [], []>} : vector<3x512xf32>, vector<512x256xf32>, vector<3x256xf32> -> vector<3x256xf32>
        %261 = arith.addf %228, %260 : vector<3x256xf32>
        %c0_i32_97 = arith.constant 0 : i32
        %262 = vector.broadcast %c0_i32_97 : i32 to vector<1x256xi32>
        %263 = arith.cmpi sge, %72, %262 : vector<1x256xi32>
        %c8_i32_98 = arith.constant 8 : i32
        %264 = vector.broadcast %c8_i32_98 : i32 to vector<1x256xi32>
        %265 = arith.cmpi slt, %72, %264 : vector<1x256xi32>
        %266 = arith.andi %263, %265 : vector<1x256xi1>
        %c0_i32_99 = arith.constant 0 : i32
        %267 = vector.broadcast %c0_i32_99 : i32 to vector<1x256xi32>
        %268 = arith.cmpi sge, %73, %267 : vector<1x256xi32>
        %269 = arith.andi %266, %268 : vector<1x256xi1>
        %c8_i32_100 = arith.constant 8 : i32
        %270 = vector.broadcast %c8_i32_100 : i32 to vector<1x256xi32>
        %271 = arith.cmpi slt, %73, %270 : vector<1x256xi32>
        %272 = arith.andi %269, %271 : vector<1x256xi1>
        %c0_i32_101 = arith.constant 0 : i32
        %273 = vector.broadcast %c0_i32_101 : i32 to vector<1x256xi32>
        %274 = arith.cmpi sge, %78, %273 : vector<1x256xi32>
        %275 = arith.andi %272, %274 : vector<1x256xi1>
        %c8_i32_102 = arith.constant 8 : i32
        %276 = vector.broadcast %c8_i32_102 : i32 to vector<1x256xi32>
        %277 = arith.cmpi slt, %78, %276 : vector<1x256xi32>
        %278 = arith.andi %275, %277 : vector<1x256xi1>
        %cst_103 = arith.constant 0.000000e+00 : f32
        %279 = vector.broadcast %cst_103 : f32 to vector<1x256xf32>
        %280 = arith.select %278, %90, %279 : vector<1x256xi1>, vector<1x256xf32>
        %c64_i32_104 = arith.constant 64 : i32
        %281 = vector.broadcast %c64_i32_104 : i32 to vector<1x256xi32>
        %282 = arith.muli %78, %281 : vector<1x256xi32>
        %c8_i32_105 = arith.constant 8 : i32
        %283 = vector.broadcast %c8_i32_105 : i32 to vector<1x256xi32>
        %284 = arith.muli %73, %283 : vector<1x256xi32>
        %285 = arith.addi %282, %284 : vector<1x256xi32>
        %286 = arith.addi %285, %72 : vector<1x256xi32>
        %287 = vector.broadcast %286 : vector<1x256xi32> to vector<512x256xi32>
        %288 = arith.cmpi eq, %95, %287 : vector<512x256xi32>
        %cst_106 = arith.constant 0.000000e+00 : f32
        %289 = vector.shape_cast %280 : vector<1x256xf32> to vector<1x256xf32>
        %290 = vector.broadcast %289 : vector<1x256xf32> to vector<512x256xf32>
        %291 = vector.broadcast %cst_106 : f32 to vector<512x256xf32>
        %292 = arith.select %288, %290, %291 : vector<512x256xi1>, vector<512x256xf32>
        %cst_107 = arith.constant dense<0.000000e+00> : vector<3x256xf32>
        %293 = tpu.matmul %19, %292, %cst_107 {dimension_numbers = #tpu.dot_dimension_numbers<[1], [0], [0], [1], [0, 0, 1, 1], [], []>} : vector<3x512xf32>, vector<512x256xf32>, vector<3x256xf32> -> vector<3x256xf32>
        %294 = arith.addf %261, %293 : vector<3x256xf32>
        %c0_i32_108 = arith.constant 0 : i32
        %295 = vector.broadcast %c0_i32_108 : i32 to vector<1x256xi32>
        %296 = arith.cmpi sge, %70, %295 : vector<1x256xi32>
        %c8_i32_109 = arith.constant 8 : i32
        %297 = vector.broadcast %c8_i32_109 : i32 to vector<1x256xi32>
        %298 = arith.cmpi slt, %70, %297 : vector<1x256xi32>
        %299 = arith.andi %296, %298 : vector<1x256xi1>
        %c0_i32_110 = arith.constant 0 : i32
        %300 = vector.broadcast %c0_i32_110 : i32 to vector<1x256xi32>
        %301 = arith.cmpi sge, %75, %300 : vector<1x256xi32>
        %302 = arith.andi %299, %301 : vector<1x256xi1>
        %c8_i32_111 = arith.constant 8 : i32
        %303 = vector.broadcast %c8_i32_111 : i32 to vector<1x256xi32>
        %304 = arith.cmpi slt, %75, %303 : vector<1x256xi32>
        %305 = arith.andi %302, %304 : vector<1x256xi1>
        %c0_i32_112 = arith.constant 0 : i32
        %306 = vector.broadcast %c0_i32_112 : i32 to vector<1x256xi32>
        %307 = arith.cmpi sge, %78, %306 : vector<1x256xi32>
        %308 = arith.andi %305, %307 : vector<1x256xi1>
        %c8_i32_113 = arith.constant 8 : i32
        %309 = vector.broadcast %c8_i32_113 : i32 to vector<1x256xi32>
        %310 = arith.cmpi slt, %78, %309 : vector<1x256xi32>
        %311 = arith.andi %308, %310 : vector<1x256xi1>
        %cst_114 = arith.constant 0.000000e+00 : f32
        %312 = vector.broadcast %cst_114 : f32 to vector<1x256xf32>
        %313 = arith.select %311, %92, %312 : vector<1x256xi1>, vector<1x256xf32>
        %c64_i32_115 = arith.constant 64 : i32
        %314 = vector.broadcast %c64_i32_115 : i32 to vector<1x256xi32>
        %315 = arith.muli %78, %314 : vector<1x256xi32>
        %c8_i32_116 = arith.constant 8 : i32
        %316 = vector.broadcast %c8_i32_116 : i32 to vector<1x256xi32>
        %317 = arith.muli %75, %316 : vector<1x256xi32>
        %318 = arith.addi %315, %317 : vector<1x256xi32>
        %319 = arith.addi %318, %70 : vector<1x256xi32>
        %320 = vector.broadcast %319 : vector<1x256xi32> to vector<512x256xi32>
        %321 = arith.cmpi eq, %95, %320 : vector<512x256xi32>
        %cst_117 = arith.constant 0.000000e+00 : f32
        %322 = vector.shape_cast %313 : vector<1x256xf32> to vector<1x256xf32>
        %323 = vector.broadcast %322 : vector<1x256xf32> to vector<512x256xf32>
        %324 = vector.broadcast %cst_117 : f32 to vector<512x256xf32>
        %325 = arith.select %321, %323, %324 : vector<512x256xi1>, vector<512x256xf32>
        %cst_118 = arith.constant dense<0.000000e+00> : vector<3x256xf32>
        %326 = tpu.matmul %19, %325, %cst_118 {dimension_numbers = #tpu.dot_dimension_numbers<[1], [0], [0], [1], [0, 0, 1, 1], [], []>} : vector<3x512xf32>, vector<512x256xf32>, vector<3x256xf32> -> vector<3x256xf32>
        %327 = arith.addf %294, %326 : vector<3x256xf32>
        %c0_i32_119 = arith.constant 0 : i32
        %328 = vector.broadcast %c0_i32_119 : i32 to vector<1x256xi32>
        %329 = arith.cmpi sge, %72, %328 : vector<1x256xi32>
        %c8_i32_120 = arith.constant 8 : i32
        %330 = vector.broadcast %c8_i32_120 : i32 to vector<1x256xi32>
        %331 = arith.cmpi slt, %72, %330 : vector<1x256xi32>
        %332 = arith.andi %329, %331 : vector<1x256xi1>
        %c0_i32_121 = arith.constant 0 : i32
        %333 = vector.broadcast %c0_i32_121 : i32 to vector<1x256xi32>
        %334 = arith.cmpi sge, %75, %333 : vector<1x256xi32>
        %335 = arith.andi %332, %334 : vector<1x256xi1>
        %c8_i32_122 = arith.constant 8 : i32
        %336 = vector.broadcast %c8_i32_122 : i32 to vector<1x256xi32>
        %337 = arith.cmpi slt, %75, %336 : vector<1x256xi32>
        %338 = arith.andi %335, %337 : vector<1x256xi1>
        %c0_i32_123 = arith.constant 0 : i32
        %339 = vector.broadcast %c0_i32_123 : i32 to vector<1x256xi32>
        %340 = arith.cmpi sge, %78, %339 : vector<1x256xi32>
        %341 = arith.andi %338, %340 : vector<1x256xi1>
        %c8_i32_124 = arith.constant 8 : i32
        %342 = vector.broadcast %c8_i32_124 : i32 to vector<1x256xi32>
        %343 = arith.cmpi slt, %78, %342 : vector<1x256xi32>
        %344 = arith.andi %341, %343 : vector<1x256xi1>
        %cst_125 = arith.constant 0.000000e+00 : f32
        %345 = vector.broadcast %cst_125 : f32 to vector<1x256xf32>
        %346 = arith.select %344, %94, %345 : vector<1x256xi1>, vector<1x256xf32>
        %c64_i32_126 = arith.constant 64 : i32
        %347 = vector.broadcast %c64_i32_126 : i32 to vector<1x256xi32>
        %348 = arith.muli %78, %347 : vector<1x256xi32>
        %c8_i32_127 = arith.constant 8 : i32
        %349 = vector.broadcast %c8_i32_127 : i32 to vector<1x256xi32>
        %350 = arith.muli %75, %349 : vector<1x256xi32>
        %351 = arith.addi %348, %350 : vector<1x256xi32>
        %352 = arith.addi %351, %72 : vector<1x256xi32>
        %353 = vector.broadcast %352 : vector<1x256xi32> to vector<512x256xi32>
        %354 = arith.cmpi eq, %95, %353 : vector<512x256xi32>
        %cst_128 = arith.constant 0.000000e+00 : f32
        %355 = vector.shape_cast %346 : vector<1x256xf32> to vector<1x256xf32>
        %356 = vector.broadcast %355 : vector<1x256xf32> to vector<512x256xf32>
        %357 = vector.broadcast %cst_128 : f32 to vector<512x256xf32>
        %358 = arith.select %354, %356, %357 : vector<512x256xi1>, vector<512x256xf32>
        %cst_129 = arith.constant dense<0.000000e+00> : vector<3x256xf32>
        %359 = tpu.matmul %19, %358, %cst_129 {dimension_numbers = #tpu.dot_dimension_numbers<[1], [0], [0], [1], [0, 0, 1, 1], [], []>} : vector<3x512xf32>, vector<512x256xf32>, vector<3x256xf32> -> vector<3x256xf32>
        %360 = arith.addf %327, %359 : vector<3x256xf32>
        %c0_130 = arith.constant 0 : index
        %361 = arith.index_cast %18 : i32 to index
        %362 = vector.load %arg5[%c0_130, %361] : memref<3x512xf32, #tpu.memory_space<vmem>>, vector<3x256xf32>
        tpu.vector_store %arg5[%c0_130, %361], %360 {strides = array<i32>} : memref<3x512xf32, #tpu.memory_space<vmem>>, vector<3x256xf32>,
      }
      %c2_i32_11 = arith.constant 2 : i32
      %c0_12 = arith.constant 0 : index
      %c0_13 = arith.constant 0 : index
      %11 = vector.load %arg4[%c0_12, %c0_13] : memref<3x512xf32, #tpu.memory_space<vmem>>, vector<3x512xf32>
      %c0_14 = arith.constant 0 : index
      %c0_15 = arith.constant 0 : index
      %12 = vector.load %arg5[%c0_14, %c0_15] : memref<3x512xf32, #tpu.memory_space<vmem>>, vector<3x512xf32>
      %13 = arith.addf %11, %12 : vector<3x512xf32>
      %c0_16 = arith.constant 0 : index
      %c0_17 = arith.constant 0 : index
      %14 = vector.load %arg4[%c0_16, %c0_17] : memref<3x512xf32, #tpu.memory_space<vmem>>, vector<3x512xf32>
      tpu.vector_store %arg4[%c0_16, %c0_17], %13 {strides = array<i32>} : memref<3x512xf32, #tpu.memory_space<vmem>>, vector<3x512xf32>,
    }
    %c0_4 = arith.constant 0 : index
    %c0_5 = arith.constant 0 : index
    %6 = vector.load %arg4[%c0_4, %c0_5] : memref<3x512xf32, #tpu.memory_space<vmem>>, vector<3x512xf32>
    %c0_6 = arith.constant 0 : index
    %c0_7 = arith.constant 0 : index
    %c0_8 = arith.constant 0 : index
    %7 = vector.load %arg3[%c0_6, %c0_7, %c0_8] : memref<1x3x512xf32, #tpu.memory_space<vmem>>, vector<1x3x512xf32>
    %8 = vector.shape_cast %7 : vector<1x3x512xf32> to vector<3x512xf32>
    %9 = vector.shape_cast %6 : vector<3x512xf32> to vector<1x3x512xf32>
    tpu.vector_store %arg3[%c0_6, %c0_7, %c0_8], %9 {strides = array<i32>} : memref<1x3x512xf32, #tpu.memory_space<vmem>>, vector<1x3x512xf32>,
    return
  }
  func.func @transform_0(%arg0: i32) -> (i32, i32, i32) {
    %c0_i32 = arith.constant 0 : i32
    %c0_i32_0 = arith.constant 0 : i32
    %c0_i32_1 = arith.constant 0 : i32
    return %arg0, %c0_i32, %c0_i32_0 : i32, i32, i32
  }
  func.func @transform_1(%arg0: i32) -> (i32, i32, i32) {
    %c0_i32 = arith.constant 0 : i32
    %c0_i32_0 = arith.constant 0 : i32
    %c0_i32_1 = arith.constant 0 : i32
    return %arg0, %c0_i32, %c0_i32_0 : i32, i32, i32
  }
  func.func @transform_2(%arg0: i32) -> (i32, i32, i32) {
    %c0_i32 = arith.constant 0 : i32
    %c0_i32_0 = arith.constant 0 : i32
    %c0_i32_1 = arith.constant 0 : i32
    return %arg0, %c0_i32, %c0_i32_0 : i32, i32, i32
  }
}

</mosaic_0001>

<llo_original>
// kernel: tpu_custom_call.1
$region0: #{tpu_custom_call.1}
  #allocation0 [shape = 'u32[]', space=smem, size = 0x4, offset = 0x4, fixed_abs, tag = 'smem constant byte address 0x4 - core index']
  #allocation1 [shape = 'u32[144,128]{1,0:T(1,128)}', space=vmem, size = 0x12000, scoped, tag = 'internal scratch']
  #allocation2 [shape = 'f32[3,512]{1,0:T(4,128)}', space=vmem, size = 0x2000, scoped, tag = 'scratch operand']
  #allocation3 [shape = 'f32[3,512]{1,0:T(4,128)}', space=vmem, size = 0x2000, scoped, tag = 'scratch operand']
  %s0 = inlined_call_operand.vmem [shape: f32[2,3,512], index: 0, kind: input, shape index: {}]
  %s1 = inlined_call_operand.vmem [shape: f32[2,3,512], index: 1, kind: input, shape index: {}]
  %s2 = inlined_call_operand.vmem [shape: f32[2,3,512], index: 2, kind: output, shape index: {}]
  %s3 = sld [smem:[#allocation0]]
  $region55: #{tpu_custom_call.1} parent=0
    _
  %s5 = ssub.s32 1, %s3
  %s6 = scalar_select 0, %s5, %s3
  loop: start=0, step=1, limit=4
  $region2: #{tpu_custom_call.1} parent=0 // loop_pre_header
    _
  $region3: #{tpu_custom_call.1} parent=0 // loop_header
    %s8 = sphi 0, %s12
    %p9 = scmp.ge.s32.totalorder %s8, 4
    %s18 = sphi 0, %s20
    %s21 = sphi 0, %s18
    %s22 = sphi 0, %s21
    %s38 = sphi 0, %s22
    %s44 = sphi 0, %s46
    %s47 = sphi 0, %s44
    %s48 = sphi 0, %s47
    %s64 = sphi 0, %s48
    %s70 = sphi 0, %s72
    %s73 = sphi 0, %s70
    %s74 = sphi 0, %s73
    %s90 = sphi 0, %s74
  $region4: #{tpu_custom_call.1} parent=0 // loop_header_branch
    %11 = sbr.rel (%p9) target = $region8
  $region5: #{tpu_custom_call.1} parent=0 // loop_body
    %s13 = ssub.s32 %s8, 1
    %s14 = ssub.s32 %s8, 2
    %s15 = sadd.s32 %s8, 1
    %s16 = ssub.s32 %s8, %s15
    %p17 = scmp.eq.s32.totalorder %s16, 0
    %s19 = sadd.s32 %s18, 1
    %s20 = scalar_select %p17, %s18, %s19
    %p23 = pneg %p17
    %p24 = scmp.eq.s32.totalorder %s8, 1
    %p25 = por %p23, %p24
    %p26 = scmp.ne.s32.totalorder %s18, %s21
    %p27 = scmp.eq.s32.totalorder %s8, 0
    %p28 = por %p26, %p27
    %p29 = scmp.ne.s32.totalorder %s18, %s21
    %p30 = scmp.eq.s32.totalorder %s13, 1
    %p31 = por %p29, %p30
    %p32 = scmp.ne.s32.totalorder %s21, %s22
    %p33 = scmp.eq.s32.totalorder %s13, 0
    %p34 = por %p32, %p33
    %p35 = scmp.ne.s32.totalorder %s21, %s22
    %p36 = scmp.eq.s32.totalorder %s14, 1
    %p37 = por %p35, %p36
    %p39 = scmp.ne.s32.totalorder %s22, %s38
    %p40 = scmp.eq.s32.totalorder %s14, 0
    %p41 = por %p39, %p40
    %s42 = ssub.s32 %s8, %s15
    %p43 = scmp.eq.s32.totalorder %s42, 0
    %s45 = sadd.s32 %s44, 1
    %s46 = scalar_select %p43, %s44, %s45
    %p49 = pneg %p43
    %p50 = scmp.eq.s32.totalorder %s8, 1
    %p51 = por %p49, %p50
    %p52 = scmp.ne.s32.totalorder %s44, %s47
    %p53 = scmp.eq.s32.totalorder %s8, 0
    %p54 = por %p52, %p53
    %p55 = scmp.ne.s32.totalorder %s44, %s47
    %p56 = scmp.eq.s32.totalorder %s13, 1
    %p57 = por %p55, %p56
    %p58 = scmp.ne.s32.totalorder %s47, %s48
    %p59 = scmp.eq.s32.totalorder %s13, 0
    %p60 = por %p58, %p59
    %p61 = scmp.ne.s32.totalorder %s47, %s48
    %p62 = scmp.eq.s32.totalorder %s14, 1
    %p63 = por %p61, %p62
    %p65 = scmp.ne.s32.totalorder %s48, %s64
    %p66 = scmp.eq.s32.totalorder %s14, 0
    %p67 = por %p65, %p66
    %s68 = ssub.s32 %s8, %s15
    %p69 = scmp.eq.s32.totalorder %s68, 0
    %s71 = sadd.s32 %s70, 1
    %s72 = scalar_select %p69, %s70, %s71
    %p75 = pneg %p69
    %p76 = scmp.eq.s32.totalorder %s8, 1
    %p77 = por %p75, %p76
    %p78 = scmp.ne.s32.totalorder %s70, %s73
    %p79 = scmp.eq.s32.totalorder %s8, 0
    %p80 = por %p78, %p79
    %p81 = scmp.ne.s32.totalorder %s70, %s73
    %p82 = scmp.eq.s32.totalorder %s13, 1
    %p83 = por %p81, %p82
    %p84 = scmp.ne.s32.totalorder %s73, %s74
    %p85 = scmp.eq.s32.totalorder %s13, 0
    %p86 = por %p84, %p85
    %p87 = scmp.ne.s32.totalorder %s73, %s74
    %p88 = scmp.eq.s32.totalorder %s14, 1
    %p89 = por %p87, %p88
    %p91 = scmp.ne.s32.totalorder %s74, %s90
    %p92 = scmp.eq.s32.totalorder %s14, 0
    %p93 = por %p91, %p92
    %p94 = scmp.le.s32.totalorder 1, %s8
    %p95 = scmp.lt.s32.totalorder %s8, 3
    %p96 = pnand %p94, %p95
    %p97 = pneg %p96
    // Predicated region
    $region9: #{tpu_custom_call.1} parent=5 // pred_check
      _
    $region10: #{tpu_custom_call.1} parent=5 // pred_check_branch
      %99 = sbr.rel (%p96) target = $region12
    $region11: #{tpu_custom_call.1} parent=5 // pred_region
      %s100 = ssub.s32 %s8, 1
    $region12: #{tpu_custom_call.1} parent=5 // pred_fallthru
      _
    %p101 = scmp.lt.s32.totalorder %s8, 2
    // Predicated region
    $region13: #{tpu_custom_call.1} parent=5 // pred_check
      %p102 = pneg %p101
    $region14: #{tpu_custom_call.1} parent=5 // pred_check_branch
      %104 = sbr.rel (%p102) target = $region16
    $region15: #{tpu_custom_call.1} parent=5 // pred_region
      // Predicated region
      $region17: #{tpu_custom_call.1} parent=15 // pred_check
        %p105 = pneg %p28
      $region18: #{tpu_custom_call.1} parent=15 // pred_check_branch
        %107 = sbr.rel (%p105) target = $region20
      $region19: #{tpu_custom_call.1} parent=15 // pred_region
        %p108 = scmp.lt.s32.totalorder %s8, 1
        %s109 = scalar_select %p108, %s8, 1
        %s110 = smul.addr %s109, 4
        %s111 = smul.addr %s110, 4
        %s112 = scalar_lea.vmem %s0, %s111
      $region20: #{tpu_custom_call.1} parent=15 // pred_fallthru
        _
      // Predicated region
      $region21: #{tpu_custom_call.1} parent=15 // pred_check
        %p113 = pneg %p54
      $region22: #{tpu_custom_call.1} parent=15 // pred_check_branch
        %115 = sbr.rel (%p113) target = $region24
      $region23: #{tpu_custom_call.1} parent=15 // pred_region
        %p116 = scmp.lt.s32.totalorder %s8, 1
        %s117 = scalar_select %p116, %s8, 1
        %s118 = smul.addr %s117, 4
        %s119 = smul.addr %s118, 4
        %s120 = scalar_lea.vmem %s1, %s119
      $region24: #{tpu_custom_call.1} parent=15 // pred_fallthru
        _
    $region16: #{tpu_custom_call.1} parent=5 // pred_fallthru
      _
    %p121 = scmp.le.s32.totalorder 1, %s8
    %p122 = scmp.lt.s32.totalorder %s8, 3
    %p123 = pnand %p121, %p122
    %p124 = pneg %p123
    // Predicated region
    $region25: #{tpu_custom_call.1} parent=5 // pred_check
      _
    $region26: #{tpu_custom_call.1} parent=5 // pred_check_branch
      %126 = sbr.rel (%p123) target = $region28
    $region27: #{tpu_custom_call.1} parent=5 // pred_region
      %s127 = ssub.s32 %s8, 1
      %p128 = scmp.lt.s32.totalorder %s13, 1
      %s129 = scalar_select %p128, %s13, 1
      %s130 = smul.addr %s129, 4
      %s131 = smul.addr %s130, 4
      %s132 = scalar_lea.vmem %s0, %s131
      %p133 = pneg %p34
      %p134 = pneg %p31
      %p135 = scmp.lt.s32.totalorder %s13, 1
      %s136 = scalar_select %p135, %s13, 1
      %s137 = smul.addr %s136, 4
      %s138 = smul.addr %s137, 4
      %s139 = scalar_lea.vmem %s1, %s138
      %p140 = pneg %p60
      %p141 = pneg %p57
      %p142 = pneg %p86
      %p143 = pneg %p83
      %p144 = scmp.lt.s32.totalorder %s13, 1
      %s145 = scalar_select %p144, %s13, 1
      %s146 = smul.addr %s145, 4
      %s147 = smul.addr %s146, 4
      %s148 = scalar_lea.vmem %s2, %s147
      %p149 = scmp.lt.s32.totalorder %s13, 1
      %s150 = scalar_select %p149, %s13, 1
      %s151 = smul.addr %s150, 4
      %s152 = smul.addr %s151, 4
      %s153 = scalar_lea.vmem %s0, %s152
      %p154 = scmp.lt.s32.totalorder %s13, 1
      %s155 = scalar_select %p154, %s13, 1
      %s156 = smul.addr %s155, 4
      %s157 = smul.addr %s156, 4
      %s158 = scalar_lea.vmem %s1, %s157
      %p159 = scmp.lt.s32.totalorder %s13, 1
      %s160 = scalar_select %p159, %s13, 1
      %s161 = smul.addr %s160, 4
      %s162 = smul.addr %s161, 4
      %s163 = scalar_lea.vmem %s2, %s162
      %v164 = vld [vmem:[%s153] sm:$0x77]
      %v165 = vld [vmem:[%s153 + $0x8] sm:$0x77]
      %v166 = vmul.f32 %v164, 0.0009765625
      %v167 = vmul.f32 %v165, 0.0009765625
      %168 = vst [vmem:[#allocation2] sm:$0x77] %v166
      %169 = vst [vmem:[#allocation2 + $0x8] sm:$0x77] %v167
      loop: start=0, step=1, limit=10
      $region29: #{tpu_custom_call.1} parent=27 // loop_pre_header
        _
      $region30: #{tpu_custom_call.1} parent=27 // loop_header
        %s171 = sphi 0, %s175
        %p172 = scmp.ge.s32.totalorder %s171, 10
      $region31: #{tpu_custom_call.1} parent=27 // loop_header_branch
        %174 = sbr.rel (%p172) target = $region35
      $region32: #{tpu_custom_call.1} parent=27 // loop_body
        loop: start=0, step=1, limit=2
        $region36: #{tpu_custom_call.1} parent=32 // loop_pre_header
          _
        $region37: #{tpu_custom_call.1} parent=32 // loop_header
          %s177 = sphi 0, %s181
          %p178 = scmp.ge.s32.totalorder %s177, 2
        $region38: #{tpu_custom_call.1} parent=32 // loop_header_branch
          %180 = sbr.rel (%p178) target = $region42
        $region39: #{tpu_custom_call.1} parent=32 // loop_body
          %s182 = smul.u32 %s177, 256
          %v183 = vld [vmem:[#allocation2] sm:$0x77]
          %v184 = vld [vmem:[#allocation2 + $0x8] sm:$0x77]
          %s185 = sshra.s32 %s182, 7
          %s186 = sand.u32 %s182, 127
          %s187 = smul.addr %s185, 4
          %s188 = scalar_lea.vmem [#allocation2], %s187
          %v189 = vld [vmem:[%s188] sm:$0x77]
          %s190 = smul.addr %s185, 4
          %s191 = scalar_lea.vmem %s158, %s190
          %v192 = vld [vmem:[%s191] sm:$0x77]
          %v193 = vadd.f32 %v192, %v189
          %v194 = vadd.f32 %v193, 1.0
          %v195 = vmul.f32 %v194, 8.0
          %v196 = vsub.f32 %v195, 1.0
          %v197 = vmul.f32 %v196, 0.5
          %v198 = vfloor.f32 %v197
          %v199 = vsub.f32 %v197, %v198
          %v200 = vsub.f32 1.0, %v199
          %v201 = vcvt.f32.s32.to.zero.pseudo %v198
          %v202 = vadd.s32 %v201, 1
          %v204 = vrot.slane %v200, 5
          %v205 = vrot.slane %v204, 4
          %v207 = vmul.f32 %v200, %v205
          %v208 = vrot.slane %v200, 6
          %v209 = vrot.slane %v208, 4
          %v211 = vmul.f32 %v207, %v209
          %v212 = vmul.f32 %v199, %v205
          %v213 = vmul.f32 %v212, %v209
          %v215 = vrot.slane %v199, 5
          %v216 = vrot.slane %v215, 4
          %v218 = vmul.f32 %v200, %v216
          %v219 = vmul.f32 %v218, %v209
          %v220 = vmul.f32 %v199, %v216
          %v221 = vmul.f32 %v220, %v209
          %v222 = vrot.slane %v199, 6
          %v223 = vrot.slane %v222, 4
          %v225 = vmul.f32 %v207, %v223
          %v226 = vmul.f32 %v212, %v223
          %v227 = vmul.f32 %v218, %v223
          %v228 = vmul.f32 %v220, %v223
          %v229 = vlaneseq
          %v230 = vshrl.u32 %v229, 7
          %v231 = vadd.s32 %v230, 8
          %v232 = vadd.s32 %v230, 16
          %v233 = vadd.s32 %v230, 24
          %v234 = vadd.s32 %v230, 32
          %v235 = vadd.s32 %v230, 40
          %v236 = vadd.s32 %v230, 48
          %v237 = vadd.s32 %v230, 56
          %v238 = vadd.s32 %v230, 64
          %v239 = vadd.s32 %v230, 72
          %v240 = vadd.s32 %v230, 80
          %v241 = vadd.s32 %v230, 88
          %v242 = vadd.s32 %v230, 96
          %v243 = vadd.s32 %v230, 104
          %v244 = vadd.s32 %v230, 112
          %v245 = vadd.s32 %v230, 120
          %v246 = vadd.s32 %v230, 128
          %v247 = vadd.s32 %v230, 136
          %v248 = vadd.s32 %v230, 144
          %v249 = vadd.s32 %v230, 152
          %v250 = vadd.s32 %v230, 160
          %v251 = vadd.s32 %v230, 168
          %v252 = vadd.s32 %v230, 176
          %v253 = vadd.s32 %v230, 184
          %v254 = vadd.s32 %v230, 192
          %v255 = vadd.s32 %v230, 200
          %v256 = vadd.s32 %v230, 208
          %v257 = vadd.s32 %v230, 216
          %v258 = vadd.s32 %v230, 224
          %v259 = vadd.s32 %v230, 232
          %v260 = vadd.s32 %v230, 240
          %v261 = vadd.s32 %v230, 248
          %v262 = vadd.s32 %v230, 256
          %v263 = vadd.s32 %v230, 264
          %v264 = vadd.s32 %v230, 272
          %v265 = vadd.s32 %v230, 280
          %v266 = vadd.s32 %v230, 288
          %v267 = vadd.s32 %v230, 296
          %v268 = vadd.s32 %v230, 304
          %v269 = vadd.s32 %v230, 312
          %v270 = vadd.s32 %v230, 320
          %v271 = vadd.s32 %v230, 328
          %v272 = vadd.s32 %v230, 336
          %v273 = vadd.s32 %v230, 344
          %v274 = vadd.s32 %v230, 352
          %v275 = vadd.s32 %v230, 360
          %v276 = vadd.s32 %v230, 368
          %v277 = vadd.s32 %v230, 376
          %v278 = vadd.s32 %v230, 384
          %v279 = vadd.s32 %v230, 392
          %v280 = vadd.s32 %v230, 400
          %v281 = vadd.s32 %v230, 408
          %v282 = vadd.s32 %v230, 416
          %v283 = vadd.s32 %v230, 424
          %v284 = vadd.s32 %v230, 432
          %v285 = vadd.s32 %v230, 440
          %v286 = vadd.s32 %v230, 448
          %v287 = vadd.s32 %v230, 456
          %v288 = vadd.s32 %v230, 464
          %v289 = vadd.s32 %v230, 472
          %v290 = vadd.s32 %v230, 480
          %v291 = vadd.s32 %v230, 488
          %v292 = vadd.s32 %v230, 496
          %v293 = vadd.s32 %v230, 504
          %vm294 = vcmp.ge.s32.totalorder %v201, 0
          %vm295 = vcmp.lt.s32.totalorder %v201, 8
          %vm296 = vmand %vm294, %vm295
          %v297 = vsel %vm294, 1, 0
          %v298 = vrot.slane %v297, 5
          %v299 = vrot.slane %v298, 4
          %vm300 = vcmp.ne.s32.totalorder %v299, 0
          %vm301 = vmand %vm296, %vm300
          %v302 = vsel %vm295, 1, 0
          %v303 = vrot.slane %v302, 5
          %v304 = vrot.slane %v303, 4
          %vm305 = vcmp.ne.s32.totalorder %v304, 0
          %vm306 = vmand %vm301, %vm305
          %v307 = vrot.slane %v297, 6
          %v308 = vrot.slane %v307, 4
          %vm309 = vcmp.ne.s32.totalorder %v308, 0
          %vm310 = vmand %vm306, %vm309
          %v311 = vrot.slane %v302, 6
          %v312 = vrot.slane %v311, 4
          %vm313 = vcmp.ne.s32.totalorder %v312, 0
          %vm314 = vmand %vm310, %vm313
          %v315 = vsel %vm314, %v211, 0.0
          %v316 = vmul.u32 %v201, 64
          %v317 = vmul.u32 %v201, 8
          %v318 = vrot.slane %v317, 7
          %v319 = vadd.s32 %v316, %v318
          %v320 = vrot.slane %v201, 6
          %v321 = vadd.s32 %v319, %v320
          %v322 = vlaneseq
          %v323 = vshrl.u32 %v322, 7
          %v324 = vsub.s32 2, %v323
          %v325 = vrot.slane %v321, %v324
          %v326 = vlaneseq
          %v327 = vshrl.u32 %v326, 7
          %v328 = vsub.s32 6, %v327
          %v329 = vrot.slane %v321, %v328
          %v330 = vlaneseq
          %v331 = vshrl.u32 %v330, 7
          %v332 = vsub.s32 2, %v331
          %v333 = vrot.slane %v325, %v332
          %v334 = vlaneseq
          %v335 = vshrl.u32 %v334, 7
          %v336 = vsub.s32 2, %v335
          %v337 = vrot.slane %v329, %v336
          %vm338 = vcmp.eq.s32.totalorder %v230, %v333
          %vm339 = vcmp.eq.s32.totalorder %v230, %v337
          %vm340 = vcmp.eq.s32.totalorder %v231, %v333
          %vm341 = vcmp.eq.s32.totalorder %v231, %v337
          %vm342 = vcmp.eq.s32.totalorder %v232, %v333
          %vm343 = vcmp.eq.s32.totalorder %v232, %v337
          %vm344 = vcmp.eq.s32.totalorder %v233, %v333
          %vm345 = vcmp.eq.s32.totalorder %v233, %v337
          %vm346 = vcmp.eq.s32.totalorder %v234, %v333
          %vm347 = vcmp.eq.s32.totalorder %v234, %v337
          %vm348 = vcmp.eq.s32.totalorder %v235, %v333
          %vm349 = vcmp.eq.s32.totalorder %v235, %v337
          %vm350 = vcmp.eq.s32.totalorder %v236, %v333
          %vm351 = vcmp.eq.s32.totalorder %v236, %v337
          %vm352 = vcmp.eq.s32.totalorder %v237, %v333
          %vm353 = vcmp.eq.s32.totalorder %v237, %v337
          %vm354 = vcmp.eq.s32.totalorder %v238, %v333
          %vm355 = vcmp.eq.s32.totalorder %v238, %v337
          %vm356 = vcmp.eq.s32.totalorder %v239, %v333
          %vm357 = vcmp.eq.s32.totalorder %v239, %v337
          %vm358 = vcmp.eq.s32.totalorder %v240, %v333
          %vm359 = vcmp.eq.s32.totalorder %v240, %v337
          %vm360 = vcmp.eq.s32.totalorder %v241, %v333
          %vm361 = vcmp.eq.s32.totalorder %v241, %v337
          %vm362 = vcmp.eq.s32.totalorder %v242, %v333
          %vm363 = vcmp.eq.s32.totalorder %v242, %v337
          %vm364 = vcmp.eq.s32.totalorder %v243, %v333
          %vm365 = vcmp.eq.s32.totalorder %v243, %v337
          %vm366 = vcmp.eq.s32.totalorder %v244, %v333
          %vm367 = vcmp.eq.s32.totalorder %v244, %v337
          %vm368 = vcmp.eq.s32.totalorder %v245, %v333
          %vm369 = vcmp.eq.s32.totalorder %v245, %v337
          %vm370 = vcmp.eq.s32.totalorder %v246, %v333
          %vm371 = vcmp.eq.s32.totalorder %v246, %v337
          %vm372 = vcmp.eq.s32.totalorder %v247, %v333
          %vm373 = vcmp.eq.s32.totalorder %v247, %v337
          %vm374 = vcmp.eq.s32.totalorder %v248, %v333
          %vm375 = vcmp.eq.s32.totalorder %v248, %v337
          %vm376 = vcmp.eq.s32.totalorder %v249, %v333
          %vm377 = vcmp.eq.s32.totalorder %v249, %v337
          %vm378 = vcmp.eq.s32.totalorder %v250, %v333
          %vm379 = vcmp.eq.s32.totalorder %v250, %v337
          %vm380 = vcmp.eq.s32.totalorder %v251, %v333
          %vm381 = vcmp.eq.s32.totalorder %v251, %v337
          %vm382 = vcmp.eq.s32.totalorder %v252, %v333
          %vm383 = vcmp.eq.s32.totalorder %v252, %v337
          %vm384 = vcmp.eq.s32.totalorder %v253, %v333
          %vm385 = vcmp.eq.s32.totalorder %v253, %v337
          %vm386 = vcmp.eq.s32.totalorder %v254, %v333
          %vm387 = vcmp.eq.s32.totalorder %v254, %v337
          %vm388 = vcmp.eq.s32.totalorder %v255, %v333
          %vm389 = vcmp.eq.s32.totalorder %v255, %v337
          %vm390 = vcmp.eq.s32.totalorder %v256, %v333
          %vm391 = vcmp.eq.s32.totalorder %v256, %v337
          %vm392 = vcmp.eq.s32.totalorder %v257, %v333
          %vm393 = vcmp.eq.s32.totalorder %v257, %v337
          %vm394 = vcmp.eq.s32.totalorder %v258, %v333
          %vm395 = vcmp.eq.s32.totalorder %v258, %v337
          %vm396 = vcmp.eq.s32.totalorder %v259, %v333
          %vm397 = vcmp.eq.s32.totalorder %v259, %v337
          %vm398 = vcmp.eq.s32.totalorder %v260, %v333
          %vm399 = vcmp.eq.s32.totalorder %v260, %v337
          %vm400 = vcmp.eq.s32.totalorder %v261, %v333
          %vm401 = vcmp.eq.s32.totalorder %v261, %v337
          %vm402 = vcmp.eq.s32.totalorder %v262, %v333
          %vm403 = vcmp.eq.s32.totalorder %v262, %v337
          %vm404 = vcmp.eq.s32.totalorder %v263, %v333
          %vm405 = vcmp.eq.s32.totalorder %v263, %v337
          %vm406 = vcmp.eq.s32.totalorder %v264, %v333
          %vm407 = vcmp.eq.s32.totalorder %v264, %v337
          %vm408 = vcmp.eq.s32.totalorder %v265, %v333
          %vm409 = vcmp.eq.s32.totalorder %v265, %v337
          %vm410 = vcmp.eq.s32.totalorder %v266, %v333
          %vm411 = vcmp.eq.s32.totalorder %v266, %v337
          %vm412 = vcmp.eq.s32.totalorder %v267, %v333
          %vm413 = vcmp.eq.s32.totalorder %v267, %v337
          %vm414 = vcmp.eq.s32.totalorder %v268, %v333
          %vm415 = vcmp.eq.s32.totalorder %v268, %v337
          %vm416 = vcmp.eq.s32.totalorder %v269, %v333
          %vm417 = vcmp.eq.s32.totalorder %v269, %v337
          %vm418 = vcmp.eq.s32.totalorder %v270, %v333
          %vm419 = vcmp.eq.s32.totalorder %v270, %v337
          %vm420 = vcmp.eq.s32.totalorder %v271, %v333
          %vm421 = vcmp.eq.s32.totalorder %v271, %v337
          %vm422 = vcmp.eq.s32.totalorder %v272, %v333
          %vm423 = vcmp.eq.s32.totalorder %v272, %v337
          %vm424 = vcmp.eq.s32.totalorder %v273, %v333
          %vm425 = vcmp.eq.s32.totalorder %v273, %v337
          %vm426 = vcmp.eq.s32.totalorder %v274, %v333
          %vm427 = vcmp.eq.s32.totalorder %v274, %v337
          %vm428 = vcmp.eq.s32.totalorder %v275, %v333
          %vm429 = vcmp.eq.s32.totalorder %v275, %v337
          %vm430 = vcmp.eq.s32.totalorder %v276, %v333
          %vm431 = vcmp.eq.s32.totalorder %v276, %v337
          %vm432 = vcmp.eq.s32.totalorder %v277, %v333
          %vm433 = vcmp.eq.s32.totalorder %v277, %v337
          %vm434 = vcmp.eq.s32.totalorder %v278, %v333
          %vm435 = vcmp.eq.s32.totalorder %v278, %v337
          %vm436 = vcmp.eq.s32.totalorder %v279, %v333
          %vm437 = vcmp.eq.s32.totalorder %v279, %v337
          %vm438 = vcmp.eq.s32.totalorder %v280, %v333
          %vm439 = vcmp.eq.s32.totalorder %v280, %v337
          %vm440 = vcmp.eq.s32.totalorder %v281, %v333
          %vm441 = vcmp.eq.s32.totalorder %v281, %v337
          %vm442 = vcmp.eq.s32.totalorder %v282, %v333
          %vm443 = vcmp.eq.s32.totalorder %v282, %v337
          %vm444 = vcmp.eq.s32.totalorder %v283, %v333
          %vm445 = vcmp.eq.s32.totalorder %v283, %v337
          %vm446 = vcmp.eq.s32.totalorder %v284, %v333
          %vm447 = vcmp.eq.s32.totalorder %v284, %v337
          %vm448 = vcmp.eq.s32.totalorder %v285, %v333
          %vm449 = vcmp.eq.s32.totalorder %v285, %v337
          %vm450 = vcmp.eq.s32.totalorder %v286, %v333
          %vm451 = vcmp.eq.s32.totalorder %v286, %v337
          %vm452 = vcmp.eq.s32.totalorder %v287, %v333
          %vm453 = vcmp.eq.s32.totalorder %v287, %v337
          %vm454 = vcmp.eq.s32.totalorder %v288, %v333
          %vm455 = vcmp.eq.s32.totalorder %v288, %v337
          %vm456 = vcmp.eq.s32.totalorder %v289, %v333
          %vm457 = vcmp.eq.s32.totalorder %v289, %v337
          %vm458 = vcmp.eq.s32.totalorder %v290, %v333
          %vm459 = vcmp.eq.s32.totalorder %v290, %v337
          %vm460 = vcmp.eq.s32.totalorder %v291, %v333
          %vm461 = vcmp.eq.s32.totalorder %v291, %v337
          %vm462 = vcmp.eq.s32.totalorder %v292, %v333
          %vm463 = vcmp.eq.s32.totalorder %v292, %v337
          %vm464 = vcmp.eq.s32.totalorder %v293, %v333
          %vm465 = vcmp.eq.s32.totalorder %v293, %v337
          %v467 = vlaneseq
          %v468 = vshrl.u32 %v467, 7
          %v469 = vsub.s32 0, %v468
          %v470 = vrot.slane %v315, %v469
          %v471 = vlaneseq
          %v472 = vshrl.u32 %v471, 7
          %v473 = vsub.s32 4, %v472
          %v474 = vrot.slane %v315, %v473
          %v477 = vlaneseq
          %v478 = vshrl.u32 %v477, 7
          %v479 = vsub.s32 0, %v478
          %v480 = vrot.slane %v470, %v479
          %v481 = vlaneseq
          %v482 = vshrl.u32 %v481, 7
          %v483 = vsub.s32 0, %v482
          %v484 = vrot.slane %v474, %v483
          %v485 = vsel %vm338, %v480, 0.0
          %v486 = vsel %vm339, %v484, 0.0
          %v487 = vsel %vm340, %v480, 0.0
          %v488 = vsel %vm341, %v484, 0.0
          %v489 = vsel %vm342, %v480, 0.0
          %v490 = vsel %vm343, %v484, 0.0
          %v491 = vsel %vm344, %v480, 0.0
          %v492 = vsel %vm345, %v484, 0.0
          %v493 = vsel %vm346, %v480, 0.0
          %v494 = vsel %vm347, %v484, 0.0
          %v495 = vsel %vm348, %v480, 0.0
          %v496 = vsel %vm349, %v484, 0.0
          %v497 = vsel %vm350, %v480, 0.0
          %v498 = vsel %vm351, %v484, 0.0
          %v499 = vsel %vm352, %v480, 0.0
          %v500 = vsel %vm353, %v484, 0.0
          %v501 = vsel %vm354, %v480, 0.0
          %v502 = vsel %vm355, %v484, 0.0
          %v503 = vsel %vm356, %v480, 0.0
          %v504 = vsel %vm357, %v484, 0.0
          %v505 = vsel %vm358, %v480, 0.0
          %v506 = vsel %vm359, %v484, 0.0
          %v507 = vsel %vm360, %v480, 0.0
          %v508 = vsel %vm361, %v484, 0.0
          %v509 = vsel %vm362, %v480, 0.0
          %v510 = vsel %vm363, %v484, 0.0
          %v511 = vsel %vm364, %v480, 0.0
          %v512 = vsel %vm365, %v484, 0.0
          %v513 = vsel %vm366, %v480, 0.0
          %v514 = vsel %vm367, %v484, 0.0
          %v515 = vsel %vm368, %v480, 0.0
          %v516 = vsel %vm369, %v484, 0.0
          %v517 = vsel %vm370, %v480, 0.0
          %v518 = vsel %vm371, %v484, 0.0
          %v519 = vsel %vm372, %v480, 0.0
          %v520 = vsel %vm373, %v484, 0.0
          %v521 = vsel %vm374, %v480, 0.0
          %v522 = vsel %vm375, %v484, 0.0
          %v523 = vsel %vm376, %v480, 0.0
          %v524 = vsel %vm377, %v484, 0.0
          %v525 = vsel %vm378, %v480, 0.0
          %v526 = vsel %vm379, %v484, 0.0
          %v527 = vsel %vm380, %v480, 0.0
          %v528 = vsel %vm381, %v484, 0.0
          %v529 = vsel %vm382, %v480, 0.0
          %v530 = vsel %vm383, %v484, 0.0
          %v531 = vsel %vm384, %v480, 0.0
          %v532 = vsel %vm385, %v484, 0.0
          %v533 = vsel %vm386, %v480, 0.0
          %v534 = vsel %vm387, %v484, 0.0
          %v535 = vsel %vm388, %v480, 0.0
          %v536 = vsel %vm389, %v484, 0.0
          %v537 = vsel %vm390, %v480, 0.0
          %v538 = vsel %vm391, %v484, 0.0
          %v539 = vsel %vm392, %v480, 0.0
          %v540 = vsel %vm393, %v484, 0.0
          %v541 = vsel %vm394, %v480, 0.0
          %v542 = vsel %vm395, %v484, 0.0
          %v543 = vsel %vm396, %v480, 0.0
          %v544 = vsel %vm397, %v484, 0.0
          %v545 = vsel %vm398, %v480, 0.0
          %v546 = vsel %vm399, %v484, 0.0
          %v547 = vsel %vm400, %v480, 0.0
          %v548 = vsel %vm401, %v484, 0.0
          %v549 = vsel %vm402, %v480, 0.0
          %v550 = vsel %vm403, %v484, 0.0
          %v551 = vsel %vm404, %v480, 0.0
          %v552 = vsel %vm405, %v484, 0.0
          %v553 = vsel %vm406, %v480, 0.0
          %v554 = vsel %vm407, %v484, 0.0
          %v555 = vsel %vm408, %v480, 0.0
          %v556 = vsel %vm409, %v484, 0.0
          %v557 = vsel %vm410, %v480, 0.0
          %v558 = vsel %vm411, %v484, 0.0
          %v559 = vsel %vm412, %v480, 0.0
          %v560 = vsel %vm413, %v484, 0.0
          %v561 = vsel %vm414, %v480, 0.0
          %v562 = vsel %vm415, %v484, 0.0
          %v563 = vsel %vm416, %v480, 0.0
          %v564 = vsel %vm417, %v484, 0.0
          %v565 = vsel %vm418, %v480, 0.0
          %v566 = vsel %vm419, %v484, 0.0
          %v567 = vsel %vm420, %v480, 0.0
          %v568 = vsel %vm421, %v484, 0.0
          %v569 = vsel %vm422, %v480, 0.0
          %v570 = vsel %vm423, %v484, 0.0
          %v571 = vsel %vm424, %v480, 0.0
          %v572 = vsel %vm425, %v484, 0.0
          %v573 = vsel %vm426, %v480, 0.0
          %v574 = vsel %vm427, %v484, 0.0
          %v575 = vsel %vm428, %v480, 0.0
          %v576 = vsel %vm429, %v484, 0.0
          %v577 = vsel %vm430, %v480, 0.0
          %v578 = vsel %vm431, %v484, 0.0
          %v579 = vsel %vm432, %v480, 0.0
          %v580 = vsel %vm433, %v484, 0.0
          %v581 = vsel %vm434, %v480, 0.0
          %v582 = vsel %vm435, %v484, 0.0
          %v583 = vsel %vm436, %v480, 0.0
          %v584 = vsel %vm437, %v484, 0.0
          %v585 = vsel %vm438, %v480, 0.0
          %v586 = vsel %vm439, %v484, 0.0
          %v587 = vsel %vm440, %v480, 0.0
          %v588 = vsel %vm441, %v484, 0.0
          %v589 = vsel %vm442, %v480, 0.0
          %v590 = vsel %vm443, %v484, 0.0
          %v591 = vsel %vm444, %v480, 0.0
          %v592 = vsel %vm445, %v484, 0.0
          %v593 = vsel %vm446, %v480, 0.0
          %v594 = vsel %vm447, %v484, 0.0
          %v595 = vsel %vm448, %v480, 0.0
          %v596 = vsel %vm449, %v484, 0.0
          %v597 = vsel %vm450, %v480, 0.0
          %v598 = vsel %vm451, %v484, 0.0
          %v599 = vsel %vm452, %v480, 0.0
          %v600 = vsel %vm453, %v484, 0.0
          %v601 = vsel %vm454, %v480, 0.0
          %v602 = vsel %vm455, %v484, 0.0
          %v603 = vsel %vm456, %v480, 0.0
          %v604 = vsel %vm457, %v484, 0.0
          %v605 = vsel %vm458, %v480, 0.0
          %v606 = vsel %vm459, %v484, 0.0
          %v607 = vsel %vm460, %v480, 0.0
          %v608 = vsel %vm461, %v484, 0.0
          %v609 = vsel %vm462, %v480, 0.0
          %v610 = vsel %vm463, %v484, 0.0
          %v611 = vsel %vm464, %v480, 0.0
          %v612 = vsel %vm465, %v484, 0.0
          %vm613 = vcmp.ge.s32.totalorder %v202, 0
          %vm614 = vcmp.lt.s32.totalorder %v202, 8
          %vm615 = vmand %vm613, %vm614
          %vm616 = vmand %vm615, %vm300
          %vm617 = vmand %vm616, %vm305
          %vm618 = vmand %vm617, %vm309
          %vm619 = vmand %vm618, %vm313
          %v620 = vsel %vm619, %v213, 0.0
          %v621 = vrot.slane %v202, 6
          %v622 = vadd.s32 %v319, %v621
          %v623 = vlaneseq
          %v624 = vshrl.u32 %v623, 7
          %v625 = vsub.s32 2, %v624
          %v626 = vrot.slane %v622, %v625
          %v627 = vlaneseq
          %v628 = vshrl.u32 %v627, 7
          %v629 = vsub.s32 6, %v628
          %v630 = vrot.slane %v622, %v629
          %v631 = vlaneseq
          %v632 = vshrl.u32 %v631, 7
          %v633 = vsub.s32 2, %v632
          %v634 = vrot.slane %v626, %v633
          %v635 = vlaneseq
          %v636 = vshrl.u32 %v635, 7
          %v637 = vsub.s32 2, %v636
          %v638 = vrot.slane %v630, %v637
          %vm639 = vcmp.eq.s32.totalorder %v230, %v634
          %vm640 = vcmp.eq.s32.totalorder %v230, %v638
          %vm641 = vcmp.eq.s32.totalorder %v231, %v634
          %vm642 = vcmp.eq.s32.totalorder %v231, %v638
          %vm643 = vcmp.eq.s32.totalorder %v232, %v634
          %vm644 = vcmp.eq.s32.totalorder %v232, %v638
          %vm645 = vcmp.eq.s32.totalorder %v233, %v634
          %vm646 = vcmp.eq.s32.totalorder %v233, %v638
          %vm647 = vcmp.eq.s32.totalorder %v234, %v634
          %vm648 = vcmp.eq.s32.totalorder %v234, %v638
          %vm649 = vcmp.eq.s32.totalorder %v235, %v634
          %vm650 = vcmp.eq.s32.totalorder %v235, %v638
          %vm651 = vcmp.eq.s32.totalorder %v236, %v634
          %vm652 = vcmp.eq.s32.totalorder %v236, %v638
          %vm653 = vcmp.eq.s32.totalorder %v237, %v634
          %vm654 = vcmp.eq.s32.totalorder %v237, %v638
          %vm655 = vcmp.eq.s32.totalorder %v238, %v634
          %vm656 = vcmp.eq.s32.totalorder %v238, %v638
          %vm657 = vcmp.eq.s32.totalorder %v239, %v634
          %vm658 = vcmp.eq.s32.totalorder %v239, %v638
          %vm659 = vcmp.eq.s32.totalorder %v240, %v634
          %vm660 = vcmp.eq.s32.totalorder %v240, %v638
          %vm661 = vcmp.eq.s32.totalorder %v241, %v634
          %vm662 = vcmp.eq.s32.totalorder %v241, %v638
          %vm663 = vcmp.eq.s32.totalorder %v242, %v634
          %vm664 = vcmp.eq.s32.totalorder %v242, %v638
          %vm665 = vcmp.eq.s32.totalorder %v243, %v634
          %vm666 = vcmp.eq.s32.totalorder %v243, %v638
          %vm667 = vcmp.eq.s32.totalorder %v244, %v634
          %vm668 = vcmp.eq.s32.totalorder %v244, %v638
          %vm669 = vcmp.eq.s32.totalorder %v245, %v634
          %vm670 = vcmp.eq.s32.totalorder %v245, %v638
          %vm671 = vcmp.eq.s32.totalorder %v246, %v634
          %vm672 = vcmp.eq.s32.totalorder %v246, %v638
          %vm673 = vcmp.eq.s32.totalorder %v247, %v634
          %vm674 = vcmp.eq.s32.totalorder %v247, %v638
          %vm675 = vcmp.eq.s32.totalorder %v248, %v634
          %vm676 = vcmp.eq.s32.totalorder %v248, %v638
          %vm677 = vcmp.eq.s32.totalorder %v249, %v634
          %vm678 = vcmp.eq.s32.totalorder %v249, %v638
          %vm679 = vcmp.eq.s32.totalorder %v250, %v634
          %vm680 = vcmp.eq.s32.totalorder %v250, %v638
          %vm681 = vcmp.eq.s32.totalorder %v251, %v634
          %vm682 = vcmp.eq.s32.totalorder %v251, %v638
          %vm683 = vcmp.eq.s32.totalorder %v252, %v634
          %vm684 = vcmp.eq.s32.totalorder %v252, %v638
          %vm685 = vcmp.eq.s32.totalorder %v253, %v634
          %vm686 = vcmp.eq.s32.totalorder %v253, %v638
          %vm687 = vcmp.eq.s32.totalorder %v254, %v634
          %vm688 = vcmp.eq.s32.totalorder %v254, %v638
          %vm689 = vcmp.eq.s32.totalorder %v255, %v634
          %vm690 = vcmp.eq.s32.totalorder %v255, %v638
          %vm691 = vcmp.eq.s32.totalorder %v256, %v634
          %vm692 = vcmp.eq.s32.totalorder %v256, %v638
          %vm693 = vcmp.eq.s32.totalorder %v257, %v634
          %vm694 = vcmp.eq.s32.totalorder %v257, %v638
          %vm695 = vcmp.eq.s32.totalorder %v258, %v634
          %vm696 = vcmp.eq.s32.totalorder %v258, %v638
          %vm697 = vcmp.eq.s32.totalorder %v259, %v634
          %vm698 = vcmp.eq.s32.totalorder %v259, %v638
          %vm699 = vcmp.eq.s32.totalorder %v260, %v634
          %vm700 = vcmp.eq.s32.totalorder %v260, %v638
          %vm701 = vcmp.eq.s32.totalorder %v261, %v634
          %vm702 = vcmp.eq.s32.totalorder %v261, %v638
          %vm703 = vcmp.eq.s32.totalorder %v262, %v634
          %vm704 = vcmp.eq.s32.totalorder %v262, %v638
          %vm705 = vcmp.eq.s32.totalorder %v263, %v634
          %vm706 = vcmp.eq.s32.totalorder %v263, %v638
          %vm707 = vcmp.eq.s32.totalorder %v264, %v634
          %vm708 = vcmp.eq.s32.totalorder %v264, %v638
          %vm709 = vcmp.eq.s32.totalorder %v265, %v634
          %vm710 = vcmp.eq.s32.totalorder %v265, %v638
          %vm711 = vcmp.eq.s32.totalorder %v266, %v634
          %vm712 = vcmp.eq.s32.totalorder %v266, %v638
          %vm713 = vcmp.eq.s32.totalorder %v267, %v634
          %vm714 = vcmp.eq.s32.totalorder %v267, %v638
          %vm715 = vcmp.eq.s32.totalorder %v268, %v634
          %vm716 = vcmp.eq.s32.totalorder %v268, %v638
          %vm717 = vcmp.eq.s32.totalorder %v269, %v634
          %vm718 = vcmp.eq.s32.totalorder %v269, %v638
          %vm719 = vcmp.eq.s32.totalorder %v270, %v634
          %vm720 = vcmp.eq.s32.totalorder %v270, %v638
          %vm721 = vcmp.eq.s32.totalorder %v271, %v634
          %vm722 = vcmp.eq.s32.totalorder %v271, %v638
          %vm723 = vcmp.eq.s32.totalorder %v272, %v634
          %vm724 = vcmp.eq.s32.totalorder %v272, %v638
          %vm725 = vcmp.eq.s32.totalorder %v273, %v634
          %vm726 = vcmp.eq.s32.totalorder %v273, %v638
          %vm727 = vcmp.eq.s32.totalorder %v274, %v634
          %vm728 = vcmp.eq.s32.totalorder %v274, %v638
          %vm729 = vcmp.eq.s32.totalorder %v275, %v634
          %vm730 = vcmp.eq.s32.totalorder %v275, %v638
          %vm731 = vcmp.eq.s32.totalorder %v276, %v634
          %vm732 = vcmp.eq.s32.totalorder %v276, %v638
          %vm733 = vcmp.eq.s32.totalorder %v277, %v634
          %vm734 = vcmp.eq.s32.totalorder %v277, %v638
          %vm735 = vcmp.eq.s32.totalorder %v278, %v634
          %vm736 = vcmp.eq.s32.totalorder %v278, %v638
          %vm737 = vcmp.eq.s32.totalorder %v279, %v634
          %vm738 = vcmp.eq.s32.totalorder %v279, %v638
          %vm739 = vcmp.eq.s32.totalorder %v280, %v634
          %vm740 = vcmp.eq.s32.totalorder %v280, %v638
          %vm741 = vcmp.eq.s32.totalorder %v281, %v634
          %vm742 = vcmp.eq.s32.totalorder %v281, %v638
          %vm743 = vcmp.eq.s32.totalorder %v282, %v634
          %vm744 = vcmp.eq.s32.totalorder %v282, %v638
          %vm745 = vcmp.eq.s32.totalorder %v283, %v634
          %vm746 = vcmp.eq.s32.totalorder %v283, %v638
          %vm747 = vcmp.eq.s32.totalorder %v284, %v634
          %vm748 = vcmp.eq.s32.totalorder %v284, %v638
          %vm749 = vcmp.eq.s32.totalorder %v285, %v634
          %vm750 = vcmp.eq.s32.totalorder %v285, %v638
          %vm751 = vcmp.eq.s32.totalorder %v286, %v634
          %vm752 = vcmp.eq.s32.totalorder %v286, %v638
          %vm753 = vcmp.eq.s32.totalorder %v287, %v634
          %vm754 = vcmp.eq.s32.totalorder %v287, %v638
          %vm755 = vcmp.eq.s32.totalorder %v288, %v634
          %vm756 = vcmp.eq.s32.totalorder %v288, %v638
          %vm757 = vcmp.eq.s32.totalorder %v289, %v634
          %vm758 = vcmp.eq.s32.totalorder %v289, %v638
          %vm759 = vcmp.eq.s32.totalorder %v290, %v634
          %vm760 = vcmp.eq.s32.totalorder %v290, %v638
          %vm761 = vcmp.eq.s32.totalorder %v291, %v634
          %vm762 = vcmp.eq.s32.totalorder %v291, %v638
          %vm763 = vcmp.eq.s32.totalorder %v292, %v634
          %vm764 = vcmp.eq.s32.totalorder %v292, %v638
          %vm765 = vcmp.eq.s32.totalorder %v293, %v634
          %vm766 = vcmp.eq.s32.totalorder %v293, %v638
          %v768 = vlaneseq
          %v769 = vshrl.u32 %v768, 7
          %v770 = vsub.s32 0, %v769
          %v771 = vrot.slane %v620, %v770
          %v772 = vlaneseq
          %v773 = vshrl.u32 %v772, 7
          %v774 = vsub.s32 4, %v773
          %v775 = vrot.slane %v620, %v774
          %v778 = vlaneseq
          %v779 = vshrl.u32 %v778, 7
          %v780 = vsub.s32 0, %v779
          %v781 = vrot.slane %v771, %v780
          %v782 = vlaneseq
          %v783 = vshrl.u32 %v782, 7
          %v784 = vsub.s32 0, %v783
          %v785 = vrot.slane %v775, %v784
          %v786 = vsel %vm639, %v781, 0.0
          %v787 = vsel %vm640, %v785, 0.0
          %v788 = vsel %vm641, %v781, 0.0
          %v789 = vsel %vm642, %v785, 0.0
          %v790 = vsel %vm643, %v781, 0.0
          %v791 = vsel %vm644, %v785, 0.0
          %v792 = vsel %vm645, %v781, 0.0
          %v793 = vsel %vm646, %v785, 0.0
          %v794 = vsel %vm647, %v781, 0.0
          %v795 = vsel %vm648, %v785, 0.0
          %v796 = vsel %vm649, %v781, 0.0
          %v797 = vsel %vm650, %v785, 0.0
          %v798 = vsel %vm651, %v781, 0.0
          %v799 = vsel %vm652, %v785, 0.0
          %v800 = vsel %vm653, %v781, 0.0
          %v801 = vsel %vm654, %v785, 0.0
          %v802 = vsel %vm655, %v781, 0.0
          %v803 = vsel %vm656, %v785, 0.0
          %v804 = vsel %vm657, %v781, 0.0
          %v805 = vsel %vm658, %v785, 0.0
          %v806 = vsel %vm659, %v781, 0.0
          %v807 = vsel %vm660, %v785, 0.0
          %v808 = vsel %vm661, %v781, 0.0
          %v809 = vsel %vm662, %v785, 0.0
          %v810 = vsel %vm663, %v781, 0.0
          %v811 = vsel %vm664, %v785, 0.0
          %v812 = vsel %vm665, %v781, 0.0
          %v813 = vsel %vm666, %v785, 0.0
          %v814 = vsel %vm667, %v781, 0.0
          %v815 = vsel %vm668, %v785, 0.0
          %v816 = vsel %vm669, %v781, 0.0
          %v817 = vsel %vm670, %v785, 0.0
          %v818 = vsel %vm671, %v781, 0.0
          %v819 = vsel %vm672, %v785, 0.0
          %v820 = vsel %vm673, %v781, 0.0
          %v821 = vsel %vm674, %v785, 0.0
          %v822 = vsel %vm675, %v781, 0.0
          %v823 = vsel %vm676, %v785, 0.0
          %v824 = vsel %vm677, %v781, 0.0
          %v825 = vsel %vm678, %v785, 0.0
          %v826 = vsel %vm679, %v781, 0.0
          %v827 = vsel %vm680, %v785, 0.0
          %v828 = vsel %vm681, %v781, 0.0
          %v829 = vsel %vm682, %v785, 0.0
          %v830 = vsel %vm683, %v781, 0.0
          %v831 = vsel %vm684, %v785, 0.0
          %v832 = vsel %vm685, %v781, 0.0
          %v833 = vsel %vm686, %v785, 0.0
          %v834 = vsel %vm687, %v781, 0.0
          %v835 = vsel %vm688, %v785, 0.0
          %v836 = vsel %vm689, %v781, 0.0
          %v837 = vsel %vm690, %v785, 0.0
          %v838 = vsel %vm691, %v781, 0.0
          %v839 = vsel %vm692, %v785, 0.0
          %v840 = vsel %vm693, %v781, 0.0
          %v841 = vsel %vm694, %v785, 0.0
          %v842 = vsel %vm695, %v781, 0.0
          %v843 = vsel %vm696, %v785, 0.0
          %v844 = vsel %vm697, %v781, 0.0
          %v845 = vsel %vm698, %v785, 0.0
          %v846 = vsel %vm699, %v781, 0.0
          %v847 = vsel %vm700, %v785, 0.0
          %v848 = vsel %vm701, %v781, 0.0
          %v849 = vsel %vm702, %v785, 0.0
          %v850 = vsel %vm703, %v781, 0.0
          %v851 = vsel %vm704, %v785, 0.0
          %v852 = vsel %vm705, %v781, 0.0
          %v853 = vsel %vm706, %v785, 0.0
          %v854 = vsel %vm707, %v781, 0.0
          %v855 = vsel %vm708, %v785, 0.0
          %v856 = vsel %vm709, %v781, 0.0
          %v857 = vsel %vm710, %v785, 0.0
          %v858 = vsel %vm711, %v781, 0.0
          %v859 = vsel %vm712, %v785, 0.0
          %v860 = vsel %vm713, %v781, 0.0
          %v861 = vsel %vm714, %v785, 0.0
          %v862 = vsel %vm715, %v781, 0.0
          %v863 = vsel %vm716, %v785, 0.0
          %v864 = vsel %vm717, %v781, 0.0
          %v865 = vsel %vm718, %v785, 0.0
          %v866 = vsel %vm719, %v781, 0.0
          %v867 = vsel %vm720, %v785, 0.0
          %v868 = vsel %vm721, %v781, 0.0
          %v869 = vsel %vm722, %v785, 0.0
          %v870 = vsel %vm723, %v781, 0.0
          %v871 = vsel %vm724, %v785, 0.0
          %v872 = vsel %vm725, %v781, 0.0
          %v873 = vsel %vm726, %v785, 0.0
          %v874 = vsel %vm727, %v781, 0.0
          %v875 = vsel %vm728, %v785, 0.0
          %v876 = vsel %vm729, %v781, 0.0
          %v877 = vsel %vm730, %v785, 0.0
          %v878 = vsel %vm731, %v781, 0.0
          %v879 = vsel %vm732, %v785, 0.0
          %v880 = vsel %vm733, %v781, 0.0
          %v881 = vsel %vm734, %v785, 0.0
          %v882 = vsel %vm735, %v781, 0.0
          %v883 = vsel %vm736, %v785, 0.0
          %v884 = vsel %vm737, %v781, 0.0
          %v885 = vsel %vm738, %v785, 0.0
          %v886 = vsel %vm739, %v781, 0.0
          %v887 = vsel %vm740, %v785, 0.0
          %v888 = vsel %vm741, %v781, 0.0
          %v889 = vsel %vm742, %v785, 0.0
          %v890 = vsel %vm743, %v781, 0.0
          %v891 = vsel %vm744, %v785, 0.0
          %v892 = vsel %vm745, %v781, 0.0
          %v893 = vsel %vm746, %v785, 0.0
          %v894 = vsel %vm747, %v781, 0.0
          %v895 = vsel %vm748, %v785, 0.0
          %v896 = vsel %vm749, %v781, 0.0
          %v897 = vsel %vm750, %v785, 0.0
          %v898 = vsel %vm751, %v781, 0.0
          %v899 = vsel %vm752, %v785, 0.0
          %v900 = vsel %vm753, %v781, 0.0
          %v901 = vsel %vm754, %v785, 0.0
          %v902 = vsel %vm755, %v781, 0.0
          %v903 = vsel %vm756, %v785, 0.0
          %v904 = vsel %vm757, %v781, 0.0
          %v905 = vsel %vm758, %v785, 0.0
          %v906 = vsel %vm759, %v781, 0.0
          %v907 = vsel %vm760, %v785, 0.0
          %v908 = vsel %vm761, %v781, 0.0
          %v909 = vsel %vm762, %v785, 0.0
          %v910 = vsel %vm763, %v781, 0.0
          %v911 = vsel %vm764, %v785, 0.0
          %v912 = vsel %vm765, %v781, 0.0
          %v913 = vsel %vm766, %v785, 0.0
          %v916 = vcombine.high %v183, %v183
          %v917 = vcombine.high %v184, %v184
          %920 = vmatprep.subr.mxu0 %v787
          %921 = vmatpush1.msra.mxu0 %v786
          %922 = vmatprep.subr.mxu0 %v789
          %923 = vmatpush1.msra.mxu0 %v788
          %924 = vmatprep.subr.mxu0 %v791
          %925 = vmatpush1.msra.mxu0 %v790
          %926 = vmatprep.subr.mxu0 %v793
          %927 = vmatpush1.msra.mxu0 %v792
          %928 = vmatprep.subr.mxu0 %v795
          %929 = vmatpush1.msra.mxu0 %v794
          %930 = vmatprep.subr.mxu0 %v797
          %931 = vmatpush1.msra.mxu0 %v796
          %932 = vmatprep.subr.mxu0 %v799
          %933 = vmatpush1.msra.mxu0 %v798
          %934 = vmatprep.subr.mxu0 %v801
          %935 = vmatpush1.msra.mxu0 %v800
          %936 = vmatprep.subr.mxu0 %v803
          %937 = vmatpush1.msra.mxu0 %v802
          %938 = vmatprep.subr.mxu0 %v805
          %939 = vmatpush1.msra.mxu0 %v804
          %940 = vmatprep.subr.mxu0 %v807
          %941 = vmatpush1.msra.mxu0 %v806
          %942 = vmatprep.subr.mxu0 %v809
          %943 = vmatpush1.msra.mxu0 %v808
          %944 = vmatprep.subr.mxu0 %v811
          %945 = vmatpush1.msra.mxu0 %v810
          %946 = vmatprep.subr.mxu0 %v813
          %947 = vmatpush1.msra.mxu0 %v812
          %948 = vmatprep.subr.mxu0 %v815
          %949 = vmatpush1.msra.mxu0 %v814
          %950 = vmatprep.subr.mxu0 %v817
          %951 = vmatpush1.msra.mxu0 %v816
          %952 = vmatprep.subr.mxu0 %v819
          %953 = vmatpush1.msra.mxu0 %v818
          %954 = vmatprep.subr.mxu0 %v821
          %955 = vmatpush1.msra.mxu0 %v820
          %956 = vmatprep.subr.mxu0 %v823
          %957 = vmatpush1.msra.mxu0 %v822
          %958 = vmatprep.subr.mxu0 %v825
          %959 = vmatpush1.msra.mxu0 %v824
          %960 = vmatprep.subr.mxu0 %v827
          %961 = vmatpush1.msra.mxu0 %v826
          %962 = vmatprep.subr.mxu0 %v829
          %963 = vmatpush1.msra.mxu0 %v828
          %964 = vmatprep.subr.mxu0 %v831
          %965 = vmatpush1.msra.mxu0 %v830
          %966 = vmatprep.subr.mxu0 %v833
          %967 = vmatpush1.msra.mxu0 %v832
          %968 = vmatprep.subr.mxu0 %v835
          %969 = vmatpush1.msra.mxu0 %v834
          %970 = vmatprep.subr.mxu0 %v837
          %971 = vmatpush1.msra.mxu0 %v836
          %972 = vmatprep.subr.mxu0 %v839
          %973 = vmatpush1.msra.mxu0 %v838
          %974 = vmatprep.subr.mxu0 %v841
          %975 = vmatpush1.msra.mxu0 %v840
          %976 = vmatprep.subr.mxu0 %v843
          %977 = vmatpush1.msra.mxu0 %v842
          %978 = vmatprep.subr.mxu0 %v845
          %979 = vmatpush1.msra.mxu0 %v844
          %980 = vmatprep.subr.mxu0 %v847
          %981 = vmatpush1.msra.mxu0 %v846
          %982 = vmatprep.subr.mxu0 %v849
          %983 = vmatpush1.msra.mxu0 %v848
          %984 = vmatprep.mubr.f32.mxu0 %v916
          %985 = vmatmul.mubr.f32.gmra.mrb[0].mxu0 %v183
          %v986 = vpop.f32.mrb[0].mxu0
          %v987 = vadd.f32 0.0, %v986
          %v988 = vpop.f32.mrb[0].mxu0
          %v989 = vadd.f32 0.0, %v988
          %990 = vdwg.mxu0
          %991 = vmatprep.subr.mxu0 %v851
          %992 = vmatpush1.msra.mxu0 %v850
          %993 = vmatprep.subr.mxu0 %v853
          %994 = vmatpush1.msra.mxu0 %v852
          %995 = vmatprep.subr.mxu0 %v855
          %996 = vmatpush1.msra.mxu0 %v854
          %997 = vmatprep.subr.mxu0 %v857
          %998 = vmatpush1.msra.mxu0 %v856
          %999 = vmatprep.subr.mxu0 %v859
          %1000 = vmatpush1.msra.mxu0 %v858
          %1001 = vmatprep.subr.mxu0 %v861
          %1002 = vmatpush1.msra.mxu0 %v860
          %1003 = vmatprep.subr.mxu0 %v863
          %1004 = vmatpush1.msra.mxu0 %v862
          %1005 = vmatprep.subr.mxu0 %v865
          %1006 = vmatpush1.msra.mxu0 %v864
          %1007 = vmatprep.subr.mxu0 %v867
          %1008 = vmatpush1.msra.mxu0 %v866
          %1009 = vmatprep.subr.mxu0 %v869
          %1010 = vmatpush1.msra.mxu0 %v868
          %1011 = vmatprep.subr.mxu0 %v871
          %1012 = vmatpush1.msra.mxu0 %v870
          %1013 = vmatprep.subr.mxu0 %v873
          %1014 = vmatpush1.msra.mxu0 %v872
          %1015 = vmatprep.subr.mxu0 %v875
          %1016 = vmatpush1.msra.mxu0 %v874
          %1017 = vmatprep.subr.mxu0 %v877
          %1018 = vmatpush1.msra.mxu0 %v876
          %1019 = vmatprep.subr.mxu0 %v879
          %1020 = vmatpush1.msra.mxu0 %v878
          %1021 = vmatprep.subr.mxu0 %v881
          %1022 = vmatpush1.msra.mxu0 %v880
          %1023 = vmatprep.subr.mxu0 %v883
          %1024 = vmatpush1.msra.mxu0 %v882
          %1025 = vmatprep.subr.mxu0 %v885
          %1026 = vmatpush1.msra.mxu0 %v884
          %1027 = vmatprep.subr.mxu0 %v887
          %1028 = vmatpush1.msra.mxu0 %v886
          %1029 = vmatprep.subr.mxu0 %v889
          %1030 = vmatpush1.msra.mxu0 %v888
          %1031 = vmatprep.subr.mxu0 %v891
          %1032 = vmatpush1.msra.mxu0 %v890
          %1033 = vmatprep.subr.mxu0 %v893
          %1034 = vmatpush1.msra.mxu0 %v892
          %1035 = vmatprep.subr.mxu0 %v895
          %1036 = vmatpush1.msra.mxu0 %v894
          %1037 = vmatprep.subr.mxu0 %v897
          %1038 = vmatpush1.msra.mxu0 %v896
          %1039 = vmatprep.subr.mxu0 %v899
          %1040 = vmatpush1.msra.mxu0 %v898
          %1041 = vmatprep.subr.mxu0 %v901
          %1042 = vmatpush1.msra.mxu0 %v900
          %1043 = vmatprep.subr.mxu0 %v903
          %1044 = vmatpush1.msra.mxu0 %v902
          %1045 = vmatprep.subr.mxu0 %v905
          %1046 = vmatpush1.msra.mxu0 %v904
          %1047 = vmatprep.subr.mxu0 %v907
          %1048 = vmatpush1.msra.mxu0 %v906
          %1049 = vmatprep.subr.mxu0 %v909
          %1050 = vmatpush1.msra.mxu0 %v908
          %1051 = vmatprep.subr.mxu0 %v911
          %1052 = vmatpush1.msra.mxu0 %v910
          %1053 = vmatprep.subr.mxu0 %v913
          %1054 = vmatpush1.msra.mxu0 %v912
          %1055 = vmatprep.mubr.f32.mxu0 %v917
          %1056 = vmatmul.mubr.f32.gmra.mrb[0].mxu0 %v184
          %v1057 = vpop.f32.mrb[0].mxu0
          %v1058 = vadd.f32 %v987, %v1057
          %v1059 = vpop.f32.mrb[0].mxu0
          %v1060 = vadd.f32 %v989, %v1059
          %1061 = vdwg.mxu0
          %1062 = vmatprep.subr.mxu0 %v486
          %1063 = vmatpush1.msra.mxu0 %v485
          %1064 = vmatprep.subr.mxu0 %v488
          %1065 = vmatpush1.msra.mxu0 %v487
          %1066 = vmatprep.subr.mxu0 %v490
          %1067 = vmatpush1.msra.mxu0 %v489
          %1068 = vmatprep.subr.mxu0 %v492
          %1069 = vmatpush1.msra.mxu0 %v491
          %1070 = vmatprep.subr.mxu0 %v494
          %1071 = vmatpush1.msra.mxu0 %v493
          %1072 = vmatprep.subr.mxu0 %v496
          %1073 = vmatpush1.msra.mxu0 %v495
          %1074 = vmatprep.subr.mxu0 %v498
          %1075 = vmatpush1.msra.mxu0 %v497
          %1076 = vmatprep.subr.mxu0 %v500
          %1077 = vmatpush1.msra.mxu0 %v499
          %1078 = vmatprep.subr.mxu0 %v502
          %1079 = vmatpush1.msra.mxu0 %v501
          %1080 = vmatprep.subr.mxu0 %v504
          %1081 = vmatpush1.msra.mxu0 %v503
          %1082 = vmatprep.subr.mxu0 %v506
          %1083 = vmatpush1.msra.mxu0 %v505
          %1084 = vmatprep.subr.mxu0 %v508
          %1085 = vmatpush1.msra.mxu0 %v507
          %1086 = vmatprep.subr.mxu0 %v510
          %1087 = vmatpush1.msra.mxu0 %v509
          %1088 = vmatprep.subr.mxu0 %v512
          %1089 = vmatpush1.msra.mxu0 %v511
          %1090 = vmatprep.subr.mxu0 %v514
          %1091 = vmatpush1.msra.mxu0 %v513
          %1092 = vmatprep.subr.mxu0 %v516
          %1093 = vmatpush1.msra.mxu0 %v515
          %1094 = vmatprep.subr.mxu0 %v518
          %1095 = vmatpush1.msra.mxu0 %v517
          %1096 = vmatprep.subr.mxu0 %v520
          %1097 = vmatpush1.msra.mxu0 %v519
          %1098 = vmatprep.subr.mxu0 %v522
          %1099 = vmatpush1.msra.mxu0 %v521
          %1100 = vmatprep.subr.mxu0 %v524
          %1101 = vmatpush1.msra.mxu0 %v523
          %1102 = vmatprep.subr.mxu0 %v526
          %1103 = vmatpush1.msra.mxu0 %v525
          %1104 = vmatprep.subr.mxu0 %v528
          %1105 = vmatpush1.msra.mxu0 %v527
          %1106 = vmatprep.subr.mxu0 %v530
          %1107 = vmatpush1.msra.mxu0 %v529
          %1108 = vmatprep.subr.mxu0 %v532
          %1109 = vmatpush1.msra.mxu0 %v531
          %1110 = vmatprep.subr.mxu0 %v534
          %1111 = vmatpush1.msra.mxu0 %v533
          %1112 = vmatprep.subr.mxu0 %v536
          %1113 = vmatpush1.msra.mxu0 %v535
          %1114 = vmatprep.subr.mxu0 %v538
          %1115 = vmatpush1.msra.mxu0 %v537
          %1116 = vmatprep.subr.mxu0 %v540
          %1117 = vmatpush1.msra.mxu0 %v539
          %1118 = vmatprep.subr.mxu0 %v542
          %1119 = vmatpush1.msra.mxu0 %v541
          %1120 = vmatprep.subr.mxu0 %v544
          %1121 = vmatpush1.msra.mxu0 %v543
          %1122 = vmatprep.subr.mxu0 %v546
          %1123 = vmatpush1.msra.mxu0 %v545
          %1124 = vmatprep.subr.mxu0 %v548
          %1125 = vmatpush1.msra.mxu0 %v547
          %1126 = vmatprep.mubr.f32.mxu0 %v916
          %1127 = vmatmul.mubr.f32.gmra.mrb[0].mxu0 %v183
          %v1128 = vpop.f32.mrb[0].mxu0
          %v1129 = vadd.f32 %v1058, %v1128
          %v1130 = vpop.f32.mrb[0].mxu0
          %v1131 = vadd.f32 %v1060, %v1130
          %1132 = vdwg.mxu0
          %1133 = vmatprep.subr.mxu0 %v550
          %1134 = vmatpush1.msra.mxu0 %v549
          %1135 = vmatprep.subr.mxu0 %v552
          %1136 = vmatpush1.msra.mxu0 %v551
          %1137 = vmatprep.subr.mxu0 %v554
          %1138 = vmatpush1.msra.mxu0 %v553
          %1139 = vmatprep.subr.mxu0 %v556
          %1140 = vmatpush1.msra.mxu0 %v555
          %1141 = vmatprep.subr.mxu0 %v558
          %1142 = vmatpush1.msra.mxu0 %v557
          %1143 = vmatprep.subr.mxu0 %v560
          %1144 = vmatpush1.msra.mxu0 %v559
          %1145 = vmatprep.subr.mxu0 %v562
          %1146 = vmatpush1.msra.mxu0 %v561
          %1147 = vmatprep.subr.mxu0 %v564
          %1148 = vmatpush1.msra.mxu0 %v563
          %1149 = vmatprep.subr.mxu0 %v566
          %1150 = vmatpush1.msra.mxu0 %v565
          %1151 = vmatprep.subr.mxu0 %v568
          %1152 = vmatpush1.msra.mxu0 %v567
          %1153 = vmatprep.subr.mxu0 %v570
          %1154 = vmatpush1.msra.mxu0 %v569
          %1155 = vmatprep.subr.mxu0 %v572
          %1156 = vmatpush1.msra.mxu0 %v571
          %1157 = vmatprep.subr.mxu0 %v574
          %1158 = vmatpush1.msra.mxu0 %v573
          %1159 = vmatprep.subr.mxu0 %v576
          %1160 = vmatpush1.msra.mxu0 %v575
          %1161 = vmatprep.subr.mxu0 %v578
          %1162 = vmatpush1.msra.mxu0 %v577
          %1163 = vmatprep.subr.mxu0 %v580
          %1164 = vmatpush1.msra.mxu0 %v579
          %1165 = vmatprep.subr.mxu0 %v582
          %1166 = vmatpush1.msra.mxu0 %v581
          %1167 = vmatprep.subr.mxu0 %v584
          %1168 = vmatpush1.msra.mxu0 %v583
          %1169 = vmatprep.subr.mxu0 %v586
          %1170 = vmatpush1.msra.mxu0 %v585
          %1171 = vmatprep.subr.mxu0 %v588
          %1172 = vmatpush1.msra.mxu0 %v587
          %1173 = vmatprep.subr.mxu0 %v590
          %1174 = vmatpush1.msra.mxu0 %v589
          %1175 = vmatprep.subr.mxu0 %v592
          %1176 = vmatpush1.msra.mxu0 %v591
          %1177 = vmatprep.subr.mxu0 %v594
          %1178 = vmatpush1.msra.mxu0 %v593
          %1179 = vmatprep.subr.mxu0 %v596
          %1180 = vmatpush1.msra.mxu0 %v595
          %1181 = vmatprep.subr.mxu0 %v598
          %1182 = vmatpush1.msra.mxu0 %v597
          %1183 = vmatprep.subr.mxu0 %v600
          %1184 = vmatpush1.msra.mxu0 %v599
          %1185 = vmatprep.subr.mxu0 %v602
          %1186 = vmatpush1.msra.mxu0 %v601
          %1187 = vmatprep.subr.mxu0 %v604
          %1188 = vmatpush1.msra.mxu0 %v603
          %1189 = vmatprep.subr.mxu0 %v606
          %1190 = vmatpush1.msra.mxu0 %v605
          %1191 = vmatprep.subr.mxu0 %v608
          %1192 = vmatpush1.msra.mxu0 %v607
          %1193 = vmatprep.subr.mxu0 %v610
          %1194 = vmatpush1.msra.mxu0 %v609
          %1195 = vmatprep.subr.mxu0 %v612
          %1196 = vmatpush1.msra.mxu0 %v611
          %1197 = vmatprep.mubr.f32.mxu0 %v917
          %1198 = vmatmul.mubr.f32.gmra.mrb[0].mxu0 %v184
          %v1199 = vpop.f32.mrb[0].mxu0
          %v1200 = vadd.f32 %v1129, %v1199
          %v1201 = vpop.f32.mrb[0].mxu0
          %v1202 = vadd.f32 %v1131, %v1201
          %1203 = vdwg.mxu0
          %v1204 = vsel %vm613, 1, 0
          %v1205 = vrot.slane %v1204, 5
          %v1206 = vrot.slane %v1205, 4
          %vm1207 = vcmp.ne.s32.totalorder %v1206, 0
          %vm1208 = vmand %vm296, %vm1207
          %v1209 = vsel %vm614, 1, 0
          %v1210 = vrot.slane %v1209, 5
          %v1211 = vrot.slane %v1210, 4
          %vm1212 = vcmp.ne.s32.totalorder %v1211, 0
          %vm1213 = vmand %vm1208, %vm1212
          %vm1214 = vmand %vm1213, %vm309
          %vm1215 = vmand %vm1214, %vm313
          %v1216 = vsel %vm1215, %v219, 0.0
          %v1217 = vmul.u32 %v202, 8
          %v1218 = vrot.slane %v1217, 7
          %v1219 = vadd.s32 %v316, %v1218
          %v1220 = vadd.s32 %v1219, %v320
          %v1221 = vlaneseq
          %v1222 = vshrl.u32 %v1221, 7
          %v1223 = vsub.s32 2, %v1222
          %v1224 = vrot.slane %v1220, %v1223
          %v1225 = vlaneseq
          %v1226 = vshrl.u32 %v1225, 7
          %v1227 = vsub.s32 6, %v1226
          %v1228 = vrot.slane %v1220, %v1227
          %v1229 = vlaneseq
          %v1230 = vshrl.u32 %v1229, 7
          %v1231 = vsub.s32 2, %v1230
          %v1232 = vrot.slane %v1224, %v1231
          %v1233 = vlaneseq
          %v1234 = vshrl.u32 %v1233, 7
          %v1235 = vsub.s32 2, %v1234
          %v1236 = vrot.slane %v1228, %v1235
          %vm1237 = vcmp.eq.s32.totalorder %v230, %v1232
          %vm1238 = vcmp.eq.s32.totalorder %v230, %v1236
          %vm1239 = vcmp.eq.s32.totalorder %v231, %v1232
          %vm1240 = vcmp.eq.s32.totalorder %v231, %v1236
          %vm1241 = vcmp.eq.s32.totalorder %v232, %v1232
          %vm1242 = vcmp.eq.s32.totalorder %v232, %v1236
          %vm1243 = vcmp.eq.s32.totalorder %v233, %v1232
          %vm1244 = vcmp.eq.s32.totalorder %v233, %v1236
          %vm1245 = vcmp.eq.s32.totalorder %v234, %v1232
          %vm1246 = vcmp.eq.s32.totalorder %v234, %v1236
          %vm1247 = vcmp.eq.s32.totalorder %v235, %v1232
          %vm1248 = vcmp.eq.s32.totalorder %v235, %v1236
          %vm1249 = vcmp.eq.s32.totalorder %v236, %v1232
          %vm1250 = vcmp.eq.s32.totalorder %v236, %v1236
          %vm1251 = vcmp.eq.s32.totalorder %v237, %v1232
          %vm1252 = vcmp.eq.s32.totalorder %v237, %v1236
          %vm1253 = vcmp.eq.s32.totalorder %v238, %v1232
          %vm1254 = vcmp.eq.s32.totalorder %v238, %v1236
          %vm1255 = vcmp.eq.s32.totalorder %v239, %v1232
          %vm1256 = vcmp.eq.s32.totalorder %v239, %v1236
          %vm1257 = vcmp.eq.s32.totalorder %v240, %v1232
          %vm1258 = vcmp.eq.s32.totalorder %v240, %v1236
          %vm1259 = vcmp.eq.s32.totalorder %v241, %v1232
          %vm1260 = vcmp.eq.s32.totalorder %v241, %v1236
          %vm1261 = vcmp.eq.s32.totalorder %v242, %v1232
          %vm1262 = vcmp.eq.s32.totalorder %v242, %v1236
          %vm1263 = vcmp.eq.s32.totalorder %v243, %v1232
          %vm1264 = vcmp.eq.s32.totalorder %v243, %v1236
          %vm1265 = vcmp.eq.s32.totalorder %v244, %v1232
          %vm1266 = vcmp.eq.s32.totalorder %v244, %v1236
          %vm1267 = vcmp.eq.s32.totalorder %v245, %v1232
          %vm1268 = vcmp.eq.s32.totalorder %v245, %v1236
          %vm1269 = vcmp.eq.s32.totalorder %v246, %v1232
          %vm1270 = vcmp.eq.s32.totalorder %v246, %v1236
          %vm1271 = vcmp.eq.s32.totalorder %v247, %v1232
          %vm1272 = vcmp.eq.s32.totalorder %v247, %v1236
          %vm1273 = vcmp.eq.s32.totalorder %v248, %v1232
          %vm1274 = vcmp.eq.s32.totalorder %v248, %v1236
          %vm1275 = vcmp.eq.s32.totalorder %v249, %v1232
          %vm1276 = vcmp.eq.s32.totalorder %v249, %v1236
          %vm1277 = vcmp.eq.s32.totalorder %v250, %v1232
          %vm1278 = vcmp.eq.s32.totalorder %v250, %v1236
          %vm1279 = vcmp.eq.s32.totalorder %v251, %v1232
          %vm1280 = vcmp.eq.s32.totalorder %v251, %v1236
          %vm1281 = vcmp.eq.s32.totalorder %v252, %v1232
          %vm1282 = vcmp.eq.s32.totalorder %v252, %v1236
          %vm1283 = vcmp.eq.s32.totalorder %v253, %v1232
          %vm1284 = vcmp.eq.s32.totalorder %v253, %v1236
          %vm1285 = vcmp.eq.s32.totalorder %v254, %v1232
          %vm1286 = vcmp.eq.s32.totalorder %v254, %v1236
          %vm1287 = vcmp.eq.s32.totalorder %v255, %v1232
          %vm1288 = vcmp.eq.s32.totalorder %v255, %v1236
          %vm1289 = vcmp.eq.s32.totalorder %v256, %v1232
          %vm1290 = vcmp.eq.s32.totalorder %v256, %v1236
          %vm1291 = vcmp.eq.s32.totalorder %v257, %v1232
          %vm1292 = vcmp.eq.s32.totalorder %v257, %v1236
          %vm1293 = vcmp.eq.s32.totalorder %v258, %v1232
          %vm1294 = vcmp.eq.s32.totalorder %v258, %v1236
          %vm1295 = vcmp.eq.s32.totalorder %v259, %v1232
          %vm1296 = vcmp.eq.s32.totalorder %v259, %v1236
          %vm1297 = vcmp.eq.s32.totalorder %v260, %v1232
          %vm1298 = vcmp.eq.s32.totalorder %v260, %v1236
          %vm1299 = vcmp.eq.s32.totalorder %v261, %v1232
          %vm1300 = vcmp.eq.s32.totalorder %v261, %v1236
          %vm1301 = vcmp.eq.s32.totalorder %v262, %v1232
          %vm1302 = vcmp.eq.s32.totalorder %v262, %v1236
          %vm1303 = vcmp.eq.s32.totalorder %v263, %v1232
          %vm1304 = vcmp.eq.s32.totalorder %v263, %v1236
          %vm1305 = vcmp.eq.s32.totalorder %v264, %v1232
          %vm1306 = vcmp.eq.s32.totalorder %v264, %v1236
          %vm1307 = vcmp.eq.s32.totalorder %v265, %v1232
          %vm1308 = vcmp.eq.s32.totalorder %v265, %v1236
          %vm1309 = vcmp.eq.s32.totalorder %v266, %v1232
          %vm1310 = vcmp.eq.s32.totalorder %v266, %v1236
          %vm1311 = vcmp.eq.s32.totalorder %v267, %v1232
          %vm1312 = vcmp.eq.s32.totalorder %v267, %v1236
          %vm1313 = vcmp.eq.s32.totalorder %v268, %v1232
          %vm1314 = vcmp.eq.s32.totalorder %v268, %v1236
          %vm1315 = vcmp.eq.s32.totalorder %v269, %v1232
          %vm1316 = vcmp.eq.s32.totalorder %v269, %v1236
          %vm1317 = vcmp.eq.s32.totalorder %v270, %v1232
          %vm1318 = vcmp.eq.s32.totalorder %v270, %v1236
          %vm1319 = vcmp.eq.s32.totalorder %v271, %v1232
          %vm1320 = vcmp.eq.s32.totalorder %v271, %v1236
          %vm1321 = vcmp.eq.s32.totalorder %v272, %v1232
          %vm1322 = vcmp.eq.s32.totalorder %v272, %v1236
          %vm1323 = vcmp.eq.s32.totalorder %v273, %v1232
          %vm1324 = vcmp.eq.s32.totalorder %v273, %v1236
          %vm1325 = vcmp.eq.s32.totalorder %v274, %v1232
          %vm1326 = vcmp.eq.s32.totalorder %v274, %v1236
          %vm1327 = vcmp.eq.s32.totalorder %v275, %v1232
          %vm1328 = vcmp.eq.s32.totalorder %v275, %v1236
          %vm1329 = vcmp.eq.s32.totalorder %v276, %v1232
          %vm1330 = vcmp.eq.s32.totalorder %v276, %v1236
          %vm1331 = vcmp.eq.s32.totalorder %v277, %v1232
          %vm1332 = vcmp.eq.s32.totalorder %v277, %v1236
          %vm1333 = vcmp.eq.s32.totalorder %v278, %v1232
          %vm1334 = vcmp.eq.s32.totalorder %v278, %v1236
          %vm1335 = vcmp.eq.s32.totalorder %v279, %v1232
          %vm1336 = vcmp.eq.s32.totalorder %v279, %v1236
          %vm1337 = vcmp.eq.s32.totalorder %v280, %v1232
          %vm1338 = vcmp.eq.s32.totalorder %v280, %v1236
          %vm1339 = vcmp.eq.s32.totalorder %v281, %v1232
          %vm1340 = vcmp.eq.s32.totalorder %v281, %v1236
          %vm1341 = vcmp.eq.s32.totalorder %v282, %v1232
          %vm1342 = vcmp.eq.s32.totalorder %v282, %v1236
          %vm1343 = vcmp.eq.s32.totalorder %v283, %v1232
          %vm1344 = vcmp.eq.s32.totalorder %v283, %v1236
          %vm1345 = vcmp.eq.s32.totalorder %v284, %v1232
          %vm1346 = vcmp.eq.s32.totalorder %v284, %v1236
          %vm1347 = vcmp.eq.s32.totalorder %v285, %v1232
          %vm1348 = vcmp.eq.s32.totalorder %v285, %v1236
          %vm1349 = vcmp.eq.s32.totalorder %v286, %v1232
          %vm1350 = vcmp.eq.s32.totalorder %v286, %v1236
          %vm1351 = vcmp.eq.s32.totalorder %v287, %v1232
          %vm1352 = vcmp.eq.s32.totalorder %v287, %v1236
          %vm1353 = vcmp.eq.s32.totalorder %v288, %v1232
          %vm1354 = vcmp.eq.s32.totalorder %v288, %v1236
          %vm1355 = vcmp.eq.s32.totalorder %v289, %v1232
          %vm1356 = vcmp.eq.s32.totalorder %v289, %v1236
          %vm1357 = vcmp.eq.s32.totalorder %v290, %v1232
          %vm1358 = vcmp.eq.s32.totalorder %v290, %v1236
          %vm1359 = vcmp.eq.s32.totalorder %v291, %v1232
          %vm1360 = vcmp.eq.s32.totalorder %v291, %v1236
          %vm1361 = vcmp.eq.s32.totalorder %v292, %v1232
          %vm1362 = vcmp.eq.s32.totalorder %v292, %v1236
          %vm1363 = vcmp.eq.s32.totalorder %v293, %v1232
          %vm1364 = vcmp.eq.s32.totalorder %v293, %v1236
          %v1366 = vlaneseq
          %v1367 = vshrl.u32 %v1366, 7
          %v1368 = vsub.s32 0, %v1367
          %v1369 = vrot.slane %v1216, %v1368
          %v1370 = vlaneseq
          %v1371 = vshrl.u32 %v1370, 7
          %v1372 = vsub.s32 4, %v1371
          %v1373 = vrot.slane %v1216, %v1372
          %v1376 = vlaneseq
          %v1377 = vshrl.u32 %v1376, 7
          %v1378 = vsub.s32 0, %v1377
          %v1379 = vrot.slane %v1369, %v1378
          %v1380 = vlaneseq
          %v1381 = vshrl.u32 %v1380, 7
          %v1382 = vsub.s32 0, %v1381
          %v1383 = vrot.slane %v1373, %v1382
          %v1384 = vsel %vm1237, %v1379, 0.0
          %v1385 = vsel %vm1238, %v1383, 0.0
          %v1386 = vsel %vm1239, %v1379, 0.0
          %v1387 = vsel %vm1240, %v1383, 0.0
          %v1388 = vsel %vm1241, %v1379, 0.0
          %v1389 = vsel %vm1242, %v1383, 0.0
          %v1390 = vsel %vm1243, %v1379, 0.0
          %v1391 = vsel %vm1244, %v1383, 0.0
          %v1392 = vsel %vm1245, %v1379, 0.0
          %v1393 = vsel %vm1246, %v1383, 0.0
          %v1394 = vsel %vm1247, %v1379, 0.0
          %v1395 = vsel %vm1248, %v1383, 0.0
          %v1396 = vsel %vm1249, %v1379, 0.0
          %v1397 = vsel %vm1250, %v1383, 0.0
          %v1398 = vsel %vm1251, %v1379, 0.0
          %v1399 = vsel %vm1252, %v1383, 0.0
          %v1400 = vsel %vm1253, %v1379, 0.0
          %v1401 = vsel %vm1254, %v1383, 0.0
          %v1402 = vsel %vm1255, %v1379, 0.0
          %v1403 = vsel %vm1256, %v1383, 0.0
          %v1404 = vsel %vm1257, %v1379, 0.0
          %v1405 = vsel %vm1258, %v1383, 0.0
          %v1406 = vsel %vm1259, %v1379, 0.0
          %v1407 = vsel %vm1260, %v1383, 0.0
          %v1408 = vsel %vm1261, %v1379, 0.0
          %v1409 = vsel %vm1262, %v1383, 0.0
          %v1410 = vsel %vm1263, %v1379, 0.0
          %v1411 = vsel %vm1264, %v1383, 0.0
          %v1412 = vsel %vm1265, %v1379, 0.0
          %v1413 = vsel %vm1266, %v1383, 0.0
          %v1414 = vsel %vm1267, %v1379, 0.0
          %v1415 = vsel %vm1268, %v1383, 0.0
          %v1416 = vsel %vm1269, %v1379, 0.0
          %v1417 = vsel %vm1270, %v1383, 0.0
          %v1418 = vsel %vm1271, %v1379, 0.0
          %v1419 = vsel %vm1272, %v1383, 0.0
          %v1420 = vsel %vm1273, %v1379, 0.0
          %v1421 = vsel %vm1274, %v1383, 0.0
          %v1422 = vsel %vm1275, %v1379, 0.0
          %v1423 = vsel %vm1276, %v1383, 0.0
          %v1424 = vsel %vm1277, %v1379, 0.0
          %v1425 = vsel %vm1278, %v1383, 0.0
          %v1426 = vsel %vm1279, %v1379, 0.0
          %v1427 = vsel %vm1280, %v1383, 0.0
          %v1428 = vsel %vm1281, %v1379, 0.0
          %v1429 = vsel %vm1282, %v1383, 0.0
          %v1430 = vsel %vm1283, %v1379, 0.0
          %v1431 = vsel %vm1284, %v1383, 0.0
          %v1432 = vsel %vm1285, %v1379, 0.0
          %v1433 = vsel %vm1286, %v1383, 0.0
          %v1434 = vsel %vm1287, %v1379, 0.0
          %v1435 = vsel %vm1288, %v1383, 0.0
          %v1436 = vsel %vm1289, %v1379, 0.0
          %v1437 = vsel %vm1290, %v1383, 0.0
          %v1438 = vsel %vm1291, %v1379, 0.0
          %v1439 = vsel %vm1292, %v1383, 0.0
          %v1440 = vsel %vm1293, %v1379, 0.0
          %v1441 = vsel %vm1294, %v1383, 0.0
          %v1442 = vsel %vm1295, %v1379, 0.0
          %v1443 = vsel %vm1296, %v1383, 0.0
          %v1444 = vsel %vm1297, %v1379, 0.0
          %v1445 = vsel %vm1298, %v1383, 0.0
          %v1446 = vsel %vm1299, %v1379, 0.0
          %v1447 = vsel %vm1300, %v1383, 0.0
          %v1448 = vsel %vm1301, %v1379, 0.0
          %v1449 = vsel %vm1302, %v1383, 0.0
          %v1450 = vsel %vm1303, %v1379, 0.0
          %v1451 = vsel %vm1304, %v1383, 0.0
          %v1452 = vsel %vm1305, %v1379, 0.0
          %v1453 = vsel %vm1306, %v1383, 0.0
          %v1454 = vsel %vm1307, %v1379, 0.0
          %v1455 = vsel %vm1308, %v1383, 0.0
          %v1456 = vsel %vm1309, %v1379, 0.0
          %v1457 = vsel %vm1310, %v1383, 0.0
          %v1458 = vsel %vm1311, %v1379, 0.0
          %v1459 = vsel %vm1312, %v1383, 0.0
          %v1460 = vsel %vm1313, %v1379, 0.0
          %v1461 = vsel %vm1314, %v1383, 0.0
          %v1462 = vsel %vm1315, %v1379, 0.0
          %v1463 = vsel %vm1316, %v1383, 0.0
          %v1464 = vsel %vm1317, %v1379, 0.0
          %v1465 = vsel %vm1318, %v1383, 0.0
          %v1466 = vsel %vm1319, %v1379, 0.0
          %v1467 = vsel %vm1320, %v1383, 0.0
          %v1468 = vsel %vm1321, %v1379, 0.0
          %v1469 = vsel %vm1322, %v1383, 0.0
          %v1470 = vsel %vm1323, %v1379, 0.0
          %v1471 = vsel %vm1324, %v1383, 0.0
          %v1472 = vsel %vm1325, %v1379, 0.0
          %v1473 = vsel %vm1326, %v1383, 0.0
          %v1474 = vsel %vm1327, %v1379, 0.0
          %v1475 = vsel %vm1328, %v1383, 0.0
          %v1476 = vsel %vm1329, %v1379, 0.0
          %v1477 = vsel %vm1330, %v1383, 0.0
          %v1478 = vsel %vm1331, %v1379, 0.0
          %v1479 = vsel %vm1332, %v1383, 0.0
          %v1480 = vsel %vm1333, %v1379, 0.0
          %v1481 = vsel %vm1334, %v1383, 0.0
          %v1482 = vsel %vm1335, %v1379, 0.0
          %v1483 = vsel %vm1336, %v1383, 0.0
          %v1484 = vsel %vm1337, %v1379, 0.0
          %v1485 = vsel %vm1338, %v1383, 0.0
          %v1486 = vsel %vm1339, %v1379, 0.0
          %v1487 = vsel %vm1340, %v1383, 0.0
          %v1488 = vsel %vm1341, %v1379, 0.0
          %v1489 = vsel %vm1342, %v1383, 0.0
          %v1490 = vsel %vm1343, %v1379, 0.0
          %v1491 = vsel %vm1344, %v1383, 0.0
          %v1492 = vsel %vm1345, %v1379, 0.0
          %v1493 = vsel %vm1346, %v1383, 0.0
          %v1494 = vsel %vm1347, %v1379, 0.0
          %v1495 = vsel %vm1348, %v1383, 0.0
          %v1496 = vsel %vm1349, %v1379, 0.0
          %v1497 = vsel %vm1350, %v1383, 0.0
          %v1498 = vsel %vm1351, %v1379, 0.0
          %v1499 = vsel %vm1352, %v1383, 0.0
          %v1500 = vsel %vm1353, %v1379, 0.0
          %v1501 = vsel %vm1354, %v1383, 0.0
          %v1502 = vsel %vm1355, %v1379, 0.0
          %v1503 = vsel %vm1356, %v1383, 0.0
          %v1504 = vsel %vm1357, %v1379, 0.0
          %v1505 = vsel %vm1358, %v1383, 0.0
          %v1506 = vsel %vm1359, %v1379, 0.0
          %v1507 = vsel %vm1360, %v1383, 0.0
          %v1508 = vsel %vm1361, %v1379, 0.0
          %v1509 = vsel %vm1362, %v1383, 0.0
          %v1510 = vsel %vm1363, %v1379, 0.0
          %v1511 = vsel %vm1364, %v1383, 0.0
          %1512 = vmatprep.subr.mxu0 %v1385
          %1513 = vmatpush1.msra.mxu0 %v1384
          %1514 = vmatprep.subr.mxu0 %v1387
          %1515 = vmatpush1.msra.mxu0 %v1386
          %1516 = vmatprep.subr.mxu0 %v1389
          %1517 = vmatpush1.msra.mxu0 %v1388
          %1518 = vmatprep.subr.mxu0 %v1391
          %1519 = vmatpush1.msra.mxu0 %v1390
          %1520 = vmatprep.subr.mxu0 %v1393
          %1521 = vmatpush1.msra.mxu0 %v1392
          %1522 = vmatprep.subr.mxu0 %v1395
          %1523 = vmatpush1.msra.mxu0 %v1394
          %1524 = vmatprep.subr.mxu0 %v1397
          %1525 = vmatpush1.msra.mxu0 %v1396
          %1526 = vmatprep.subr.mxu0 %v1399
          %1527 = vmatpush1.msra.mxu0 %v1398
          %1528 = vmatprep.subr.mxu0 %v1401
          %1529 = vmatpush1.msra.mxu0 %v1400
          %1530 = vmatprep.subr.mxu0 %v1403
          %1531 = vmatpush1.msra.mxu0 %v1402
          %1532 = vmatprep.subr.mxu0 %v1405
          %1533 = vmatpush1.msra.mxu0 %v1404
          %1534 = vmatprep.subr.mxu0 %v1407
          %1535 = vmatpush1.msra.mxu0 %v1406
          %1536 = vmatprep.subr.mxu0 %v1409
          %1537 = vmatpush1.msra.mxu0 %v1408
          %1538 = vmatprep.subr.mxu0 %v1411
          %1539 = vmatpush1.msra.mxu0 %v1410
          %1540 = vmatprep.subr.mxu0 %v1413
          %1541 = vmatpush1.msra.mxu0 %v1412
          %1542 = vmatprep.subr.mxu0 %v1415
          %1543 = vmatpush1.msra.mxu0 %v1414
          %1544 = vmatprep.subr.mxu0 %v1417
          %1545 = vmatpush1.msra.mxu0 %v1416
          %1546 = vmatprep.subr.mxu0 %v1419
          %1547 = vmatpush1.msra.mxu0 %v1418
          %1548 = vmatprep.subr.mxu0 %v1421
          %1549 = vmatpush1.msra.mxu0 %v1420
          %1550 = vmatprep.subr.mxu0 %v1423
          %1551 = vmatpush1.msra.mxu0 %v1422
          %1552 = vmatprep.subr.mxu0 %v1425
          %1553 = vmatpush1.msra.mxu0 %v1424
          %1554 = vmatprep.subr.mxu0 %v1427
          %1555 = vmatpush1.msra.mxu0 %v1426
          %1556 = vmatprep.subr.mxu0 %v1429
          %1557 = vmatpush1.msra.mxu0 %v1428
          %1558 = vmatprep.subr.mxu0 %v1431
          %1559 = vmatpush1.msra.mxu0 %v1430
          %1560 = vmatprep.subr.mxu0 %v1433
          %1561 = vmatpush1.msra.mxu0 %v1432
          %1562 = vmatprep.subr.mxu0 %v1435
          %1563 = vmatpush1.msra.mxu0 %v1434
          %1564 = vmatprep.subr.mxu0 %v1437
          %1565 = vmatpush1.msra.mxu0 %v1436
          %1566 = vmatprep.subr.mxu0 %v1439
          %1567 = vmatpush1.msra.mxu0 %v1438
          %1568 = vmatprep.subr.mxu0 %v1441
          %1569 = vmatpush1.msra.mxu0 %v1440
          %1570 = vmatprep.subr.mxu0 %v1443
          %1571 = vmatpush1.msra.mxu0 %v1442
          %1572 = vmatprep.subr.mxu0 %v1445
          %1573 = vmatpush1.msra.mxu0 %v1444
          %1574 = vmatprep.subr.mxu0 %v1447
          %1575 = vmatpush1.msra.mxu0 %v1446
          %1576 = vmatprep.mubr.f32.mxu0 %v916
          %1577 = vmatmul.mubr.f32.gmra.mrb[0].mxu0 %v183
          %v1578 = vpop.f32.mrb[0].mxu0
          %v1579 = vadd.f32 0.0, %v1578
          %v1580 = vpop.f32.mrb[0].mxu0
          %v1581 = vadd.f32 0.0, %v1580
          %1582 = vdwg.mxu0
          %1583 = vmatprep.subr.mxu0 %v1449
          %1584 = vmatpush1.msra.mxu0 %v1448
          %1585 = vmatprep.subr.mxu0 %v1451
          %1586 = vmatpush1.msra.mxu0 %v1450
          %1587 = vmatprep.subr.mxu0 %v1453
          %1588 = vmatpush1.msra.mxu0 %v1452
          %1589 = vmatprep.subr.mxu0 %v1455
          %1590 = vmatpush1.msra.mxu0 %v1454
          %1591 = vmatprep.subr.mxu0 %v1457
          %1592 = vmatpush1.msra.mxu0 %v1456
          %1593 = vmatprep.subr.mxu0 %v1459
          %1594 = vmatpush1.msra.mxu0 %v1458
          %1595 = vmatprep.subr.mxu0 %v1461
          %1596 = vmatpush1.msra.mxu0 %v1460
          %1597 = vmatprep.subr.mxu0 %v1463
          %1598 = vmatpush1.msra.mxu0 %v1462
          %1599 = vmatprep.subr.mxu0 %v1465
          %1600 = vmatpush1.msra.mxu0 %v1464
          %1601 = vmatprep.subr.mxu0 %v1467
          %1602 = vmatpush1.msra.mxu0 %v1466
          %1603 = vmatprep.subr.mxu0 %v1469
          %1604 = vmatpush1.msra.mxu0 %v1468
          %1605 = vmatprep.subr.mxu0 %v1471
          %1606 = vmatpush1.msra.mxu0 %v1470
          %1607 = vmatprep.subr.mxu0 %v1473
          %1608 = vmatpush1.msra.mxu0 %v1472
          %1609 = vmatprep.subr.mxu0 %v1475
          %1610 = vmatpush1.msra.mxu0 %v1474
          %1611 = vmatprep.subr.mxu0 %v1477
          %1612 = vmatpush1.msra.mxu0 %v1476
          %1613 = vmatprep.subr.mxu0 %v1479
          %1614 = vmatpush1.msra.mxu0 %v1478
          %1615 = vmatprep.subr.mxu0 %v1481
          %1616 = vmatpush1.msra.mxu0 %v1480
          %1617 = vmatprep.subr.mxu0 %v1483
          %1618 = vmatpush1.msra.mxu0 %v1482
          %1619 = vmatprep.subr.mxu0 %v1485
          %1620 = vmatpush1.msra.mxu0 %v1484
          %1621 = vmatprep.subr.mxu0 %v1487
          %1622 = vmatpush1.msra.mxu0 %v1486
          %1623 = vmatprep.subr.mxu0 %v1489
          %1624 = vmatpush1.msra.mxu0 %v1488
          %1625 = vmatprep.subr.mxu0 %v1491
          %1626 = vmatpush1.msra.mxu0 %v1490
          %1627 = vmatprep.subr.mxu0 %v1493
          %1628 = vmatpush1.msra.mxu0 %v1492
          %1629 = vmatprep.subr.mxu0 %v1495
          %1630 = vmatpush1.msra.mxu0 %v1494
          %1631 = vmatprep.subr.mxu0 %v1497
          %1632 = vmatpush1.msra.mxu0 %v1496
          %1633 = vmatprep.subr.mxu0 %v1499
          %1634 = vmatpush1.msra.mxu0 %v1498
          %1635 = vmatprep.subr.mxu0 %v1501
          %1636 = vmatpush1.msra.mxu0 %v1500
          %1637 = vmatprep.subr.mxu0 %v1503
          %1638 = vmatpush1.msra.mxu0 %v1502
          %1639 = vmatprep.subr.mxu0 %v1505
          %1640 = vmatpush1.msra.mxu0 %v1504
          %1641 = vmatprep.subr.mxu0 %v1507
          %1642 = vmatpush1.msra.mxu0 %v1506
          %1643 = vmatprep.subr.mxu0 %v1509
          %1644 = vmatpush1.msra.mxu0 %v1508
          %1645 = vmatprep.subr.mxu0 %v1511
          %1646 = vmatpush1.msra.mxu0 %v1510
          %1647 = vmatprep.mubr.f32.mxu0 %v917
          %1648 = vmatmul.mubr.f32.gmra.mrb[0].mxu0 %v184
          %v1649 = vpop.f32.mrb[0].mxu0
          %v1650 = vadd.f32 %v1579, %v1649
          %v1651 = vpop.f32.mrb[0].mxu0
          %v1652 = vadd.f32 %v1581, %v1651
          %1653 = vdwg.mxu0
          %v1654 = vadd.f32 %v1200, %v1650
          %v1655 = vadd.f32 %v1202, %v1652
          %vm1656 = vmand %vm615, %vm1207
          %vm1657 = vmand %vm1656, %vm1212
          %vm1658 = vmand %vm1657, %vm309
          %vm1659 = vmand %vm1658, %vm313
          %v1660 = vsel %vm1659, %v221, 0.0
          %v1661 = vadd.s32 %v1219, %v621
          %v1662 = vlaneseq
          %v1663 = vshrl.u32 %v1662, 7
          %v1664 = vsub.s32 2, %v1663
          %v1665 = vrot.slane %v1661, %v1664
          %v1666 = vlaneseq
          %v1667 = vshrl.u32 %v1666, 7
          %v1668 = vsub.s32 6, %v1667
          %v1669 = vrot.slane %v1661, %v1668
          %v1670 = vlaneseq
          %v1671 = vshrl.u32 %v1670, 7
          %v1672 = vsub.s32 2, %v1671
          %v1673 = vrot.slane %v1665, %v1672
          %v1674 = vlaneseq
          %v1675 = vshrl.u32 %v1674, 7
          %v1676 = vsub.s32 2, %v1675
          %v1677 = vrot.slane %v1669, %v1676
          %vm1678 = vcmp.eq.s32.totalorder %v230, %v1673
          %vm1679 = vcmp.eq.s32.totalorder %v230, %v1677
          %vm1680 = vcmp.eq.s32.totalorder %v231, %v1673
          %vm1681 = vcmp.eq.s32.totalorder %v231, %v1677
          %vm1682 = vcmp.eq.s32.totalorder %v232, %v1673
          %vm1683 = vcmp.eq.s32.totalorder %v232, %v1677
          %vm1684 = vcmp.eq.s32.totalorder %v233, %v1673
          %vm1685 = vcmp.eq.s32.totalorder %v233, %v1677
          %vm1686 = vcmp.eq.s32.totalorder %v234, %v1673
          %vm1687 = vcmp.eq.s32.totalorder %v234, %v1677
          %vm1688 = vcmp.eq.s32.totalorder %v235, %v1673
          %vm1689 = vcmp.eq.s32.totalorder %v235, %v1677
          %vm1690 = vcmp.eq.s32.totalorder %v236, %v1673
          %vm1691 = vcmp.eq.s32.totalorder %v236, %v1677
          %vm1692 = vcmp.eq.s32.totalorder %v237, %v1673
          %vm1693 = vcmp.eq.s32.totalorder %v237, %v1677
          %vm1694 = vcmp.eq.s32.totalorder %v238, %v1673
          %vm1695 = vcmp.eq.s32.totalorder %v238, %v1677
          %vm1696 = vcmp.eq.s32.totalorder %v239, %v1673
          %vm1697 = vcmp.eq.s32.totalorder %v239, %v1677
          %vm1698 = vcmp.eq.s32.totalorder %v240, %v1673
          %vm1699 = vcmp.eq.s32.totalorder %v240, %v1677
          %vm1700 = vcmp.eq.s32.totalorder %v241, %v1673
          %vm1701 = vcmp.eq.s32.totalorder %v241, %v1677
          %vm1702 = vcmp.eq.s32.totalorder %v242, %v1673
          %vm1703 = vcmp.eq.s32.totalorder %v242, %v1677
          %vm1704 = vcmp.eq.s32.totalorder %v243, %v1673
          %vm1705 = vcmp.eq.s32.totalorder %v243, %v1677
          %vm1706 = vcmp.eq.s32.totalorder %v244, %v1673
          %vm1707 = vcmp.eq.s32.totalorder %v244, %v1677
          %vm1708 = vcmp.eq.s32.totalorder %v245, %v1673
          %vm1709 = vcmp.eq.s32.totalorder %v245, %v1677
          %vm1710 = vcmp.eq.s32.totalorder %v246, %v1673
          %vm1711 = vcmp.eq.s32.totalorder %v246, %v1677
          %vm1712 = vcmp.eq.s32.totalorder %v247, %v1673
          %vm1713 = vcmp.eq.s32.totalorder %v247, %v1677
          %vm1714 = vcmp.eq.s32.totalorder %v248, %v1673
          %vm1715 = vcmp.eq.s32.totalorder %v248, %v1677
          %vm1716 = vcmp.eq.s32.totalorder %v249, %v1673
          %vm1717 = vcmp.eq.s32.totalorder %v249, %v1677
          %vm1718 = vcmp.eq.s32.totalorder %v250, %v1673
          %vm1719 = vcmp.eq.s32.totalorder %v250, %v1677
          %vm1720 = vcmp.eq.s32.totalorder %v251, %v1673
          %vm1721 = vcmp.eq.s32.totalorder %v251, %v1677
          %vm1722 = vcmp.eq.s32.totalorder %v252, %v1673
          %vm1723 = vcmp.eq.s32.totalorder %v252, %v1677
          %vm1724 = vcmp.eq.s32.totalorder %v253, %v1673
          %vm1725 = vcmp.eq.s32.totalorder %v253, %v1677
          %vm1726 = vcmp.eq.s32.totalorder %v254, %v1673
          %vm1727 = vcmp.eq.s32.totalorder %v254, %v1677
          %vm1728 = vcmp.eq.s32.totalorder %v255, %v1673
          %vm1729 = vcmp.eq.s32.totalorder %v255, %v1677
          %vm1730 = vcmp.eq.s32.totalorder %v256, %v1673
          %vm1731 = vcmp.eq.s32.totalorder %v256, %v1677
          %vm1732 = vcmp.eq.s32.totalorder %v257, %v1673
          %vm1733 = vcmp.eq.s32.totalorder %v257, %v1677
          %vm1734 = vcmp.eq.s32.totalorder %v258, %v1673
          %vm1735 = vcmp.eq.s32.totalorder %v258, %v1677
          %vm1736 = vcmp.eq.s32.totalorder %v259, %v1673
          %vm1737 = vcmp.eq.s32.totalorder %v259, %v1677
          %vm1738 = vcmp.eq.s32.totalorder %v260, %v1673
          %vm1739 = vcmp.eq.s32.totalorder %v260, %v1677
          %vm1740 = vcmp.eq.s32.totalorder %v261, %v1673
          %vm1741 = vcmp.eq.s32.totalorder %v261, %v1677
          %vm1742 = vcmp.eq.s32.totalorder %v262, %v1673
          %vm1743 = vcmp.eq.s32.totalorder %v262, %v1677
          %vm1744 = vcmp.eq.s32.totalorder %v263, %v1673
          %vm1745 = vcmp.eq.s32.totalorder %v263, %v1677
          %vm1746 = vcmp.eq.s32.totalorder %v264, %v1673
          %vm1747 = vcmp.eq.s32.totalorder %v264, %v1677
          %vm1748 = vcmp.eq.s32.totalorder %v265, %v1673
          %vm1749 = vcmp.eq.s32.totalorder %v265, %v1677
          %vm1750 = vcmp.eq.s32.totalorder %v266, %v1673
          %vm1751 = vcmp.eq.s32.totalorder %v266, %v1677
          %vm1752 = vcmp.eq.s32.totalorder %v267, %v1673
          %vm1753 = vcmp.eq.s32.totalorder %v267, %v1677
          %vm1754 = vcmp.eq.s32.totalorder %v268, %v1673
          %vm1755 = vcmp.eq.s32.totalorder %v268, %v1677
          %vm1756 = vcmp.eq.s32.totalorder %v269, %v1673
          %vm1757 = vcmp.eq.s32.totalorder %v269, %v1677
          %vm1758 = vcmp.eq.s32.totalorder %v270, %v1673
          %vm1759 = vcmp.eq.s32.totalorder %v270, %v1677
          %vm1760 = vcmp.eq.s32.totalorder %v271, %v1673
          %vm1761 = vcmp.eq.s32.totalorder %v271, %v1677
          %vm1762 = vcmp.eq.s32.totalorder %v272, %v1673
          %vm1763 = vcmp.eq.s32.totalorder %v272, %v1677
          %vm1764 = vcmp.eq.s32.totalorder %v273, %v1673
          %vm1765 = vcmp.eq.s32.totalorder %v273, %v1677
          %vm1766 = vcmp.eq.s32.totalorder %v274, %v1673
          %vm1767 = vcmp.eq.s32.totalorder %v274, %v1677
          %vm1768 = vcmp.eq.s32.totalorder %v275, %v1673
          %vm1769 = vcmp.eq.s32.totalorder %v275, %v1677
          %vm1770 = vcmp.eq.s32.totalorder %v276, %v1673
          %vm1771 = vcmp.eq.s32.totalorder %v276, %v1677
          %vm1772 = vcmp.eq.s32.totalorder %v277, %v1673
          %vm1773 = vcmp.eq.s32.totalorder %v277, %v1677
          %vm1774 = vcmp.eq.s32.totalorder %v278, %v1673
          %vm1775 = vcmp.eq.s32.totalorder %v278, %v1677
          %vm1776 = vcmp.eq.s32.totalorder %v279, %v1673
          %vm1777 = vcmp.eq.s32.totalorder %v279, %v1677
          %vm1778 = vcmp.eq.s32.totalorder %v280, %v1673
          %vm1779 = vcmp.eq.s32.totalorder %v280, %v1677
          %vm1780 = vcmp.eq.s32.totalorder %v281, %v1673
          %vm1781 = vcmp.eq.s32.totalorder %v281, %v1677
          %vm1782 = vcmp.eq.s32.totalorder %v282, %v1673
          %vm1783 = vcmp.eq.s32.totalorder %v282, %v1677
          %vm1784 = vcmp.eq.s32.totalorder %v283, %v1673
          %vm1785 = vcmp.eq.s32.totalorder %v283, %v1677
          %vm1786 = vcmp.eq.s32.totalorder %v284, %v1673
          %vm1787 = vcmp.eq.s32.totalorder %v284, %v1677
          %vm1788 = vcmp.eq.s32.totalorder %v285, %v1673
          %vm1789 = vcmp.eq.s32.totalorder %v285, %v1677
          %vm1790 = vcmp.eq.s32.totalorder %v286, %v1673
          %vm1791 = vcmp.eq.s32.totalorder %v286, %v1677
          %vm1792 = vcmp.eq.s32.totalorder %v287, %v1673
          %vm1793 = vcmp.eq.s32.totalorder %v287, %v1677
          %vm1794 = vcmp.eq.s32.totalorder %v288, %v1673
          %vm1795 = vcmp.eq.s32.totalorder %v288, %v1677
          %vm1796 = vcmp.eq.s32.totalorder %v289, %v1673
          %vm1797 = vcmp.eq.s32.totalorder %v289, %v1677
          %vm1798 = vcmp.eq.s32.totalorder %v290, %v1673
          %vm1799 = vcmp.eq.s32.totalorder %v290, %v1677
          %vm1800 = vcmp.eq.s32.totalorder %v291, %v1673
          %vm1801 = vcmp.eq.s32.totalorder %v291, %v1677
          %vm1802 = vcmp.eq.s32.totalorder %v292, %v1673
          %vm1803 = vcmp.eq.s32.totalorder %v292, %v1677
          %vm1804 = vcmp.eq.s32.totalorder %v293, %v1673
          %vm1805 = vcmp.eq.s32.totalorder %v293, %v1677
          %v1807 = vlaneseq
          %v1808 = vshrl.u32 %v1807, 7
          %v1809 = vsub.s32 0, %v1808
          %v1810 = vrot.slane %v1660, %v1809
          %v1811 = vlaneseq
          %v1812 = vshrl.u32 %v1811, 7
          %v1813 = vsub.s32 4, %v1812
          %v1814 = vrot.slane %v1660, %v1813
          %v1817 = vlaneseq
          %v1818 = vshrl.u32 %v1817, 7
          %v1819 = vsub.s32 0, %v1818
          %v1820 = vrot.slane %v1810, %v1819
          %v1821 = vlaneseq
          %v1822 = vshrl.u32 %v1821, 7
          %v1823 = vsub.s32 0, %v1822
          %v1824 = vrot.slane %v1814, %v1823
          %v1825 = vsel %vm1678, %v1820, 0.0
          %v1826 = vsel %vm1679, %v1824, 0.0
          %v1827 = vsel %vm1680, %v1820, 0.0
          %v1828 = vsel %vm1681, %v1824, 0.0
          %v1829 = vsel %vm1682, %v1820, 0.0
          %v1830 = vsel %vm1683, %v1824, 0.0
          %v1831 = vsel %vm1684, %v1820, 0.0
          %v1832 = vsel %vm1685, %v1824, 0.0
          %v1833 = vsel %vm1686, %v1820, 0.0
          %v1834 = vsel %vm1687, %v1824, 0.0
          %v1835 = vsel %vm1688, %v1820, 0.0
          %v1836 = vsel %vm1689, %v1824, 0.0
          %v1837 = vsel %vm1690, %v1820, 0.0
          %v1838 = vsel %vm1691, %v1824, 0.0
          %v1839 = vsel %vm1692, %v1820, 0.0
          %v1840 = vsel %vm1693, %v1824, 0.0
          %v1841 = vsel %vm1694, %v1820, 0.0
          %v1842 = vsel %vm1695, %v1824, 0.0
          %v1843 = vsel %vm1696, %v1820, 0.0
          %v1844 = vsel %vm1697, %v1824, 0.0
          %v1845 = vsel %vm1698, %v1820, 0.0
          %v1846 = vsel %vm1699, %v1824, 0.0
          %v1847 = vsel %vm1700, %v1820, 0.0
          %v1848 = vsel %vm1701, %v1824, 0.0
          %v1849 = vsel %vm1702, %v1820, 0.0
          %v1850 = vsel %vm1703, %v1824, 0.0
          %v1851 = vsel %vm1704, %v1820, 0.0
          %v1852 = vsel %vm1705, %v1824, 0.0
          %v1853 = vsel %vm1706, %v1820, 0.0
          %v1854 = vsel %vm1707, %v1824, 0.0
          %v1855 = vsel %vm1708, %v1820, 0.0
          %v1856 = vsel %vm1709, %v1824, 0.0
          %v1857 = vsel %vm1710, %v1820, 0.0
          %v1858 = vsel %vm1711, %v1824, 0.0
          %v1859 = vsel %vm1712, %v1820, 0.0
          %v1860 = vsel %vm1713, %v1824, 0.0
          %v1861 = vsel %vm1714, %v1820, 0.0
          %v1862 = vsel %vm1715, %v1824, 0.0
          %v1863 = vsel %vm1716, %v1820, 0.0
          %v1864 = vsel %vm1717, %v1824, 0.0
          %v1865 = vsel %vm1718, %v1820, 0.0
          %v1866 = vsel %vm1719, %v1824, 0.0
          %v1867 = vsel %vm1720, %v1820, 0.0
          %v1868 = vsel %vm1721, %v1824, 0.0
          %v1869 = vsel %vm1722, %v1820, 0.0
          %v1870 = vsel %vm1723, %v1824, 0.0
          %v1871 = vsel %vm1724, %v1820, 0.0
          %v1872 = vsel %vm1725, %v1824, 0.0
          %v1873 = vsel %vm1726, %v1820, 0.0
          %v1874 = vsel %vm1727, %v1824, 0.0
          %v1875 = vsel %vm1728, %v1820, 0.0
          %v1876 = vsel %vm1729, %v1824, 0.0
          %v1877 = vsel %vm1730, %v1820, 0.0
          %v1878 = vsel %vm1731, %v1824, 0.0
          %v1879 = vsel %vm1732, %v1820, 0.0
          %v1880 = vsel %vm1733, %v1824, 0.0
          %v1881 = vsel %vm1734, %v1820, 0.0
          %v1882 = vsel %vm1735, %v1824, 0.0
          %v1883 = vsel %vm1736, %v1820, 0.0
          %v1884 = vsel %vm1737, %v1824, 0.0
          %v1885 = vsel %vm1738, %v1820, 0.0
          %v1886 = vsel %vm1739, %v1824, 0.0
          %v1887 = vsel %vm1740, %v1820, 0.0
          %v1888 = vsel %vm1741, %v1824, 0.0
          %v1889 = vsel %vm1742, %v1820, 0.0
          %v1890 = vsel %vm1743, %v1824, 0.0
          %v1891 = vsel %vm1744, %v1820, 0.0
          %v1892 = vsel %vm1745, %v1824, 0.0
          %v1893 = vsel %vm1746, %v1820, 0.0
          %v1894 = vsel %vm1747, %v1824, 0.0
          %v1895 = vsel %vm1748, %v1820, 0.0
          %v1896 = vsel %vm1749, %v1824, 0.0
          %v1897 = vsel %vm1750, %v1820, 0.0
          %v1898 = vsel %vm1751, %v1824, 0.0
          %v1899 = vsel %vm1752, %v1820, 0.0
          %v1900 = vsel %vm1753, %v1824, 0.0
          %v1901 = vsel %vm1754, %v1820, 0.0
          %v1902 = vsel %vm1755, %v1824, 0.0
          %v1903 = vsel %vm1756, %v1820, 0.0
          %v1904 = vsel %vm1757, %v1824, 0.0
          %v1905 = vsel %vm1758, %v1820, 0.0
          %v1906 = vsel %vm1759, %v1824, 0.0
          %v1907 = vsel %vm1760, %v1820, 0.0
          %v1908 = vsel %vm1761, %v1824, 0.0
          %v1909 = vsel %vm1762, %v1820, 0.0
          %v1910 = vsel %vm1763, %v1824, 0.0
          %v1911 = vsel %vm1764, %v1820, 0.0
          %v1912 = vsel %vm1765, %v1824, 0.0
          %v1913 = vsel %vm1766, %v1820, 0.0
          %v1914 = vsel %vm1767, %v1824, 0.0
          %v1915 = vsel %vm1768, %v1820, 0.0
          %v1916 = vsel %vm1769, %v1824, 0.0
          %v1917 = vsel %vm1770, %v1820, 0.0
          %v1918 = vsel %vm1771, %v1824, 0.0
          %v1919 = vsel %vm1772, %v1820, 0.0
          %v1920 = vsel %vm1773, %v1824, 0.0
          %v1921 = vsel %vm1774, %v1820, 0.0
          %v1922 = vsel %vm1775, %v1824, 0.0
          %v1923 = vsel %vm1776, %v1820, 0.0
          %v1924 = vsel %vm1777, %v1824, 0.0
          %v1925 = vsel %vm1778, %v1820, 0.0
          %v1926 = vsel %vm1779, %v1824, 0.0
          %v1927 = vsel %vm1780, %v1820, 0.0
          %v1928 = vsel %vm1781, %v1824, 0.0
          %v1929 = vsel %vm1782, %v1820, 0.0
          %v1930 = vsel %vm1783, %v1824, 0.0
          %v1931 = vsel %vm1784, %v1820, 0.0
          %v1932 = vsel %vm1785, %v1824, 0.0
          %v1933 = vsel %vm1786, %v1820, 0.0
          %v1934 = vsel %vm1787, %v1824, 0.0
          %v1935 = vsel %vm1788, %v1820, 0.0
          %v1936 = vsel %vm1789, %v1824, 0.0
          %v1937 = vsel %vm1790, %v1820, 0.0
          %v1938 = vsel %vm1791, %v1824, 0.0
          %v1939 = vsel %vm1792, %v1820, 0.0
          %v1940 = vsel %vm1793, %v1824, 0.0
          %v1941 = vsel %vm1794, %v1820, 0.0
          %v1942 = vsel %vm1795, %v1824, 0.0
          %v1943 = vsel %vm1796, %v1820, 0.0
          %v1944 = vsel %vm1797, %v1824, 0.0
          %v1945 = vsel %vm1798, %v1820, 0.0
          %v1946 = vsel %vm1799, %v1824, 0.0
          %v1947 = vsel %vm1800, %v1820, 0.0
          %v1948 = vsel %vm1801, %v1824, 0.0
          %v1949 = vsel %vm1802, %v1820, 0.0
          %v1950 = vsel %vm1803, %v1824, 0.0
          %v1951 = vsel %vm1804, %v1820, 0.0
          %v1952 = vsel %vm1805, %v1824, 0.0
          %1953 = vmatprep.subr.mxu0 %v1826
          %1954 = vmatpush1.msra.mxu0 %v1825
          %1955 = vmatprep.subr.mxu0 %v1828
          %1956 = vmatpush1.msra.mxu0 %v1827
          %1957 = vmatprep.subr.mxu0 %v1830
          %1958 = vmatpush1.msra.mxu0 %v1829
          %1959 = vmatprep.subr.mxu0 %v1832
          %1960 = vmatpush1.msra.mxu0 %v1831
          %1961 = vmatprep.subr.mxu0 %v1834
          %1962 = vmatpush1.msra.mxu0 %v1833
          %1963 = vmatprep.subr.mxu0 %v1836
          %1964 = vmatpush1.msra.mxu0 %v1835
          %1965 = vmatprep.subr.mxu0 %v1838
          %1966 = vmatpush1.msra.mxu0 %v1837
          %1967 = vmatprep.subr.mxu0 %v1840
          %1968 = vmatpush1.msra.mxu0 %v1839
          %1969 = vmatprep.subr.mxu0 %v1842
          %1970 = vmatpush1.msra.mxu0 %v1841
          %1971 = vmatprep.subr.mxu0 %v1844
          %1972 = vmatpush1.msra.mxu0 %v1843
          %1973 = vmatprep.subr.mxu0 %v1846
          %1974 = vmatpush1.msra.mxu0 %v1845
          %1975 = vmatprep.subr.mxu0 %v1848
          %1976 = vmatpush1.msra.mxu0 %v1847
          %1977 = vmatprep.subr.mxu0 %v1850
          %1978 = vmatpush1.msra.mxu0 %v1849
          %1979 = vmatprep.subr.mxu0 %v1852
          %1980 = vmatpush1.msra.mxu0 %v1851
          %1981 = vmatprep.subr.mxu0 %v1854
          %1982 = vmatpush1.msra.mxu0 %v1853
          %1983 = vmatprep.subr.mxu0 %v1856
          %1984 = vmatpush1.msra.mxu0 %v1855
          %1985 = vmatprep.subr.mxu0 %v1858
          %1986 = vmatpush1.msra.mxu0 %v1857
          %1987 = vmatprep.subr.mxu0 %v1860
          %1988 = vmatpush1.msra.mxu0 %v1859
          %1989 = vmatprep.subr.mxu0 %v1862
          %1990 = vmatpush1.msra.mxu0 %v1861
          %1991 = vmatprep.subr.mxu0 %v1864
          %1992 = vmatpush1.msra.mxu0 %v1863
          %1993 = vmatprep.subr.mxu0 %v1866
          %1994 = vmatpush1.msra.mxu0 %v1865
          %1995 = vmatprep.subr.mxu0 %v1868
          %1996 = vmatpush1.msra.mxu0 %v1867
          %1997 = vmatprep.subr.mxu0 %v1870
          %1998 = vmatpush1.msra.mxu0 %v1869
          %1999 = vmatprep.subr.mxu0 %v1872
          %2000 = vmatpush1.msra.mxu0 %v1871
          %2001 = vmatprep.subr.mxu0 %v1874
          %2002 = vmatpush1.msra.mxu0 %v1873
          %2003 = vmatprep.subr.mxu0 %v1876
          %2004 = vmatpush1.msra.mxu0 %v1875
          %2005 = vmatprep.subr.mxu0 %v1878
          %2006 = vmatpush1.msra.mxu0 %v1877
          %2007 = vmatprep.subr.mxu0 %v1880
          %2008 = vmatpush1.msra.mxu0 %v1879
          %2009 = vmatprep.subr.mxu0 %v1882
          %2010 = vmatpush1.msra.mxu0 %v1881
          %2011 = vmatprep.subr.mxu0 %v1884
          %2012 = vmatpush1.msra.mxu0 %v1883
          %2013 = vmatprep.subr.mxu0 %v1886
          %2014 = vmatpush1.msra.mxu0 %v1885
          %2015 = vmatprep.subr.mxu0 %v1888
          %2016 = vmatpush1.msra.mxu0 %v1887
          %2017 = vmatprep.mubr.f32.mxu0 %v916
          %2018 = vmatmul.mubr.f32.gmra.mrb[0].mxu0 %v183
          %v2019 = vpop.f32.mrb[0].mxu0
          %v2020 = vadd.f32 0.0, %v2019
          %v2021 = vpop.f32.mrb[0].mxu0
          %v2022 = vadd.f32 0.0, %v2021
          %2023 = vdwg.mxu0
          %2024 = vmatprep.subr.mxu0 %v1890
          %2025 = vmatpush1.msra.mxu0 %v1889
          %2026 = vmatprep.subr.mxu0 %v1892
          %2027 = vmatpush1.msra.mxu0 %v1891
          %2028 = vmatprep.subr.mxu0 %v1894
          %2029 = vmatpush1.msra.mxu0 %v1893
          %2030 = vmatprep.subr.mxu0 %v1896
          %2031 = vmatpush1.msra.mxu0 %v1895
          %2032 = vmatprep.subr.mxu0 %v1898
          %2033 = vmatpush1.msra.mxu0 %v1897
          %2034 = vmatprep.subr.mxu0 %v1900
          %2035 = vmatpush1.msra.mxu0 %v1899
          %2036 = vmatprep.subr.mxu0 %v1902
          %2037 = vmatpush1.msra.mxu0 %v1901
          %2038 = vmatprep.subr.mxu0 %v1904
          %2039 = vmatpush1.msra.mxu0 %v1903
          %2040 = vmatprep.subr.mxu0 %v1906
          %2041 = vmatpush1.msra.mxu0 %v1905
          %2042 = vmatprep.subr.mxu0 %v1908
          %2043 = vmatpush1.msra.mxu0 %v1907
          %2044 = vmatprep.subr.mxu0 %v1910
          %2045 = vmatpush1.msra.mxu0 %v1909
          %2046 = vmatprep.subr.mxu0 %v1912
          %2047 = vmatpush1.msra.mxu0 %v1911
          %2048 = vmatprep.subr.mxu0 %v1914
          %2049 = vmatpush1.msra.mxu0 %v1913
          %2050 = vmatprep.subr.mxu0 %v1916
          %2051 = vmatpush1.msra.mxu0 %v1915
          %2052 = vmatprep.subr.mxu0 %v1918
          %2053 = vmatpush1.msra.mxu0 %v1917
          %2054 = vmatprep.subr.mxu0 %v1920
          %2055 = vmatpush1.msra.mxu0 %v1919
          %2056 = vmatprep.subr.mxu0 %v1922
          %2057 = vmatpush1.msra.mxu0 %v1921
          %2058 = vmatprep.subr.mxu0 %v1924
          %2059 = vmatpush1.msra.mxu0 %v1923
          %2060 = vmatprep.subr.mxu0 %v1926
          %2061 = vmatpush1.msra.mxu0 %v1925
          %2062 = vmatprep.subr.mxu0 %v1928
          %2063 = vmatpush1.msra.mxu0 %v1927
          %2064 = vmatprep.subr.mxu0 %v1930
          %2065 = vmatpush1.msra.mxu0 %v1929
          %2066 = vmatprep.subr.mxu0 %v1932
          %2067 = vmatpush1.msra.mxu0 %v1931
          %2068 = vmatprep.subr.mxu0 %v1934
          %2069 = vmatpush1.msra.mxu0 %v1933
          %2070 = vmatprep.subr.mxu0 %v1936
          %2071 = vmatpush1.msra.mxu0 %v1935
          %2072 = vmatprep.subr.mxu0 %v1938
          %2073 = vmatpush1.msra.mxu0 %v1937
          %2074 = vmatprep.subr.mxu0 %v1940
          %2075 = vmatpush1.msra.mxu0 %v1939
          %2076 = vmatprep.subr.mxu0 %v1942
          %2077 = vmatpush1.msra.mxu0 %v1941
          %2078 = vmatprep.subr.mxu0 %v1944
          %2079 = vmatpush1.msra.mxu0 %v1943
          %2080 = vmatprep.subr.mxu0 %v1946
          %2081 = vmatpush1.msra.mxu0 %v1945
          %2082 = vmatprep.subr.mxu0 %v1948
          %2083 = vmatpush1.msra.mxu0 %v1947
          %2084 = vmatprep.subr.mxu0 %v1950
          %2085 = vmatpush1.msra.mxu0 %v1949
          %2086 = vmatprep.subr.mxu0 %v1952
          %2087 = vmatpush1.msra.mxu0 %v1951
          %2088 = vmatprep.mubr.f32.mxu0 %v917
          %2089 = vmatmul.mubr.f32.gmra.mrb[0].mxu0 %v184
          %v2090 = vpop.f32.mrb[0].mxu0
          %v2091 = vadd.f32 %v2020, %v2090
          %v2092 = vpop.f32.mrb[0].mxu0
          %v2093 = vadd.f32 %v2022, %v2092
          %2094 = vdwg.mxu0
          %v2095 = vadd.f32 %v1654, %v2091
          %v2096 = vadd.f32 %v1655, %v2093
          %v2097 = vrot.slane %v1204, 6
          %v2098 = vrot.slane %v2097, 4
          %vm2099 = vcmp.ne.s32.totalorder %v2098, 0
          %vm2100 = vmand %vm306, %vm2099
          %v2101 = vrot.slane %v1209, 6
          %v2102 = vrot.slane %v2101, 4
          %vm2103 = vcmp.ne.s32.totalorder %v2102, 0
          %vm2104 = vmand %vm2100, %vm2103
          %v2105 = vsel %vm2104, %v225, 0.0
          %v2106 = vmul.u32 %v202, 64
          %v2107 = vadd.s32 %v2106, %v318
          %v2108 = vadd.s32 %v2107, %v320
          %v2109 = vlaneseq
          %v2110 = vshrl.u32 %v2109, 7
          %v2111 = vsub.s32 2, %v2110
          %v2112 = vrot.slane %v2108, %v2111
          %v2113 = vlaneseq
          %v2114 = vshrl.u32 %v2113, 7
          %v2115 = vsub.s32 6, %v2114
          %v2116 = vrot.slane %v2108, %v2115
          %v2117 = vlaneseq
          %v2118 = vshrl.u32 %v2117, 7
          %v2119 = vsub.s32 2, %v2118
          %v2120 = vrot.slane %v2112, %v2119
          %v2121 = vlaneseq
          %v2122 = vshrl.u32 %v2121, 7
          %v2123 = vsub.s32 2, %v2122
          %v2124 = vrot.slane %v2116, %v2123
          %vm2125 = vcmp.eq.s32.totalorder %v230, %v2120
          %vm2126 = vcmp.eq.s32.totalorder %v230, %v2124
          %vm2127 = vcmp.eq.s32.totalorder %v231, %v2120
          %vm2128 = vcmp.eq.s32.totalorder %v231, %v2124
          %vm2129 = vcmp.eq.s32.totalorder %v232, %v2120
          %vm2130 = vcmp.eq.s32.totalorder %v232, %v2124
          %vm2131 = vcmp.eq.s32.totalorder %v233, %v2120
          %vm2132 = vcmp.eq.s32.totalorder %v233, %v2124
          %vm2133 = vcmp.eq.s32.totalorder %v234, %v2120
          %vm2134 = vcmp.eq.s32.totalorder %v234, %v2124
          %vm2135 = vcmp.eq.s32.totalorder %v235, %v2120
          %vm2136 = vcmp.eq.s32.totalorder %v235, %v2124
          %vm2137 = vcmp.eq.s32.totalorder %v236, %v2120
          %vm2138 = vcmp.eq.s32.totalorder %v236, %v2124
          %vm2139 = vcmp.eq.s32.totalorder %v237, %v2120
          %vm2140 = vcmp.eq.s32.totalorder %v237, %v2124
          %vm2141 = vcmp.eq.s32.totalorder %v238, %v2120
          %vm2142 = vcmp.eq.s32.totalorder %v238, %v2124
          %vm2143 = vcmp.eq.s32.totalorder %v239, %v2120
          %vm2144 = vcmp.eq.s32.totalorder %v239, %v2124
          %vm2145 = vcmp.eq.s32.totalorder %v240, %v2120
          %vm2146 = vcmp.eq.s32.totalorder %v240, %v2124
          %vm2147 = vcmp.eq.s32.totalorder %v241, %v2120
          %vm2148 = vcmp.eq.s32.totalorder %v241, %v2124
          %vm2149 = vcmp.eq.s32.totalorder %v242, %v2120
          %vm2150 = vcmp.eq.s32.totalorder %v242, %v2124
          %vm2151 = vcmp.eq.s32.totalorder %v243, %v2120
          %vm2152 = vcmp.eq.s32.totalorder %v243, %v2124
          %vm2153 = vcmp.eq.s32.totalorder %v244, %v2120
          %vm2154 = vcmp.eq.s32.totalorder %v244, %v2124
          %vm2155 = vcmp.eq.s32.totalorder %v245, %v2120
          %vm2156 = vcmp.eq.s32.totalorder %v245, %v2124
          %vm2157 = vcmp.eq.s32.totalorder %v246, %v2120
          %vm2158 = vcmp.eq.s32.totalorder %v246, %v2124
          %vm2159 = vcmp.eq.s32.totalorder %v247, %v2120
          %vm2160 = vcmp.eq.s32.totalorder %v247, %v2124
          %vm2161 = vcmp.eq.s32.totalorder %v248, %v2120
          %vm2162 = vcmp.eq.s32.totalorder %v248, %v2124
          %vm2163 = vcmp.eq.s32.totalorder %v249, %v2120
          %vm2164 = vcmp.eq.s32.totalorder %v249, %v2124
          %vm2165 = vcmp.eq.s32.totalorder %v250, %v2120
          %vm2166 = vcmp.eq.s32.totalorder %v250, %v2124
          %vm2167 = vcmp.eq.s32.totalorder %v251, %v2120
          %vm2168 = vcmp.eq.s32.totalorder %v251, %v2124
          %vm2169 = vcmp.eq.s32.totalorder %v252, %v2120
          %vm2170 = vcmp.eq.s32.totalorder %v252, %v2124
          %vm2171 = vcmp.eq.s32.totalorder %v253, %v2120
          %vm2172 = vcmp.eq.s32.totalorder %v253, %v2124
          %vm2173 = vcmp.eq.s32.totalorder %v254, %v2120
          %vm2174 = vcmp.eq.s32.totalorder %v254, %v2124
          %vm2175 = vcmp.eq.s32.totalorder %v255, %v2120
          %vm2176 = vcmp.eq.s32.totalorder %v255, %v2124
          %vm2177 = vcmp.eq.s32.totalorder %v256, %v2120
          %vm2178 = vcmp.eq.s32.totalorder %v256, %v2124
          %vm2179 = vcmp.eq.s32.totalorder %v257, %v2120
          %vm2180 = vcmp.eq.s32.totalorder %v257, %v2124
          %vm2181 = vcmp.eq.s32.totalorder %v258, %v2120
          %vm2182 = vcmp.eq.s32.totalorder %v258, %v2124
          %vm2183 = vcmp.eq.s32.totalorder %v259, %v2120
          %vm2184 = vcmp.eq.s32.totalorder %v259, %v2124
          %vm2185 = vcmp.eq.s32.totalorder %v260, %v2120
          %vm2186 = vcmp.eq.s32.totalorder %v260, %v2124
          %vm2187 = vcmp.eq.s32.totalorder %v261, %v2120
          %vm2188 = vcmp.eq.s32.totalorder %v261, %v2124
          %vm2189 = vcmp.eq.s32.totalorder %v262, %v2120
          %vm2190 = vcmp.eq.s32.totalorder %v262, %v2124
          %vm2191 = vcmp.eq.s32.totalorder %v263, %v2120
          %vm2192 = vcmp.eq.s32.totalorder %v263, %v2124
          %vm2193 = vcmp.eq.s32.totalorder %v264, %v2120
          %vm2194 = vcmp.eq.s32.totalorder %v264, %v2124
          %vm2195 = vcmp.eq.s32.totalorder %v265, %v2120
          %vm2196 = vcmp.eq.s32.totalorder %v265, %v2124
          %vm2197 = vcmp.eq.s32.totalorder %v266, %v2120
          %vm2198 = vcmp.eq.s32.totalorder %v266, %v2124
          %vm2199 = vcmp.eq.s32.totalorder %v267, %v2120
          %vm2200 = vcmp.eq.s32.totalorder %v267, %v2124
          %vm2201 = vcmp.eq.s32.totalorder %v268, %v2120
          %vm2202 = vcmp.eq.s32.totalorder %v268, %v2124
          %vm2203 = vcmp.eq.s32.totalorder %v269, %v2120
          %vm2204 = vcmp.eq.s32.totalorder %v269, %v2124
          %vm2205 = vcmp.eq.s32.totalorder %v270, %v2120
          %vm2206 = vcmp.eq.s32.totalorder %v270, %v2124
          %vm2207 = vcmp.eq.s32.totalorder %v271, %v2120
          %vm2208 = vcmp.eq.s32.totalorder %v271, %v2124
          %vm2209 = vcmp.eq.s32.totalorder %v272, %v2120
          %vm2210 = vcmp.eq.s32.totalorder %v272, %v2124
          %vm2211 = vcmp.eq.s32.totalorder %v273, %v2120
          %vm2212 = vcmp.eq.s32.totalorder %v273, %v2124
          %vm2213 = vcmp.eq.s32.totalorder %v274, %v2120
          %vm2214 = vcmp.eq.s32.totalorder %v274, %v2124
          %vm2215 = vcmp.eq.s32.totalorder %v275, %v2120
          %vm2216 = vcmp.eq.s32.totalorder %v275, %v2124
          %vm2217 = vcmp.eq.s32.totalorder %v276, %v2120
          %vm2218 = vcmp.eq.s32.totalorder %v276, %v2124
          %vm2219 = vcmp.eq.s32.totalorder %v277, %v2120
          %vm2220 = vcmp.eq.s32.totalorder %v277, %v2124
          %vm2221 = vcmp.eq.s32.totalorder %v278, %v2120
          %vm2222 = vcmp.eq.s32.totalorder %v278, %v2124
          %vm2223 = vcmp.eq.s32.totalorder %v279, %v2120
          %vm2224 = vcmp.eq.s32.totalorder %v279, %v2124
          %vm2225 = vcmp.eq.s32.totalorder %v280, %v2120
          %vm2226 = vcmp.eq.s32.totalorder %v280, %v2124
          %vm2227 = vcmp.eq.s32.totalorder %v281, %v2120
          %vm2228 = vcmp.eq.s32.totalorder %v281, %v2124
          %vm2229 = vcmp.eq.s32.totalorder %v282, %v2120
          %vm2230 = vcmp.eq.s32.totalorder %v282, %v2124
          %vm2231 = vcmp.eq.s32.totalorder %v283, %v2120
          %vm2232 = vcmp.eq.s32.totalorder %v283, %v2124
          %vm2233 = vcmp.eq.s32.totalorder %v284, %v2120
          %vm2234 = vcmp.eq.s32.totalorder %v284, %v2124
          %vm2235 = vcmp.eq.s32.totalorder %v285, %v2120
          %vm2236 = vcmp.eq.s32.totalorder %v285, %v2124
          %vm2237 = vcmp.eq.s32.totalorder %v286, %v2120
          %vm2238 = vcmp.eq.s32.totalorder %v286, %v2124
          %vm2239 = vcmp.eq.s32.totalorder %v287, %v2120
          %vm2240 = vcmp.eq.s32.totalorder %v287, %v2124
          %vm2241 = vcmp.eq.s32.totalorder %v288, %v2120
          %vm2242 = vcmp.eq.s32.totalorder %v288, %v2124
          %vm2243 = vcmp.eq.s32.totalorder %v289, %v2120
          %vm2244 = vcmp.eq.s32.totalorder %v289, %v2124
          %vm2245 = vcmp.eq.s32.totalorder %v290, %v2120
          %vm2246 = vcmp.eq.s32.totalorder %v290, %v2124
          %vm2247 = vcmp.eq.s32.totalorder %v291, %v2120
          %vm2248 = vcmp.eq.s32.totalorder %v291, %v2124
          %vm2249 = vcmp.eq.s32.totalorder %v292, %v2120
          %vm2250 = vcmp.eq.s32.totalorder %v292, %v2124
          %vm2251 = vcmp.eq.s32.totalorder %v293, %v2120
          %vm2252 = vcmp.eq.s32.totalorder %v293, %v2124
          %v2254 = vlaneseq
          %v2255 = vshrl.u32 %v2254, 7
          %v2256 = vsub.s32 0, %v2255
          %v2257 = vrot.slane %v2105, %v2256
          %v2258 = vlaneseq
          %v2259 = vshrl.u32 %v2258, 7
          %v2260 = vsub.s32 4, %v2259
          %v2261 = vrot.slane %v2105, %v2260
          %v2264 = vlaneseq
          %v2265 = vshrl.u32 %v2264, 7
          %v2266 = vsub.s32 0, %v2265
          %v2267 = vrot.slane %v2257, %v2266
          %v2268 = vlaneseq
          %v2269 = vshrl.u32 %v2268, 7
          %v2270 = vsub.s32 0, %v2269
          %v2271 = vrot.slane %v2261, %v2270
          %v2272 = vsel %vm2125, %v2267, 0.0
          %v2273 = vsel %vm2126, %v2271, 0.0
          %v2274 = vsel %vm2127, %v2267, 0.0
          %v2275 = vsel %vm2128, %v2271, 0.0
          %v2276 = vsel %vm2129, %v2267, 0.0
          %v2277 = vsel %vm2130, %v2271, 0.0
          %v2278 = vsel %vm2131, %v2267, 0.0
          %v2279 = vsel %vm2132, %v2271, 0.0
          %v2280 = vsel %vm2133, %v2267, 0.0
          %v2281 = vsel %vm2134, %v2271, 0.0
          %v2282 = vsel %vm2135, %v2267, 0.0
          %v2283 = vsel %vm2136, %v2271, 0.0
          %v2284 = vsel %vm2137, %v2267, 0.0
          %v2285 = vsel %vm2138, %v2271, 0.0
          %v2286 = vsel %vm2139, %v2267, 0.0
          %v2287 = vsel %vm2140, %v2271, 0.0
          %v2288 = vsel %vm2141, %v2267, 0.0
          %v2289 = vsel %vm2142, %v2271, 0.0
          %v2290 = vsel %vm2143, %v2267, 0.0
          %v2291 = vsel %vm2144, %v2271, 0.0
          %v2292 = vsel %vm2145, %v2267, 0.0
          %v2293 = vsel %vm2146, %v2271, 0.0
          %v2294 = vsel %vm2147, %v2267, 0.0
          %v2295 = vsel %vm2148, %v2271, 0.0
          %v2296 = vsel %vm2149, %v2267, 0.0
          %v2297 = vsel %vm2150, %v2271, 0.0
          %v2298 = vsel %vm2151, %v2267, 0.0
          %v2299 = vsel %vm2152, %v2271, 0.0
          %v2300 = vsel %vm2153, %v2267, 0.0
          %v2301 = vsel %vm2154, %v2271, 0.0
          %v2302 = vsel %vm2155, %v2267, 0.0
          %v2303 = vsel %vm2156, %v2271, 0.0
          %v2304 = vsel %vm2157, %v2267, 0.0
          %v2305 = vsel %vm2158, %v2271, 0.0
          %v2306 = vsel %vm2159, %v2267, 0.0
          %v2307 = vsel %vm2160, %v2271, 0.0
          %v2308 = vsel %vm2161, %v2267, 0.0
          %v2309 = vsel %vm2162, %v2271, 0.0
          %v2310 = vsel %vm2163, %v2267, 0.0
          %v2311 = vsel %vm2164, %v2271, 0.0
          %v2312 = vsel %vm2165, %v2267, 0.0
          %v2313 = vsel %vm2166, %v2271, 0.0
          %v2314 = vsel %vm2167, %v2267, 0.0
          %v2315 = vsel %vm2168, %v2271, 0.0
          %v2316 = vsel %vm2169, %v2267, 0.0
          %v2317 = vsel %vm2170, %v2271, 0.0
          %v2318 = vsel %vm2171, %v2267, 0.0
          %v2319 = vsel %vm2172, %v2271, 0.0
          %v2320 = vsel %vm2173, %v2267, 0.0
          %v2321 = vsel %vm2174, %v2271, 0.0
          %v2322 = vsel %vm2175, %v2267, 0.0
          %v2323 = vsel %vm2176, %v2271, 0.0
          %v2324 = vsel %vm2177, %v2267, 0.0
          %v2325 = vsel %vm2178, %v2271, 0.0
          %v2326 = vsel %vm2179, %v2267, 0.0
          %v2327 = vsel %vm2180, %v2271, 0.0
          %v2328 = vsel %vm2181, %v2267, 0.0
          %v2329 = vsel %vm2182, %v2271, 0.0
          %v2330 = vsel %vm2183, %v2267, 0.0
          %v2331 = vsel %vm2184, %v2271, 0.0
          %v2332 = vsel %vm2185, %v2267, 0.0
          %v2333 = vsel %vm2186, %v2271, 0.0
          %v2334 = vsel %vm2187, %v2267, 0.0
          %v2335 = vsel %vm2188, %v2271, 0.0
          %v2336 = vsel %vm2189, %v2267, 0.0
          %v2337 = vsel %vm2190, %v2271, 0.0
          %v2338 = vsel %vm2191, %v2267, 0.0
          %v2339 = vsel %vm2192, %v2271, 0.0
          %v2340 = vsel %vm2193, %v2267, 0.0
          %v2341 = vsel %vm2194, %v2271, 0.0
          %v2342 = vsel %vm2195, %v2267, 0.0
          %v2343 = vsel %vm2196, %v2271, 0.0
          %v2344 = vsel %vm2197, %v2267, 0.0
          %v2345 = vsel %vm2198, %v2271, 0.0
          %v2346 = vsel %vm2199, %v2267, 0.0
          %v2347 = vsel %vm2200, %v2271, 0.0
          %v2348 = vsel %vm2201, %v2267, 0.0
          %v2349 = vsel %vm2202, %v2271, 0.0
          %v2350 = vsel %vm2203, %v2267, 0.0
          %v2351 = vsel %vm2204, %v2271, 0.0
          %v2352 = vsel %vm2205, %v2267, 0.0
          %v2353 = vsel %vm2206, %v2271, 0.0
          %v2354 = vsel %vm2207, %v2267, 0.0
          %v2355 = vsel %vm2208, %v2271, 0.0
          %v2356 = vsel %vm2209, %v2267, 0.0
          %v2357 = vsel %vm2210, %v2271, 0.0
          %v2358 = vsel %vm2211, %v2267, 0.0
          %v2359 = vsel %vm2212, %v2271, 0.0
          %v2360 = vsel %vm2213, %v2267, 0.0
          %v2361 = vsel %vm2214, %v2271, 0.0
          %v2362 = vsel %vm2215, %v2267, 0.0
          %v2363 = vsel %vm2216, %v2271, 0.0
          %v2364 = vsel %vm2217, %v2267, 0.0
          %v2365 = vsel %vm2218, %v2271, 0.0
          %v2366 = vsel %vm2219, %v2267, 0.0
          %v2367 = vsel %vm2220, %v2271, 0.0
          %v2368 = vsel %vm2221, %v2267, 0.0
          %v2369 = vsel %vm2222, %v2271, 0.0
          %v2370 = vsel %vm2223, %v2267, 0.0
          %v2371 = vsel %vm2224, %v2271, 0.0
          %v2372 = vsel %vm2225, %v2267, 0.0
          %v2373 = vsel %vm2226, %v2271, 0.0
          %v2374 = vsel %vm2227, %v2267, 0.0
          %v2375 = vsel %vm2228, %v2271, 0.0
          %v2376 = vsel %vm2229, %v2267, 0.0
          %v2377 = vsel %vm2230, %v2271, 0.0
          %v2378 = vsel %vm2231, %v2267, 0.0
          %v2379 = vsel %vm2232, %v2271, 0.0
          %v2380 = vsel %vm2233, %v2267, 0.0
          %v2381 = vsel %vm2234, %v2271, 0.0
          %v2382 = vsel %vm2235, %v2267, 0.0
          %v2383 = vsel %vm2236, %v2271, 0.0
          %v2384 = vsel %vm2237, %v2267, 0.0
          %v2385 = vsel %vm2238, %v2271, 0.0
          %v2386 = vsel %vm2239, %v2267, 0.0
          %v2387 = vsel %vm2240, %v2271, 0.0
          %v2388 = vsel %vm2241, %v2267, 0.0
          %v2389 = vsel %vm2242, %v2271, 0.0
          %v2390 = vsel %vm2243, %v2267, 0.0
          %v2391 = vsel %vm2244, %v2271, 0.0
          %v2392 = vsel %vm2245, %v2267, 0.0
          %v2393 = vsel %vm2246, %v2271, 0.0
          %v2394 = vsel %vm2247, %v2267, 0.0
          %v2395 = vsel %vm2248, %v2271, 0.0
          %v2396 = vsel %vm2249, %v2267, 0.0
          %v2397 = vsel %vm2250, %v2271, 0.0
          %v2398 = vsel %vm2251, %v2267, 0.0
          %v2399 = vsel %vm2252, %v2271, 0.0
          %2400 = vmatprep.subr.mxu0 %v2273
          %2401 = vmatpush1.msra.mxu0 %v2272
          %2402 = vmatprep.subr.mxu0 %v2275
          %2403 = vmatpush1.msra.mxu0 %v2274
          %2404 = vmatprep.subr.mxu0 %v2277
          %2405 = vmatpush1.msra.mxu0 %v2276
          %2406 = vmatprep.subr.mxu0 %v2279
          %2407 = vmatpush1.msra.mxu0 %v2278
          %2408 = vmatprep.subr.mxu0 %v2281
          %2409 = vmatpush1.msra.mxu0 %v2280
          %2410 = vmatprep.subr.mxu0 %v2283
          %2411 = vmatpush1.msra.mxu0 %v2282
          %2412 = vmatprep.subr.mxu0 %v2285
          %2413 = vmatpush1.msra.mxu0 %v2284
          %2414 = vmatprep.subr.mxu0 %v2287
          %2415 = vmatpush1.msra.mxu0 %v2286
          %2416 = vmatprep.subr.mxu0 %v2289
          %2417 = vmatpush1.msra.mxu0 %v2288
          %2418 = vmatprep.subr.mxu0 %v2291
          %2419 = vmatpush1.msra.mxu0 %v2290
          %2420 = vmatprep.subr.mxu0 %v2293
          %2421 = vmatpush1.msra.mxu0 %v2292
          %2422 = vmatprep.subr.mxu0 %v2295
          %2423 = vmatpush1.msra.mxu0 %v2294
          %2424 = vmatprep.subr.mxu0 %v2297
          %2425 = vmatpush1.msra.mxu0 %v2296
          %2426 = vmatprep.subr.mxu0 %v2299
          %2427 = vmatpush1.msra.mxu0 %v2298
          %2428 = vmatprep.subr.mxu0 %v2301
          %2429 = vmatpush1.msra.mxu0 %v2300
          %2430 = vmatprep.subr.mxu0 %v2303
          %2431 = vmatpush1.msra.mxu0 %v2302
          %2432 = vmatprep.subr.mxu0 %v2305
          %2433 = vmatpush1.msra.mxu0 %v2304
          %2434 = vmatprep.subr.mxu0 %v2307
          %2435 = vmatpush1.msra.mxu0 %v2306
          %2436 = vmatprep.subr.mxu0 %v2309
          %2437 = vmatpush1.msra.mxu0 %v2308
          %2438 = vmatprep.subr.mxu0 %v2311
          %2439 = vmatpush1.msra.mxu0 %v2310
          %2440 = vmatprep.subr.mxu0 %v2313
          %2441 = vmatpush1.msra.mxu0 %v2312
          %2442 = vmatprep.subr.mxu0 %v2315
          %2443 = vmatpush1.msra.mxu0 %v2314
          %2444 = vmatprep.subr.mxu0 %v2317
          %2445 = vmatpush1.msra.mxu0 %v2316
          %2446 = vmatprep.subr.mxu0 %v2319
          %2447 = vmatpush1.msra.mxu0 %v2318
          %2448 = vmatprep.subr.mxu0 %v2321
          %2449 = vmatpush1.msra.mxu0 %v2320
          %2450 = vmatprep.subr.mxu0 %v2323
          %2451 = vmatpush1.msra.mxu0 %v2322
          %2452 = vmatprep.subr.mxu0 %v2325
          %2453 = vmatpush1.msra.mxu0 %v2324
          %2454 = vmatprep.subr.mxu0 %v2327
          %2455 = vmatpush1.msra.mxu0 %v2326
          %2456 = vmatprep.subr.mxu0 %v2329
          %2457 = vmatpush1.msra.mxu0 %v2328
          %2458 = vmatprep.subr.mxu0 %v2331
          %2459 = vmatpush1.msra.mxu0 %v2330
          %2460 = vmatprep.subr.mxu0 %v2333
          %2461 = vmatpush1.msra.mxu0 %v2332
          %2462 = vmatprep.subr.mxu0 %v2335
          %2463 = vmatpush1.msra.mxu0 %v2334
          %2464 = vmatprep.mubr.f32.mxu0 %v916
          %2465 = vmatmul.mubr.f32.gmra.mrb[0].mxu0 %v183
          %v2466 = vpop.f32.mrb[0].mxu0
          %v2467 = vadd.f32 0.0, %v2466
          %v2468 = vpop.f32.mrb[0].mxu0
          %v2469 = vadd.f32 0.0, %v2468
          %2470 = vdwg.mxu0
          %2471 = vmatprep.subr.mxu0 %v2337
          %2472 = vmatpush1.msra.mxu0 %v2336
          %2473 = vmatprep.subr.mxu0 %v2339
          %2474 = vmatpush1.msra.mxu0 %v2338
          %2475 = vmatprep.subr.mxu0 %v2341
          %2476 = vmatpush1.msra.mxu0 %v2340
          %2477 = vmatprep.subr.mxu0 %v2343
          %2478 = vmatpush1.msra.mxu0 %v2342
          %2479 = vmatprep.subr.mxu0 %v2345
          %2480 = vmatpush1.msra.mxu0 %v2344
          %2481 = vmatprep.subr.mxu0 %v2347
          %2482 = vmatpush1.msra.mxu0 %v2346
          %2483 = vmatprep.subr.mxu0 %v2349
          %2484 = vmatpush1.msra.mxu0 %v2348
          %2485 = vmatprep.subr.mxu0 %v2351
          %2486 = vmatpush1.msra.mxu0 %v2350
          %2487 = vmatprep.subr.mxu0 %v2353
          %2488 = vmatpush1.msra.mxu0 %v2352
          %2489 = vmatprep.subr.mxu0 %v2355
          %2490 = vmatpush1.msra.mxu0 %v2354
          %2491 = vmatprep.subr.mxu0 %v2357
          %2492 = vmatpush1.msra.mxu0 %v2356
          %2493 = vmatprep.subr.mxu0 %v2359
          %2494 = vmatpush1.msra.mxu0 %v2358
          %2495 = vmatprep.subr.mxu0 %v2361
          %2496 = vmatpush1.msra.mxu0 %v2360
          %2497 = vmatprep.subr.mxu0 %v2363
          %2498 = vmatpush1.msra.mxu0 %v2362
          %2499 = vmatprep.subr.mxu0 %v2365
          %2500 = vmatpush1.msra.mxu0 %v2364
          %2501 = vmatprep.subr.mxu0 %v2367
          %2502 = vmatpush1.msra.mxu0 %v2366
          %2503 = vmatprep.subr.mxu0 %v2369
          %2504 = vmatpush1.msra.mxu0 %v2368
          %2505 = vmatprep.subr.mxu0 %v2371
          %2506 = vmatpush1.msra.mxu0 %v2370
          %2507 = vmatprep.subr.mxu0 %v2373
          %2508 = vmatpush1.msra.mxu0 %v2372
          %2509 = vmatprep.subr.mxu0 %v2375
          %2510 = vmatpush1.msra.mxu0 %v2374
          %2511 = vmatprep.subr.mxu0 %v2377
          %2512 = vmatpush1.msra.mxu0 %v2376
          %2513 = vmatprep.subr.mxu0 %v2379
          %2514 = vmatpush1.msra.mxu0 %v2378
          %2515 = vmatprep.subr.mxu0 %v2381
          %2516 = vmatpush1.msra.mxu0 %v2380
          %2517 = vmatprep.subr.mxu0 %v2383
          %2518 = vmatpush1.msra.mxu0 %v2382
          %2519 = vmatprep.subr.mxu0 %v2385
          %2520 = vmatpush1.msra.mxu0 %v2384
          %2521 = vmatprep.subr.mxu0 %v2387
          %2522 = vmatpush1.msra.mxu0 %v2386
          %2523 = vmatprep.subr.mxu0 %v2389
          %2524 = vmatpush1.msra.mxu0 %v2388
          %2525 = vmatprep.subr.mxu0 %v2391
          %2526 = vmatpush1.msra.mxu0 %v2390
          %2527 = vmatprep.subr.mxu0 %v2393
          %2528 = vmatpush1.msra.mxu0 %v2392
          %2529 = vmatprep.subr.mxu0 %v2395
          %2530 = vmatpush1.msra.mxu0 %v2394
          %2531 = vmatprep.subr.mxu0 %v2397
          %2532 = vmatpush1.msra.mxu0 %v2396
          %2533 = vmatprep.subr.mxu0 %v2399
          %2534 = vmatpush1.msra.mxu0 %v2398
          %2535 = vmatprep.mubr.f32.mxu0 %v917
          %2536 = vmatmul.mubr.f32.gmra.mrb[0].mxu0 %v184
          %v2537 = vpop.f32.mrb[0].mxu0
          %v2538 = vadd.f32 %v2467, %v2537
          %v2539 = vpop.f32.mrb[0].mxu0
          %v2540 = vadd.f32 %v2469, %v2539
          %2541 = vdwg.mxu0
          %v2542 = vadd.f32 %v2095, %v2538
          %v2543 = vadd.f32 %v2096, %v2540
          %vm2544 = vmand %vm617, %vm2099
          %vm2545 = vmand %vm2544, %vm2103
          %v2546 = vsel %vm2545, %v226, 0.0
          %v2547 = vadd.s32 %v2107, %v621
          %v2548 = vlaneseq
          %v2549 = vshrl.u32 %v2548, 7
          %v2550 = vsub.s32 2, %v2549
          %v2551 = vrot.slane %v2547, %v2550
          %v2552 = vlaneseq
          %v2553 = vshrl.u32 %v2552, 7
          %v2554 = vsub.s32 6, %v2553
          %v2555 = vrot.slane %v2547, %v2554
          %v2556 = vlaneseq
          %v2557 = vshrl.u32 %v2556, 7
          %v2558 = vsub.s32 2, %v2557
          %v2559 = vrot.slane %v2551, %v2558
          %v2560 = vlaneseq
          %v2561 = vshrl.u32 %v2560, 7
          %v2562 = vsub.s32 2, %v2561
          %v2563 = vrot.slane %v2555, %v2562
          %vm2564 = vcmp.eq.s32.totalorder %v230, %v2559
          %vm2565 = vcmp.eq.s32.totalorder %v230, %v2563
          %vm2566 = vcmp.eq.s32.totalorder %v231, %v2559
          %vm2567 = vcmp.eq.s32.totalorder %v231, %v2563
          %vm2568 = vcmp.eq.s32.totalorder %v232, %v2559
          %vm2569 = vcmp.eq.s32.totalorder %v232, %v2563
          %vm2570 = vcmp.eq.s32.totalorder %v233, %v2559
          %vm2571 = vcmp.eq.s32.totalorder %v233, %v2563
          %vm2572 = vcmp.eq.s32.totalorder %v234, %v2559
          %vm2573 = vcmp.eq.s32.totalorder %v234, %v2563
          %vm2574 = vcmp.eq.s32.totalorder %v235, %v2559
          %vm2575 = vcmp.eq.s32.totalorder %v235, %v2563
          %vm2576 = vcmp.eq.s32.totalorder %v236, %v2559
          %vm2577 = vcmp.eq.s32.totalorder %v236, %v2563
          %vm2578 = vcmp.eq.s32.totalorder %v237, %v2559
          %vm2579 = vcmp.eq.s32.totalorder %v237, %v2563
          %vm2580 = vcmp.eq.s32.totalorder %v238, %v2559
          %vm2581 = vcmp.eq.s32.totalorder %v238, %v2563
          %vm2582 = vcmp.eq.s32.totalorder %v239, %v2559
          %vm2583 = vcmp.eq.s32.totalorder %v239, %v2563
          %vm2584 = vcmp.eq.s32.totalorder %v240, %v2559
          %vm2585 = vcmp.eq.s32.totalorder %v240, %v2563
          %vm2586 = vcmp.eq.s32.totalorder %v241, %v2559
          %vm2587 = vcmp.eq.s32.totalorder %v241, %v2563
          %vm2588 = vcmp.eq.s32.totalorder %v242, %v2559
          %vm2589 = vcmp.eq.s32.totalorder %v242, %v2563
          %vm2590 = vcmp.eq.s32.totalorder %v243, %v2559
          %vm2591 = vcmp.eq.s32.totalorder %v243, %v2563
          %vm2592 = vcmp.eq.s32.totalorder %v244, %v2559
          %vm2593 = vcmp.eq.s32.totalorder %v244, %v2563
          %vm2594 = vcmp.eq.s32.totalorder %v245, %v2559
          %vm2595 = vcmp.eq.s32.totalorder %v245, %v2563
          %vm2596 = vcmp.eq.s32.totalorder %v246, %v2559
          %vm2597 = vcmp.eq.s32.totalorder %v246, %v2563
          %vm2598 = vcmp.eq.s32.totalorder %v247, %v2559
          %vm2599 = vcmp.eq.s32.totalorder %v247, %v2563
          %vm2600 = vcmp.eq.s32.totalorder %v248, %v2559
          %vm2601 = vcmp.eq.s32.totalorder %v248, %v2563
          %vm2602 = vcmp.eq.s32.totalorder %v249, %v2559
          %vm2603 = vcmp.eq.s32.totalorder %v249, %v2563
          %vm2604 = vcmp.eq.s32.totalorder %v250, %v2559
          %vm2605 = vcmp.eq.s32.totalorder %v250, %v2563
          %vm2606 = vcmp.eq.s32.totalorder %v251, %v2559
          %vm2607 = vcmp.eq.s32.totalorder %v251, %v2563
          %vm2608 = vcmp.eq.s32.totalorder %v252, %v2559
          %vm2609 = vcmp.eq.s32.totalorder %v252, %v2563
          %vm2610 = vcmp.eq.s32.totalorder %v253, %v2559
          %vm2611 = vcmp.eq.s32.totalorder %v253, %v2563
          %vm2612 = vcmp.eq.s32.totalorder %v254, %v2559
          %vm2613 = vcmp.eq.s32.totalorder %v254, %v2563
          %vm2614 = vcmp.eq.s32.totalorder %v255, %v2559
          %vm2615 = vcmp.eq.s32.totalorder %v255, %v2563
          %vm2616 = vcmp.eq.s32.totalorder %v256, %v2559
          %vm2617 = vcmp.eq.s32.totalorder %v256, %v2563
          %vm2618 = vcmp.eq.s32.totalorder %v257, %v2559
          %vm2619 = vcmp.eq.s32.totalorder %v257, %v2563
          %vm2620 = vcmp.eq.s32.totalorder %v258, %v2559
          %vm2621 = vcmp.eq.s32.totalorder %v258, %v2563
          %vm2622 = vcmp.eq.s32.totalorder %v259, %v2559
          %vm2623 = vcmp.eq.s32.totalorder %v259, %v2563
          %vm2624 = vcmp.eq.s32.totalorder %v260, %v2559
          %vm2625 = vcmp.eq.s32.totalorder %v260, %v2563
          %vm2626 = vcmp.eq.s32.totalorder %v261, %v2559
          %vm2627 = vcmp.eq.s32.totalorder %v261, %v2563
          %vm2628 = vcmp.eq.s32.totalorder %v262, %v2559
          %vm2629 = vcmp.eq.s32.totalorder %v262, %v2563
          %vm2630 = vcmp.eq.s32.totalorder %v263, %v2559
          %vm2631 = vcmp.eq.s32.totalorder %v263, %v2563
          %vm2632 = vcmp.eq.s32.totalorder %v264, %v2559
          %vm2633 = vcmp.eq.s32.totalorder %v264, %v2563
          %vm2634 = vcmp.eq.s32.totalorder %v265, %v2559
          %vm2635 = vcmp.eq.s32.totalorder %v265, %v2563
          %vm2636 = vcmp.eq.s32.totalorder %v266, %v2559
          %vm2637 = vcmp.eq.s32.totalorder %v266, %v2563
          %vm2638 = vcmp.eq.s32.totalorder %v267, %v2559
          %vm2639 = vcmp.eq.s32.totalorder %v267, %v2563
          %vm2640 = vcmp.eq.s32.totalorder %v268, %v2559
          %vm2641 = vcmp.eq.s32.totalorder %v268, %v2563
          %vm2642 = vcmp.eq.s32.totalorder %v269, %v2559
          %vm2643 = vcmp.eq.s32.totalorder %v269, %v2563
          %vm2644 = vcmp.eq.s32.totalorder %v270, %v2559
          %vm2645 = vcmp.eq.s32.totalorder %v270, %v2563
          %vm2646 = vcmp.eq.s32.totalorder %v271, %v2559
          %vm2647 = vcmp.eq.s32.totalorder %v271, %v2563
          %vm2648 = vcmp.eq.s32.totalorder %v272, %v2559
          %vm2649 = vcmp.eq.s32.totalorder %v272, %v2563
          %vm2650 = vcmp.eq.s32.totalorder %v273, %v2559
          %vm2651 = vcmp.eq.s32.totalorder %v273, %v2563
          %vm2652 = vcmp.eq.s32.totalorder %v274, %v2559
          %vm2653 = vcmp.eq.s32.totalorder %v274, %v2563
          %vm2654 = vcmp.eq.s32.totalorder %v275, %v2559
          %vm2655 = vcmp.eq.s32.totalorder %v275, %v2563
          %vm2656 = vcmp.eq.s32.totalorder %v276, %v2559
          %vm2657 = vcmp.eq.s32.totalorder %v276, %v2563
          %vm2658 = vcmp.eq.s32.totalorder %v277, %v2559
          %vm2659 = vcmp.eq.s32.totalorder %v277, %v2563
          %vm2660 = vcmp.eq.s32.totalorder %v278, %v2559
          %vm2661 = vcmp.eq.s32.totalorder %v278, %v2563
          %vm2662 = vcmp.eq.s32.totalorder %v279, %v2559
          %vm2663 = vcmp.eq.s32.totalorder %v279, %v2563
          %vm2664 = vcmp.eq.s32.totalorder %v280, %v2559
          %vm2665 = vcmp.eq.s32.totalorder %v280, %v2563
          %vm2666 = vcmp.eq.s32.totalorder %v281, %v2559
          %vm2667 = vcmp.eq.s32.totalorder %v281, %v2563
          %vm2668 = vcmp.eq.s32.totalorder %v282, %v2559
          %vm2669 = vcmp.eq.s32.totalorder %v282, %v2563
          %vm2670 = vcmp.eq.s32.totalorder %v283, %v2559
          %vm2671 = vcmp.eq.s32.totalorder %v283, %v2563
          %vm2672 = vcmp.eq.s32.totalorder %v284, %v2559
          %vm2673 = vcmp.eq.s32.totalorder %v284, %v2563
          %vm2674 = vcmp.eq.s32.totalorder %v285, %v2559
          %vm2675 = vcmp.eq.s32.totalorder %v285, %v2563
          %vm2676 = vcmp.eq.s32.totalorder %v286, %v2559
          %vm2677 = vcmp.eq.s32.totalorder %v286, %v2563
          %vm2678 = vcmp.eq.s32.totalorder %v287, %v2559
          %vm2679 = vcmp.eq.s32.totalorder %v287, %v2563
          %vm2680 = vcmp.eq.s32.totalorder %v288, %v2559
          %vm2681 = vcmp.eq.s32.totalorder %v288, %v2563
          %vm2682 = vcmp.eq.s32.totalorder %v289, %v2559
          %vm2683 = vcmp.eq.s32.totalorder %v289, %v2563
          %vm2684 = vcmp.eq.s32.totalorder %v290, %v2559
          %vm2685 = vcmp.eq.s32.totalorder %v290, %v2563
          %vm2686 = vcmp.eq.s32.totalorder %v291, %v2559
          %vm2687 = vcmp.eq.s32.totalorder %v291, %v2563
          %vm2688 = vcmp.eq.s32.totalorder %v292, %v2559
          %vm2689 = vcmp.eq.s32.totalorder %v292, %v2563
          %vm2690 = vcmp.eq.s32.totalorder %v293, %v2559
          %vm2691 = vcmp.eq.s32.totalorder %v293, %v2563
          %v2693 = vlaneseq
          %v2694 = vshrl.u32 %v2693, 7
          %v2695 = vsub.s32 0, %v2694
          %v2696 = vrot.slane %v2546, %v2695
          %v2697 = vlaneseq
          %v2698 = vshrl.u32 %v2697, 7
          %v2699 = vsub.s32 4, %v2698
          %v2700 = vrot.slane %v2546, %v2699
          %v2703 = vlaneseq
          %v2704 = vshrl.u32 %v2703, 7
          %v2705 = vsub.s32 0, %v2704
          %v2706 = vrot.slane %v2696, %v2705
          %v2707 = vlaneseq
          %v2708 = vshrl.u32 %v2707, 7
          %v2709 = vsub.s32 0, %v2708
          %v2710 = vrot.slane %v2700, %v2709
          %v2711 = vsel %vm2564, %v2706, 0.0
          %v2712 = vsel %vm2565, %v2710, 0.0
          %v2713 = vsel %vm2566, %v2706, 0.0
          %v2714 = vsel %vm2567, %v2710, 0.0
          %v2715 = vsel %vm2568, %v2706, 0.0
          %v2716 = vsel %vm2569, %v2710, 0.0
          %v2717 = vsel %vm2570, %v2706, 0.0
          %v2718 = vsel %vm2571, %v2710, 0.0
          %v2719 = vsel %vm2572, %v2706, 0.0
          %v2720 = vsel %vm2573, %v2710, 0.0
          %v2721 = vsel %vm2574, %v2706, 0.0
          %v2722 = vsel %vm2575, %v2710, 0.0
          %v2723 = vsel %vm2576, %v2706, 0.0
          %v2724 = vsel %vm2577, %v2710, 0.0
          %v2725 = vsel %vm2578, %v2706, 0.0
          %v2726 = vsel %vm2579, %v2710, 0.0
          %v2727 = vsel %vm2580, %v2706, 0.0
          %v2728 = vsel %vm2581, %v2710, 0.0
          %v2729 = vsel %vm2582, %v2706, 0.0
          %v2730 = vsel %vm2583, %v2710, 0.0
          %v2731 = vsel %vm2584, %v2706, 0.0
          %v2732 = vsel %vm2585, %v2710, 0.0
          %v2733 = vsel %vm2586, %v2706, 0.0
          %v2734 = vsel %vm2587, %v2710, 0.0
          %v2735 = vsel %vm2588, %v2706, 0.0
          %v2736 = vsel %vm2589, %v2710, 0.0
          %v2737 = vsel %vm2590, %v2706, 0.0
          %v2738 = vsel %vm2591, %v2710, 0.0
          %v2739 = vsel %vm2592, %v2706, 0.0
          %v2740 = vsel %vm2593, %v2710, 0.0
          %v2741 = vsel %vm2594, %v2706, 0.0
          %v2742 = vsel %vm2595, %v2710, 0.0
          %v2743 = vsel %vm2596, %v2706, 0.0
          %v2744 = vsel %vm2597, %v2710, 0.0
          %v2745 = vsel %vm2598, %v2706, 0.0
          %v2746 = vsel %vm2599, %v2710, 0.0
          %v2747 = vsel %vm2600, %v2706, 0.0
          %v2748 = vsel %vm2601, %v2710, 0.0
          %v2749 = vsel %vm2602, %v2706, 0.0
          %v2750 = vsel %vm2603, %v2710, 0.0
          %v2751 = vsel %vm2604, %v2706, 0.0
          %v2752 = vsel %vm2605, %v2710, 0.0
          %v2753 = vsel %vm2606, %v2706, 0.0
          %v2754 = vsel %vm2607, %v2710, 0.0
          %v2755 = vsel %vm2608, %v2706, 0.0
          %v2756 = vsel %vm2609, %v2710, 0.0
          %v2757 = vsel %vm2610, %v2706, 0.0
          %v2758 = vsel %vm2611, %v2710, 0.0
          %v2759 = vsel %vm2612, %v2706, 0.0
          %v2760 = vsel %vm2613, %v2710, 0.0
          %v2761 = vsel %vm2614, %v2706, 0.0
          %v2762 = vsel %vm2615, %v2710, 0.0
          %v2763 = vsel %vm2616, %v2706, 0.0
          %v2764 = vsel %vm2617, %v2710, 0.0
          %v2765 = vsel %vm2618, %v2706, 0.0
          %v2766 = vsel %vm2619, %v2710, 0.0
          %v2767 = vsel %vm2620, %v2706, 0.0
          %v2768 = vsel %vm2621, %v2710, 0.0
          %v2769 = vsel %vm2622, %v2706, 0.0
          %v2770 = vsel %vm2623, %v2710, 0.0
          %v2771 = vsel %vm2624, %v2706, 0.0
          %v2772 = vsel %vm2625, %v2710, 0.0
          %v2773 = vsel %vm2626, %v2706, 0.0
          %v2774 = vsel %vm2627, %v2710, 0.0
          %v2775 = vsel %vm2628, %v2706, 0.0
          %v2776 = vsel %vm2629, %v2710, 0.0
          %v2777 = vsel %vm2630, %v2706, 0.0
          %v2778 = vsel %vm2631, %v2710, 0.0
          %v2779 = vsel %vm2632, %v2706, 0.0
          %v2780 = vsel %vm2633, %v2710, 0.0
          %v2781 = vsel %vm2634, %v2706, 0.0
          %v2782 = vsel %vm2635, %v2710, 0.0
          %v2783 = vsel %vm2636, %v2706, 0.0
          %v2784 = vsel %vm2637, %v2710, 0.0
          %v2785 = vsel %vm2638, %v2706, 0.0
          %v2786 = vsel %vm2639, %v2710, 0.0
          %v2787 = vsel %vm2640, %v2706, 0.0
          %v2788 = vsel %vm2641, %v2710, 0.0
          %v2789 = vsel %vm2642, %v2706, 0.0
          %v2790 = vsel %vm2643, %v2710, 0.0
          %v2791 = vsel %vm2644, %v2706, 0.0
          %v2792 = vsel %vm2645, %v2710, 0.0
          %v2793 = vsel %vm2646, %v2706, 0.0
          %v2794 = vsel %vm2647, %v2710, 0.0
          %v2795 = vsel %vm2648, %v2706, 0.0
          %v2796 = vsel %vm2649, %v2710, 0.0
          %v2797 = vsel %vm2650, %v2706, 0.0
          %v2798 = vsel %vm2651, %v2710, 0.0
          %v2799 = vsel %vm2652, %v2706, 0.0
          %v2800 = vsel %vm2653, %v2710, 0.0
          %v2801 = vsel %vm2654, %v2706, 0.0
          %v2802 = vsel %vm2655, %v2710, 0.0
          %v2803 = vsel %vm2656, %v2706, 0.0
          %v2804 = vsel %vm2657, %v2710, 0.0
          %v2805 = vsel %vm2658, %v2706, 0.0
          %v2806 = vsel %vm2659, %v2710, 0.0
          %v2807 = vsel %vm2660, %v2706, 0.0
          %v2808 = vsel %vm2661, %v2710, 0.0
          %v2809 = vsel %vm2662, %v2706, 0.0
          %v2810 = vsel %vm2663, %v2710, 0.0
          %v2811 = vsel %vm2664, %v2706, 0.0
          %v2812 = vsel %vm2665, %v2710, 0.0
          %v2813 = vsel %vm2666, %v2706, 0.0
          %v2814 = vsel %vm2667, %v2710, 0.0
          %v2815 = vsel %vm2668, %v2706, 0.0
          %v2816 = vsel %vm2669, %v2710, 0.0
          %v2817 = vsel %vm2670, %v2706, 0.0
          %v2818 = vsel %vm2671, %v2710, 0.0
          %v2819 = vsel %vm2672, %v2706, 0.0
          %v2820 = vsel %vm2673, %v2710, 0.0
          %v2821 = vsel %vm2674, %v2706, 0.0
          %v2822 = vsel %vm2675, %v2710, 0.0
          %v2823 = vsel %vm2676, %v2706, 0.0
          %v2824 = vsel %vm2677, %v2710, 0.0
          %v2825 = vsel %vm2678, %v2706, 0.0
          %v2826 = vsel %vm2679, %v2710, 0.0
          %v2827 = vsel %vm2680, %v2706, 0.0
          %v2828 = vsel %vm2681, %v2710, 0.0
          %v2829 = vsel %vm2682, %v2706, 0.0
          %v2830 = vsel %vm2683, %v2710, 0.0
          %v2831 = vsel %vm2684, %v2706, 0.0
          %v2832 = vsel %vm2685, %v2710, 0.0
          %v2833 = vsel %vm2686, %v2706, 0.0
          %v2834 = vsel %vm2687, %v2710, 0.0
          %v2835 = vsel %vm2688, %v2706, 0.0
          %v2836 = vsel %vm2689, %v2710, 0.0
          %v2837 = vsel %vm2690, %v2706, 0.0
          %v2838 = vsel %vm2691, %v2710, 0.0
          %2839 = vmatprep.subr.mxu0 %v2712
          %2840 = vmatpush1.msra.mxu0 %v2711
          %2841 = vmatprep.subr.mxu0 %v2714
          %2842 = vmatpush1.msra.mxu0 %v2713
          %2843 = vmatprep.subr.mxu0 %v2716
          %2844 = vmatpush1.msra.mxu0 %v2715
          %2845 = vmatprep.subr.mxu0 %v2718
          %2846 = vmatpush1.msra.mxu0 %v2717
          %2847 = vmatprep.subr.mxu0 %v2720
          %2848 = vmatpush1.msra.mxu0 %v2719
          %2849 = vmatprep.subr.mxu0 %v2722
          %2850 = vmatpush1.msra.mxu0 %v2721
          %2851 = vmatprep.subr.mxu0 %v2724
          %2852 = vmatpush1.msra.mxu0 %v2723
          %2853 = vmatprep.subr.mxu0 %v2726
          %2854 = vmatpush1.msra.mxu0 %v2725
          %2855 = vmatprep.subr.mxu0 %v2728
          %2856 = vmatpush1.msra.mxu0 %v2727
          %2857 = vmatprep.subr.mxu0 %v2730
          %2858 = vmatpush1.msra.mxu0 %v2729
          %2859 = vmatprep.subr.mxu0 %v2732
          %2860 = vmatpush1.msra.mxu0 %v2731
          %2861 = vmatprep.subr.mxu0 %v2734
          %2862 = vmatpush1.msra.mxu0 %v2733
          %2863 = vmatprep.subr.mxu0 %v2736
          %2864 = vmatpush1.msra.mxu0 %v2735
          %2865 = vmatprep.subr.mxu0 %v2738
          %2866 = vmatpush1.msra.mxu0 %v2737
          %2867 = vmatprep.subr.mxu0 %v2740
          %2868 = vmatpush1.msra.mxu0 %v2739
          %2869 = vmatprep.subr.mxu0 %v2742
          %2870 = vmatpush1.msra.mxu0 %v2741
          %2871 = vmatprep.subr.mxu0 %v2744
          %2872 = vmatpush1.msra.mxu0 %v2743
          %2873 = vmatprep.subr.mxu0 %v2746
          %2874 = vmatpush1.msra.mxu0 %v2745
          %2875 = vmatprep.subr.mxu0 %v2748
          %2876 = vmatpush1.msra.mxu0 %v2747
          %2877 = vmatprep.subr.mxu0 %v2750
          %2878 = vmatpush1.msra.mxu0 %v2749
          %2879 = vmatprep.subr.mxu0 %v2752
          %2880 = vmatpush1.msra.mxu0 %v2751
          %2881 = vmatprep.subr.mxu0 %v2754
          %2882 = vmatpush1.msra.mxu0 %v2753
          %2883 = vmatprep.subr.mxu0 %v2756
          %2884 = vmatpush1.msra.mxu0 %v2755
          %2885 = vmatprep.subr.mxu0 %v2758
          %2886 = vmatpush1.msra.mxu0 %v2757
          %2887 = vmatprep.subr.mxu0 %v2760
          %2888 = vmatpush1.msra.mxu0 %v2759
          %2889 = vmatprep.subr.mxu0 %v2762
          %2890 = vmatpush1.msra.mxu0 %v2761
          %2891 = vmatprep.subr.mxu0 %v2764
          %2892 = vmatpush1.msra.mxu0 %v2763
          %2893 = vmatprep.subr.mxu0 %v2766
          %2894 = vmatpush1.msra.mxu0 %v2765
          %2895 = vmatprep.subr.mxu0 %v2768
          %2896 = vmatpush1.msra.mxu0 %v2767
          %2897 = vmatprep.subr.mxu0 %v2770
          %2898 = vmatpush1.msra.mxu0 %v2769
          %2899 = vmatprep.subr.mxu0 %v2772
          %2900 = vmatpush1.msra.mxu0 %v2771
          %2901 = vmatprep.subr.mxu0 %v2774
          %2902 = vmatpush1.msra.mxu0 %v2773
          %2903 = vmatprep.mubr.f32.mxu0 %v916
          %2904 = vmatmul.mubr.f32.gmra.mrb[0].mxu0 %v183
          %v2905 = vpop.f32.mrb[0].mxu0
          %v2906 = vadd.f32 0.0, %v2905
          %v2907 = vpop.f32.mrb[0].mxu0
          %v2908 = vadd.f32 0.0, %v2907
          %2909 = vdwg.mxu0
          %2910 = vmatprep.subr.mxu0 %v2776
          %2911 = vmatpush1.msra.mxu0 %v2775
          %2912 = vmatprep.subr.mxu0 %v2778
          %2913 = vmatpush1.msra.mxu0 %v2777
          %2914 = vmatprep.subr.mxu0 %v2780
          %2915 = vmatpush1.msra.mxu0 %v2779
          %2916 = vmatprep.subr.mxu0 %v2782
          %2917 = vmatpush1.msra.mxu0 %v2781
          %2918 = vmatprep.subr.mxu0 %v2784
          %2919 = vmatpush1.msra.mxu0 %v2783
          %2920 = vmatprep.subr.mxu0 %v2786
          %2921 = vmatpush1.msra.mxu0 %v2785
          %2922 = vmatprep.subr.mxu0 %v2788
          %2923 = vmatpush1.msra.mxu0 %v2787
          %2924 = vmatprep.subr.mxu0 %v2790
          %2925 = vmatpush1.msra.mxu0 %v2789
          %2926 = vmatprep.subr.mxu0 %v2792
          %2927 = vmatpush1.msra.mxu0 %v2791
          %2928 = vmatprep.subr.mxu0 %v2794
          %2929 = vmatpush1.msra.mxu0 %v2793
          %2930 = vmatprep.subr.mxu0 %v2796
          %2931 = vmatpush1.msra.mxu0 %v2795
          %2932 = vmatprep.subr.mxu0 %v2798
          %2933 = vmatpush1.msra.mxu0 %v2797
          %2934 = vmatprep.subr.mxu0 %v2800
          %2935 = vmatpush1.msra.mxu0 %v2799
          %2936 = vmatprep.subr.mxu0 %v2802
          %2937 = vmatpush1.msra.mxu0 %v2801
          %2938 = vmatprep.subr.mxu0 %v2804
          %2939 = vmatpush1.msra.mxu0 %v2803
          %2940 = vmatprep.subr.mxu0 %v2806
          %2941 = vmatpush1.msra.mxu0 %v2805
          %2942 = vmatprep.subr.mxu0 %v2808
          %2943 = vmatpush1.msra.mxu0 %v2807
          %2944 = vmatprep.subr.mxu0 %v2810
          %2945 = vmatpush1.msra.mxu0 %v2809
          %2946 = vmatprep.subr.mxu0 %v2812
          %2947 = vmatpush1.msra.mxu0 %v2811
          %2948 = vmatprep.subr.mxu0 %v2814
          %2949 = vmatpush1.msra.mxu0 %v2813
          %2950 = vmatprep.subr.mxu0 %v2816
          %2951 = vmatpush1.msra.mxu0 %v2815
          %2952 = vmatprep.subr.mxu0 %v2818
          %2953 = vmatpush1.msra.mxu0 %v2817
          %2954 = vmatprep.subr.mxu0 %v2820
          %2955 = vmatpush1.msra.mxu0 %v2819
          %2956 = vmatprep.subr.mxu0 %v2822
          %2957 = vmatpush1.msra.mxu0 %v2821
          %2958 = vmatprep.subr.mxu0 %v2824
          %2959 = vmatpush1.msra.mxu0 %v2823
          %2960 = vmatprep.subr.mxu0 %v2826
          %2961 = vmatpush1.msra.mxu0 %v2825
          %2962 = vmatprep.subr.mxu0 %v2828
          %2963 = vmatpush1.msra.mxu0 %v2827
          %2964 = vmatprep.subr.mxu0 %v2830
          %2965 = vmatpush1.msra.mxu0 %v2829
          %2966 = vmatprep.subr.mxu0 %v2832
          %2967 = vmatpush1.msra.mxu0 %v2831
          %2968 = vmatprep.subr.mxu0 %v2834
          %2969 = vmatpush1.msra.mxu0 %v2833
          %2970 = vmatprep.subr.mxu0 %v2836
          %2971 = vmatpush1.msra.mxu0 %v2835
          %2972 = vmatprep.subr.mxu0 %v2838
          %2973 = vmatpush1.msra.mxu0 %v2837
          %2974 = vmatprep.mubr.f32.mxu0 %v917
          %2975 = vmatmul.mubr.f32.gmra.mrb[0].mxu0 %v184
          %v2976 = vpop.f32.mrb[0].mxu0
          %v2977 = vadd.f32 %v2906, %v2976
          %v2978 = vpop.f32.mrb[0].mxu0
          %v2979 = vadd.f32 %v2908, %v2978
          %2980 = vdwg.mxu0
          %v2981 = vadd.f32 %v2542, %v2977
          %v2982 = vadd.f32 %v2543, %v2979
          %vm2983 = vmand %vm1213, %vm2099
          %vm2984 = vmand %vm2983, %vm2103
          %v2985 = vsel %vm2984, %v227, 0.0
          %v2986 = vadd.s32 %v2106, %v1218
          %v2987 = vadd.s32 %v2986, %v320
          %v2988 = vlaneseq
          %v2989 = vshrl.u32 %v2988, 7
          %v2990 = vsub.s32 2, %v2989
          %v2991 = vrot.slane %v2987, %v2990
          %v2992 = vlaneseq
          %v2993 = vshrl.u32 %v2992, 7
          %v2994 = vsub.s32 6, %v2993
          %v2995 = vrot.slane %v2987, %v2994
          %v2996 = vlaneseq
          %v2997 = vshrl.u32 %v2996, 7
          %v2998 = vsub.s32 2, %v2997
          %v2999 = vrot.slane %v2991, %v2998
          %v3000 = vlaneseq
          %v3001 = vshrl.u32 %v3000, 7
          %v3002 = vsub.s32 2, %v3001
          %v3003 = vrot.slane %v2995, %v3002
          %vm3004 = vcmp.eq.s32.totalorder %v230, %v2999
          %vm3005 = vcmp.eq.s32.totalorder %v230, %v3003
          %vm3006 = vcmp.eq.s32.totalorder %v231, %v2999
          %vm3007 = vcmp.eq.s32.totalorder %v231, %v3003
          %vm3008 = vcmp.eq.s32.totalorder %v232, %v2999
          %vm3009 = vcmp.eq.s32.totalorder %v232, %v3003
          %vm3010 = vcmp.eq.s32.totalorder %v233, %v2999
          %vm3011 = vcmp.eq.s32.totalorder %v233, %v3003
          %vm3012 = vcmp.eq.s32.totalorder %v234, %v2999
          %vm3013 = vcmp.eq.s32.totalorder %v234, %v3003
          %vm3014 = vcmp.eq.s32.totalorder %v235, %v2999
          %vm3015 = vcmp.eq.s32.totalorder %v235, %v3003
          %vm3016 = vcmp.eq.s32.totalorder %v236, %v2999
          %vm3017 = vcmp.eq.s32.totalorder %v236, %v3003
          %vm3018 = vcmp.eq.s32.totalorder %v237, %v2999
          %vm3019 = vcmp.eq.s32.totalorder %v237, %v3003
          %vm3020 = vcmp.eq.s32.totalorder %v238, %v2999
          %vm3021 = vcmp.eq.s32.totalorder %v238, %v3003
          %vm3022 = vcmp.eq.s32.totalorder %v239, %v2999
          %vm3023 = vcmp.eq.s32.totalorder %v239, %v3003
          %vm3024 = vcmp.eq.s32.totalorder %v240, %v2999
          %vm3025 = vcmp.eq.s32.totalorder %v240, %v3003
          %vm3026 = vcmp.eq.s32.totalorder %v241, %v2999
          %vm3027 = vcmp.eq.s32.totalorder %v241, %v3003
          %vm3028 = vcmp.eq.s32.totalorder %v242, %v2999
          %vm3029 = vcmp.eq.s32.totalorder %v242, %v3003
          %vm3030 = vcmp.eq.s32.totalorder %v243, %v2999
          %vm3031 = vcmp.eq.s32.totalorder %v243, %v3003
          %vm3032 = vcmp.eq.s32.totalorder %v244, %v2999
          %vm3033 = vcmp.eq.s32.totalorder %v244, %v3003
          %vm3034 = vcmp.eq.s32.totalorder %v245, %v2999
          %vm3035 = vcmp.eq.s32.totalorder %v245, %v3003
          %vm3036 = vcmp.eq.s32.totalorder %v246, %v2999
          %vm3037 = vcmp.eq.s32.totalorder %v246, %v3003
          %vm3038 = vcmp.eq.s32.totalorder %v247, %v2999
          %vm3039 = vcmp.eq.s32.totalorder %v247, %v3003
          %vm3040 = vcmp.eq.s32.totalorder %v248, %v2999
          %vm3041 = vcmp.eq.s32.totalorder %v248, %v3003
          %vm3042 = vcmp.eq.s32.totalorder %v249, %v2999
          %vm3043 = vcmp.eq.s32.totalorder %v249, %v3003
          %vm3044 = vcmp.eq.s32.totalorder %v250, %v2999
          %vm3045 = vcmp.eq.s32.totalorder %v250, %v3003
          %vm3046 = vcmp.eq.s32.totalorder %v251, %v2999
          %vm3047 = vcmp.eq.s32.totalorder %v251, %v3003
          %vm3048 = vcmp.eq.s32.totalorder %v252, %v2999
          %vm3049 = vcmp.eq.s32.totalorder %v252, %v3003
          %vm3050 = vcmp.eq.s32.totalorder %v253, %v2999
          %vm3051 = vcmp.eq.s32.totalorder %v253, %v3003
          %vm3052 = vcmp.eq.s32.totalorder %v254, %v2999
          %vm3053 = vcmp.eq.s32.totalorder %v254, %v3003
          %vm3054 = vcmp.eq.s32.totalorder %v255, %v2999
          %vm3055 = vcmp.eq.s32.totalorder %v255, %v3003
          %vm3056 = vcmp.eq.s32.totalorder %v256, %v2999
          %vm3057 = vcmp.eq.s32.totalorder %v256, %v3003
          %vm3058 = vcmp.eq.s32.totalorder %v257, %v2999
          %vm3059 = vcmp.eq.s32.totalorder %v257, %v3003
          %vm3060 = vcmp.eq.s32.totalorder %v258, %v2999
          %vm3061 = vcmp.eq.s32.totalorder %v258, %v3003
          %vm3062 = vcmp.eq.s32.totalorder %v259, %v2999
          %vm3063 = vcmp.eq.s32.totalorder %v259, %v3003
          %vm3064 = vcmp.eq.s32.totalorder %v260, %v2999
          %vm3065 = vcmp.eq.s32.totalorder %v260, %v3003
          %vm3066 = vcmp.eq.s32.totalorder %v261, %v2999
          %vm3067 = vcmp.eq.s32.totalorder %v261, %v3003
          %vm3068 = vcmp.eq.s32.totalorder %v262, %v2999
          %vm3069 = vcmp.eq.s32.totalorder %v262, %v3003
          %vm3070 = vcmp.eq.s32.totalorder %v263, %v2999
          %vm3071 = vcmp.eq.s32.totalorder %v263, %v3003
          %vm3072 = vcmp.eq.s32.totalorder %v264, %v2999
          %vm3073 = vcmp.eq.s32.totalorder %v264, %v3003
          %vm3074 = vcmp.eq.s32.totalorder %v265, %v2999
          %vm3075 = vcmp.eq.s32.totalorder %v265, %v3003
          %vm3076 = vcmp.eq.s32.totalorder %v266, %v2999
          %vm3077 = vcmp.eq.s32.totalorder %v266, %v3003
          %vm3078 = vcmp.eq.s32.totalorder %v267, %v2999
          %vm3079 = vcmp.eq.s32.totalorder %v267, %v3003
          %vm3080 = vcmp.eq.s32.totalorder %v268, %v2999
          %vm3081 = vcmp.eq.s32.totalorder %v268, %v3003
          %vm3082 = vcmp.eq.s32.totalorder %v269, %v2999
          %vm3083 = vcmp.eq.s32.totalorder %v269, %v3003
          %vm3084 = vcmp.eq.s32.totalorder %v270, %v2999
          %vm3085 = vcmp.eq.s32.totalorder %v270, %v3003
          %vm3086 = vcmp.eq.s32.totalorder %v271, %v2999
          %vm3087 = vcmp.eq.s32.totalorder %v271, %v3003
          %vm3088 = vcmp.eq.s32.totalorder %v272, %v2999
          %vm3089 = vcmp.eq.s32.totalorder %v272, %v3003
          %vm3090 = vcmp.eq.s32.totalorder %v273, %v2999
          %vm3091 = vcmp.eq.s32.totalorder %v273, %v3003
          %vm3092 = vcmp.eq.s32.totalorder %v274, %v2999
          %vm3093 = vcmp.eq.s32.totalorder %v274, %v3003
          %vm3094 = vcmp.eq.s32.totalorder %v275, %v2999
          %vm3095 = vcmp.eq.s32.totalorder %v275, %v3003
          %vm3096 = vcmp.eq.s32.totalorder %v276, %v2999
          %vm3097 = vcmp.eq.s32.totalorder %v276, %v3003
          %vm3098 = vcmp.eq.s32.totalorder %v277, %v2999
          %vm3099 = vcmp.eq.s32.totalorder %v277, %v3003
          %vm3100 = vcmp.eq.s32.totalorder %v278, %v2999
          %vm3101 = vcmp.eq.s32.totalorder %v278, %v3003
          %vm3102 = vcmp.eq.s32.totalorder %v279, %v2999
          %vm3103 = vcmp.eq.s32.totalorder %v279, %v3003
          %vm3104 = vcmp.eq.s32.totalorder %v280, %v2999
          %vm3105 = vcmp.eq.s32.totalorder %v280, %v3003
          %vm3106 = vcmp.eq.s32.totalorder %v281, %v2999
          %vm3107 = vcmp.eq.s32.totalorder %v281, %v3003
          %vm3108 = vcmp.eq.s32.totalorder %v282, %v2999
          %vm3109 = vcmp.eq.s32.totalorder %v282, %v3003
          %vm3110 = vcmp.eq.s32.totalorder %v283, %v2999
          %vm3111 = vcmp.eq.s32.totalorder %v283, %v3003
          %vm3112 = vcmp.eq.s32.totalorder %v284, %v2999
          %vm3113 = vcmp.eq.s32.totalorder %v284, %v3003
          %vm3114 = vcmp.eq.s32.totalorder %v285, %v2999
          %vm3115 = vcmp.eq.s32.totalorder %v285, %v3003
          %vm3116 = vcmp.eq.s32.totalorder %v286, %v2999
          %vm3117 = vcmp.eq.s32.totalorder %v286, %v3003
          %vm3118 = vcmp.eq.s32.totalorder %v287, %v2999
          %vm3119 = vcmp.eq.s32.totalorder %v287, %v3003
          %vm3120 = vcmp.eq.s32.totalorder %v288, %v2999
          %vm3121 = vcmp.eq.s32.totalorder %v288, %v3003
          %vm3122 = vcmp.eq.s32.totalorder %v289, %v2999
          %vm3123 = vcmp.eq.s32.totalorder %v289, %v3003
          %vm3124 = vcmp.eq.s32.totalorder %v290, %v2999
          %vm3125 = vcmp.eq.s32.totalorder %v290, %v3003
          %vm3126 = vcmp.eq.s32.totalorder %v291, %v2999
          %vm3127 = vcmp.eq.s32.totalorder %v291, %v3003
          %vm3128 = vcmp.eq.s32.totalorder %v292, %v2999
          %vm3129 = vcmp.eq.s32.totalorder %v292, %v3003
          %vm3130 = vcmp.eq.s32.totalorder %v293, %v2999
          %vm3131 = vcmp.eq.s32.totalorder %v293, %v3003
          %v3133 = vlaneseq
          %v3134 = vshrl.u32 %v3133, 7
          %v3135 = vsub.s32 0, %v3134
          %v3136 = vrot.slane %v2985, %v3135
          %v3137 = vlaneseq
          %v3138 = vshrl.u32 %v3137, 7
          %v3139 = vsub.s32 4, %v3138
          %v3140 = vrot.slane %v2985, %v3139
          %v3143 = vlaneseq
          %v3144 = vshrl.u32 %v3143, 7
          %v3145 = vsub.s32 0, %v3144
          %v3146 = vrot.slane %v3136, %v3145
          %v3147 = vlaneseq
          %v3148 = vshrl.u32 %v3147, 7
          %v3149 = vsub.s32 0, %v3148
          %v3150 = vrot.slane %v3140, %v3149
          %v3151 = vsel %vm3004, %v3146, 0.0
          %v3152 = vsel %vm3005, %v3150, 0.0
          %v3153 = vsel %vm3006, %v3146, 0.0
          %v3154 = vsel %vm3007, %v3150, 0.0
          %v3155 = vsel %vm3008, %v3146, 0.0
          %v3156 = vsel %vm3009, %v3150, 0.0
          %v3157 = vsel %vm3010, %v3146, 0.0
          %v3158 = vsel %vm3011, %v3150, 0.0
          %v3159 = vsel %vm3012, %v3146, 0.0
          %v3160 = vsel %vm3013, %v3150, 0.0
          %v3161 = vsel %vm3014, %v3146, 0.0
          %v3162 = vsel %vm3015, %v3150, 0.0
          %v3163 = vsel %vm3016, %v3146, 0.0
          %v3164 = vsel %vm3017, %v3150, 0.0
          %v3165 = vsel %vm3018, %v3146, 0.0
          %v3166 = vsel %vm3019, %v3150, 0.0
          %v3167 = vsel %vm3020, %v3146, 0.0
          %v3168 = vsel %vm3021, %v3150, 0.0
          %v3169 = vsel %vm3022, %v3146, 0.0
          %v3170 = vsel %vm3023, %v3150, 0.0
          %v3171 = vsel %vm3024, %v3146, 0.0
          %v3172 = vsel %vm3025, %v3150, 0.0
          %v3173 = vsel %vm3026, %v3146, 0.0
          %v3174 = vsel %vm3027, %v3150, 0.0
          %v3175 = vsel %vm3028, %v3146, 0.0
          %v3176 = vsel %vm3029, %v3150, 0.0
          %v3177 = vsel %vm3030, %v3146, 0.0
          %v3178 = vsel %vm3031, %v3150, 0.0
          %v3179 = vsel %vm3032, %v3146, 0.0
          %v3180 = vsel %vm3033, %v3150, 0.0
          %v3181 = vsel %vm3034, %v3146, 0.0
          %v3182 = vsel %vm3035, %v3150, 0.0
          %v3183 = vsel %vm3036, %v3146, 0.0
          %v3184 = vsel %vm3037, %v3150, 0.0
          %v3185 = vsel %vm3038, %v3146, 0.0
          %v3186 = vsel %vm3039, %v3150, 0.0
          %v3187 = vsel %vm3040, %v3146, 0.0
          %v3188 = vsel %vm3041, %v3150, 0.0
          %v3189 = vsel %vm3042, %v3146, 0.0
          %v3190 = vsel %vm3043, %v3150, 0.0
          %v3191 = vsel %vm3044, %v3146, 0.0
          %v3192 = vsel %vm3045, %v3150, 0.0
          %v3193 = vsel %vm3046, %v3146, 0.0
          %v3194 = vsel %vm3047, %v3150, 0.0
          %v3195 = vsel %vm3048, %v3146, 0.0
          %v3196 = vsel %vm3049, %v3150, 0.0
          %v3197 = vsel %vm3050, %v3146, 0.0
          %v3198 = vsel %vm3051, %v3150, 0.0
          %v3199 = vsel %vm3052, %v3146, 0.0
          %v3200 = vsel %vm3053, %v3150, 0.0
          %v3201 = vsel %vm3054, %v3146, 0.0
          %v3202 = vsel %vm3055, %v3150, 0.0
          %v3203 = vsel %vm3056, %v3146, 0.0
          %v3204 = vsel %vm3057, %v3150, 0.0
          %v3205 = vsel %vm3058, %v3146, 0.0
          %v3206 = vsel %vm3059, %v3150, 0.0
          %v3207 = vsel %vm3060, %v3146, 0.0
          %v3208 = vsel %vm3061, %v3150, 0.0
          %v3209 = vsel %vm3062, %v3146, 0.0
          %v3210 = vsel %vm3063, %v3150, 0.0
          %v3211 = vsel %vm3064, %v3146, 0.0
          %v3212 = vsel %vm3065, %v3150, 0.0
          %v3213 = vsel %vm3066, %v3146, 0.0
          %v3214 = vsel %vm3067, %v3150, 0.0
          %v3215 = vsel %vm3068, %v3146, 0.0
          %v3216 = vsel %vm3069, %v3150, 0.0
          %v3217 = vsel %vm3070, %v3146, 0.0
          %v3218 = vsel %vm3071, %v3150, 0.0
          %v3219 = vsel %vm3072, %v3146, 0.0
          %v3220 = vsel %vm3073, %v3150, 0.0
          %v3221 = vsel %vm3074, %v3146, 0.0
          %v3222 = vsel %vm3075, %v3150, 0.0
          %v3223 = vsel %vm3076, %v3146, 0.0
          %v3224 = vsel %vm3077, %v3150, 0.0
          %v3225 = vsel %vm3078, %v3146, 0.0
          %v3226 = vsel %vm3079, %v3150, 0.0
          %v3227 = vsel %vm3080, %v3146, 0.0
          %v3228 = vsel %vm3081, %v3150, 0.0
          %v3229 = vsel %vm3082, %v3146, 0.0
          %v3230 = vsel %vm3083, %v3150, 0.0
          %v3231 = vsel %vm3084, %v3146, 0.0
          %v3232 = vsel %vm3085, %v3150, 0.0
          %v3233 = vsel %vm3086, %v3146, 0.0
          %v3234 = vsel %vm3087, %v3150, 0.0
          %v3235 = vsel %vm3088, %v3146, 0.0
          %v3236 = vsel %vm3089, %v3150, 0.0
          %v3237 = vsel %vm3090, %v3146, 0.0
          %v3238 = vsel %vm3091, %v3150, 0.0
          %v3239 = vsel %vm3092, %v3146, 0.0
          %v3240 = vsel %vm3093, %v3150, 0.0
          %v3241 = vsel %vm3094, %v3146, 0.0
          %v3242 = vsel %vm3095, %v3150, 0.0
          %v3243 = vsel %vm3096, %v3146, 0.0
          %v3244 = vsel %vm3097, %v3150, 0.0
          %v3245 = vsel %vm3098, %v3146, 0.0
          %v3246 = vsel %vm3099, %v3150, 0.0
          %v3247 = vsel %vm3100, %v3146, 0.0
          %v3248 = vsel %vm3101, %v3150, 0.0
          %v3249 = vsel %vm3102, %v3146, 0.0
          %v3250 = vsel %vm3103, %v3150, 0.0
          %v3251 = vsel %vm3104, %v3146, 0.0
          %v3252 = vsel %vm3105, %v3150, 0.0
          %v3253 = vsel %vm3106, %v3146, 0.0
          %v3254 = vsel %vm3107, %v3150, 0.0
          %v3255 = vsel %vm3108, %v3146, 0.0
          %v3256 = vsel %vm3109, %v3150, 0.0
          %v3257 = vsel %vm3110, %v3146, 0.0
          %v3258 = vsel %vm3111, %v3150, 0.0
          %v3259 = vsel %vm3112, %v3146, 0.0
          %v3260 = vsel %vm3113, %v3150, 0.0
          %v3261 = vsel %vm3114, %v3146, 0.0
          %v3262 = vsel %vm3115, %v3150, 0.0
          %v3263 = vsel %vm3116, %v3146, 0.0
          %v3264 = vsel %vm3117, %v3150, 0.0
          %v3265 = vsel %vm3118, %v3146, 0.0
          %v3266 = vsel %vm3119, %v3150, 0.0
          %v3267 = vsel %vm3120, %v3146, 0.0
          %v3268 = vsel %vm3121, %v3150, 0.0
          %v3269 = vsel %vm3122, %v3146, 0.0
          %v3270 = vsel %vm3123, %v3150, 0.0
          %v3271 = vsel %vm3124, %v3146, 0.0
          %v3272 = vsel %vm3125, %v3150, 0.0
          %v3273 = vsel %vm3126, %v3146, 0.0
          %v3274 = vsel %vm3127, %v3150, 0.0
          %v3275 = vsel %vm3128, %v3146, 0.0
          %v3276 = vsel %vm3129, %v3150, 0.0
          %v3277 = vsel %vm3130, %v3146, 0.0
          %v3278 = vsel %vm3131, %v3150, 0.0
          %3279 = vmatprep.subr.mxu0 %v3152
          %3280 = vmatpush1.msra.mxu0 %v3151
          %3281 = vmatprep.subr.mxu0 %v3154
          %3282 = vmatpush1.msra.mxu0 %v3153
          %3283 = vmatprep.subr.mxu0 %v3156
          %3284 = vmatpush1.msra.mxu0 %v3155
          %3285 = vmatprep.subr.mxu0 %v3158
          %3286 = vmatpush1.msra.mxu0 %v3157
          %3287 = vmatprep.subr.mxu0 %v3160
          %3288 = vmatpush1.msra.mxu0 %v3159
          %3289 = vmatprep.subr.mxu0 %v3162
          %3290 = vmatpush1.msra.mxu0 %v3161
          %3291 = vmatprep.subr.mxu0 %v3164
          %3292 = vmatpush1.msra.mxu0 %v3163
          %3293 = vmatprep.subr.mxu0 %v3166
          %3294 = vmatpush1.msra.mxu0 %v3165
          %3295 = vmatprep.subr.mxu0 %v3168
          %3296 = vmatpush1.msra.mxu0 %v3167
          %3297 = vmatprep.subr.mxu0 %v3170
          %3298 = vmatpush1.msra.mxu0 %v3169
          %3299 = vmatprep.subr.mxu0 %v3172
          %3300 = vmatpush1.msra.mxu0 %v3171
          %3301 = vmatprep.subr.mxu0 %v3174
          %3302 = vmatpush1.msra.mxu0 %v3173
          %3303 = vmatprep.subr.mxu0 %v3176
          %3304 = vmatpush1.msra.mxu0 %v3175
          %3305 = vmatprep.subr.mxu0 %v3178
          %3306 = vmatpush1.msra.mxu0 %v3177
          %3307 = vmatprep.subr.mxu0 %v3180
          %3308 = vmatpush1.msra.mxu0 %v3179
          %3309 = vmatprep.subr.mxu0 %v3182
          %3310 = vmatpush1.msra.mxu0 %v3181
          %3311 = vmatprep.subr.mxu0 %v3184
          %3312 = vmatpush1.msra.mxu0 %v3183
          %3313 = vmatprep.subr.mxu0 %v3186
          %3314 = vmatpush1.msra.mxu0 %v3185
          %3315 = vmatprep.subr.mxu0 %v3188
          %3316 = vmatpush1.msra.mxu0 %v3187
          %3317 = vmatprep.subr.mxu0 %v3190
          %3318 = vmatpush1.msra.mxu0 %v3189
          %3319 = vmatprep.subr.mxu0 %v3192
          %3320 = vmatpush1.msra.mxu0 %v3191
          %3321 = vmatprep.subr.mxu0 %v3194
          %3322 = vmatpush1.msra.mxu0 %v3193
          %3323 = vmatprep.subr.mxu0 %v3196
          %3324 = vmatpush1.msra.mxu0 %v3195
          %3325 = vmatprep.subr.mxu0 %v3198
          %3326 = vmatpush1.msra.mxu0 %v3197
          %3327 = vmatprep.subr.mxu0 %v3200
          %3328 = vmatpush1.msra.mxu0 %v3199
          %3329 = vmatprep.subr.mxu0 %v3202
          %3330 = vmatpush1.msra.mxu0 %v3201
          %3331 = vmatprep.subr.mxu0 %v3204
          %3332 = vmatpush1.msra.mxu0 %v3203
          %3333 = vmatprep.subr.mxu0 %v3206
          %3334 = vmatpush1.msra.mxu0 %v3205
          %3335 = vmatprep.subr.mxu0 %v3208
          %3336 = vmatpush1.msra.mxu0 %v3207
          %3337 = vmatprep.subr.mxu0 %v3210
          %3338 = vmatpush1.msra.mxu0 %v3209
          %3339 = vmatprep.subr.mxu0 %v3212
          %3340 = vmatpush1.msra.mxu0 %v3211
          %3341 = vmatprep.subr.mxu0 %v3214
          %3342 = vmatpush1.msra.mxu0 %v3213
          %3343 = vmatprep.mubr.f32.mxu0 %v916
          %3344 = vmatmul.mubr.f32.gmra.mrb[0].mxu0 %v183
          %v3345 = vpop.f32.mrb[0].mxu0
          %v3346 = vadd.f32 0.0, %v3345
          %v3347 = vpop.f32.mrb[0].mxu0
          %v3348 = vadd.f32 0.0, %v3347
          %3349 = vdwg.mxu0
          %3350 = vmatprep.subr.mxu0 %v3216
          %3351 = vmatpush1.msra.mxu0 %v3215
          %3352 = vmatprep.subr.mxu0 %v3218
          %3353 = vmatpush1.msra.mxu0 %v3217
          %3354 = vmatprep.subr.mxu0 %v3220
          %3355 = vmatpush1.msra.mxu0 %v3219
          %3356 = vmatprep.subr.mxu0 %v3222
          %3357 = vmatpush1.msra.mxu0 %v3221
          %3358 = vmatprep.subr.mxu0 %v3224
          %3359 = vmatpush1.msra.mxu0 %v3223
          %3360 = vmatprep.subr.mxu0 %v3226
          %3361 = vmatpush1.msra.mxu0 %v3225
          %3362 = vmatprep.subr.mxu0 %v3228
          %3363 = vmatpush1.msra.mxu0 %v3227
          %3364 = vmatprep.subr.mxu0 %v3230
          %3365 = vmatpush1.msra.mxu0 %v3229
          %3366 = vmatprep.subr.mxu0 %v3232
          %3367 = vmatpush1.msra.mxu0 %v3231
          %3368 = vmatprep.subr.mxu0 %v3234
          %3369 = vmatpush1.msra.mxu0 %v3233
          %3370 = vmatprep.subr.mxu0 %v3236
          %3371 = vmatpush1.msra.mxu0 %v3235
          %3372 = vmatprep.subr.mxu0 %v3238
          %3373 = vmatpush1.msra.mxu0 %v3237
          %3374 = vmatprep.subr.mxu0 %v3240
          %3375 = vmatpush1.msra.mxu0 %v3239
          %3376 = vmatprep.subr.mxu0 %v3242
          %3377 = vmatpush1.msra.mxu0 %v3241
          %3378 = vmatprep.subr.mxu0 %v3244
          %3379 = vmatpush1.msra.mxu0 %v3243
          %3380 = vmatprep.subr.mxu0 %v3246
          %3381 = vmatpush1.msra.mxu0 %v3245
          %3382 = vmatprep.subr.mxu0 %v3248
          %3383 = vmatpush1.msra.mxu0 %v3247
          %3384 = vmatprep.subr.mxu0 %v3250
          %3385 = vmatpush1.msra.mxu0 %v3249
          %3386 = vmatprep.subr.mxu0 %v3252
          %3387 = vmatpush1.msra.mxu0 %v3251
          %3388 = vmatprep.subr.mxu0 %v3254
          %3389 = vmatpush1.msra.mxu0 %v3253
          %3390 = vmatprep.subr.mxu0 %v3256
          %3391 = vmatpush1.msra.mxu0 %v3255
          %3392 = vmatprep.subr.mxu0 %v3258
          %3393 = vmatpush1.msra.mxu0 %v3257
          %3394 = vmatprep.subr.mxu0 %v3260
          %3395 = vmatpush1.msra.mxu0 %v3259
          %3396 = vmatprep.subr.mxu0 %v3262
          %3397 = vmatpush1.msra.mxu0 %v3261
          %3398 = vmatprep.subr.mxu0 %v3264
          %3399 = vmatpush1.msra.mxu0 %v3263
          %3400 = vmatprep.subr.mxu0 %v3266
          %3401 = vmatpush1.msra.mxu0 %v3265
          %3402 = vmatprep.subr.mxu0 %v3268
          %3403 = vmatpush1.msra.mxu0 %v3267
          %3404 = vmatprep.subr.mxu0 %v3270
          %3405 = vmatpush1.msra.mxu0 %v3269
          %3406 = vmatprep.subr.mxu0 %v3272
          %3407 = vmatpush1.msra.mxu0 %v3271
          %3408 = vmatprep.subr.mxu0 %v3274
          %3409 = vmatpush1.msra.mxu0 %v3273
          %3410 = vmatprep.subr.mxu0 %v3276
          %3411 = vmatpush1.msra.mxu0 %v3275
          %3412 = vmatprep.subr.mxu0 %v3278
          %3413 = vmatpush1.msra.mxu0 %v3277
          %3414 = vmatprep.mubr.f32.mxu0 %v917
          %3415 = vmatmul.mubr.f32.gmra.mrb[0].mxu0 %v184
          %v3416 = vpop.f32.mrb[0].mxu0
          %v3417 = vadd.f32 %v3346, %v3416
          %v3418 = vpop.f32.mrb[0].mxu0
          %v3419 = vadd.f32 %v3348, %v3418
          %3420 = vdwg.mxu0
          %v3421 = vadd.f32 %v2981, %v3417
          %v3422 = vadd.f32 %v2982, %v3419
          %vm3423 = vmand %vm1657, %vm2099
          %vm3424 = vmand %vm3423, %vm2103
          %v3425 = vsel %vm3424, %v228, 0.0
          %v3426 = vadd.s32 %v2986, %v621
          %v3427 = vlaneseq
          %v3428 = vshrl.u32 %v3427, 7
          %v3429 = vsub.s32 2, %v3428
          %v3430 = vrot.slane %v3426, %v3429
          %v3431 = vlaneseq
          %v3432 = vshrl.u32 %v3431, 7
          %v3433 = vsub.s32 6, %v3432
          %v3434 = vrot.slane %v3426, %v3433
          %v3435 = vlaneseq
          %v3436 = vshrl.u32 %v3435, 7
          %v3437 = vsub.s32 2, %v3436
          %v3438 = vrot.slane %v3430, %v3437
          %v3439 = vlaneseq
          %v3440 = vshrl.u32 %v3439, 7
          %v3441 = vsub.s32 2, %v3440
          %v3442 = vrot.slane %v3434, %v3441
          %vm3443 = vcmp.eq.s32.totalorder %v230, %v3438
          %vm3444 = vcmp.eq.s32.totalorder %v230, %v3442
          %vm3445 = vcmp.eq.s32.totalorder %v231, %v3438
          %vm3446 = vcmp.eq.s32.totalorder %v231, %v3442
          %vm3447 = vcmp.eq.s32.totalorder %v232, %v3438
          %vm3448 = vcmp.eq.s32.totalorder %v232, %v3442
          %vm3449 = vcmp.eq.s32.totalorder %v233, %v3438
          %vm3450 = vcmp.eq.s32.totalorder %v233, %v3442
          %vm3451 = vcmp.eq.s32.totalorder %v234, %v3438
          %vm3452 = vcmp.eq.s32.totalorder %v234, %v3442
          %vm3453 = vcmp.eq.s32.totalorder %v235, %v3438
          %vm3454 = vcmp.eq.s32.totalorder %v235, %v3442
          %vm3455 = vcmp.eq.s32.totalorder %v236, %v3438
          %vm3456 = vcmp.eq.s32.totalorder %v236, %v3442
          %vm3457 = vcmp.eq.s32.totalorder %v237, %v3438
          %vm3458 = vcmp.eq.s32.totalorder %v237, %v3442
          %vm3459 = vcmp.eq.s32.totalorder %v238, %v3438
          %vm3460 = vcmp.eq.s32.totalorder %v238, %v3442
          %vm3461 = vcmp.eq.s32.totalorder %v239, %v3438
          %vm3462 = vcmp.eq.s32.totalorder %v239, %v3442
          %vm3463 = vcmp.eq.s32.totalorder %v240, %v3438
          %vm3464 = vcmp.eq.s32.totalorder %v240, %v3442
          %vm3465 = vcmp.eq.s32.totalorder %v241, %v3438
          %vm3466 = vcmp.eq.s32.totalorder %v241, %v3442
          %vm3467 = vcmp.eq.s32.totalorder %v242, %v3438
          %vm3468 = vcmp.eq.s32.totalorder %v242, %v3442
          %vm3469 = vcmp.eq.s32.totalorder %v243, %v3438
          %vm3470 = vcmp.eq.s32.totalorder %v243, %v3442
          %vm3471 = vcmp.eq.s32.totalorder %v244, %v3438
          %vm3472 = vcmp.eq.s32.totalorder %v244, %v3442
          %vm3473 = vcmp.eq.s32.totalorder %v245, %v3438
          %vm3474 = vcmp.eq.s32.totalorder %v245, %v3442
          %vm3475 = vcmp.eq.s32.totalorder %v246, %v3438
          %vm3476 = vcmp.eq.s32.totalorder %v246, %v3442
          %vm3477 = vcmp.eq.s32.totalorder %v247, %v3438
          %vm3478 = vcmp.eq.s32.totalorder %v247, %v3442
          %vm3479 = vcmp.eq.s32.totalorder %v248, %v3438
          %vm3480 = vcmp.eq.s32.totalorder %v248, %v3442
          %vm3481 = vcmp.eq.s32.totalorder %v249, %v3438
          %vm3482 = vcmp.eq.s32.totalorder %v249, %v3442
          %vm3483 = vcmp.eq.s32.totalorder %v250, %v3438
          %vm3484 = vcmp.eq.s32.totalorder %v250, %v3442
          %vm3485 = vcmp.eq.s32.totalorder %v251, %v3438
          %vm3486 = vcmp.eq.s32.totalorder %v251, %v3442
          %vm3487 = vcmp.eq.s32.totalorder %v252, %v3438
          %vm3488 = vcmp.eq.s32.totalorder %v252, %v3442
          %vm3489 = vcmp.eq.s32.totalorder %v253, %v3438
          %vm3490 = vcmp.eq.s32.totalorder %v253, %v3442
          %vm3491 = vcmp.eq.s32.totalorder %v254, %v3438
          %vm3492 = vcmp.eq.s32.totalorder %v254, %v3442
          %vm3493 = vcmp.eq.s32.totalorder %v255, %v3438
          %vm3494 = vcmp.eq.s32.totalorder %v255, %v3442
          %vm3495 = vcmp.eq.s32.totalorder %v256, %v3438
          %vm3496 = vcmp.eq.s32.totalorder %v256, %v3442
          %vm3497 = vcmp.eq.s32.totalorder %v257, %v3438
          %vm3498 = vcmp.eq.s32.totalorder %v257, %v3442
          %vm3499 = vcmp.eq.s32.totalorder %v258, %v3438
          %vm3500 = vcmp.eq.s32.totalorder %v258, %v3442
          %vm3501 = vcmp.eq.s32.totalorder %v259, %v3438
          %vm3502 = vcmp.eq.s32.totalorder %v259, %v3442
          %vm3503 = vcmp.eq.s32.totalorder %v260, %v3438
          %vm3504 = vcmp.eq.s32.totalorder %v260, %v3442
          %vm3505 = vcmp.eq.s32.totalorder %v261, %v3438
          %vm3506 = vcmp.eq.s32.totalorder %v261, %v3442
          %vm3507 = vcmp.eq.s32.totalorder %v262, %v3438
          %vm3508 = vcmp.eq.s32.totalorder %v262, %v3442
          %vm3509 = vcmp.eq.s32.totalorder %v263, %v3438
          %vm3510 = vcmp.eq.s32.totalorder %v263, %v3442
          %vm3511 = vcmp.eq.s32.totalorder %v264, %v3438
          %vm3512 = vcmp.eq.s32.totalorder %v264, %v3442
          %vm3513 = vcmp.eq.s32.totalorder %v265, %v3438
          %vm3514 = vcmp.eq.s32.totalorder %v265, %v3442
          %vm3515 = vcmp.eq.s32.totalorder %v266, %v3438
          %vm3516 = vcmp.eq.s32.totalorder %v266, %v3442
          %vm3517 = vcmp.eq.s32.totalorder %v267, %v3438
          %vm3518 = vcmp.eq.s32.totalorder %v267, %v3442
          %vm3519 = vcmp.eq.s32.totalorder %v268, %v3438
          %vm3520 = vcmp.eq.s32.totalorder %v268, %v3442
          %vm3521 = vcmp.eq.s32.totalorder %v269, %v3438
          %vm3522 = vcmp.eq.s32.totalorder %v269, %v3442
          %vm3523 = vcmp.eq.s32.totalorder %v270, %v3438
          %vm3524 = vcmp.eq.s32.totalorder %v270, %v3442
          %vm3525 = vcmp.eq.s32.totalorder %v271, %v3438
          %vm3526 = vcmp.eq.s32.totalorder %v271, %v3442
          %vm3527 = vcmp.eq.s32.totalorder %v272, %v3438
          %vm3528 = vcmp.eq.s32.totalorder %v272, %v3442
          %vm3529 = vcmp.eq.s32.totalorder %v273, %v3438
          %vm3530 = vcmp.eq.s32.totalorder %v273, %v3442
          %vm3531 = vcmp.eq.s32.totalorder %v274, %v3438
          %vm3532 = vcmp.eq.s32.totalorder %v274, %v3442
          %vm3533 = vcmp.eq.s32.totalorder %v275, %v3438
          %vm3534 = vcmp.eq.s32.totalorder %v275, %v3442
          %vm3535 = vcmp.eq.s32.totalorder %v276, %v3438
          %vm3536 = vcmp.eq.s32.totalorder %v276, %v3442
          %vm3537 = vcmp.eq.s32.totalorder %v277, %v3438
          %vm3538 = vcmp.eq.s32.totalorder %v277, %v3442
          %vm3539 = vcmp.eq.s32.totalorder %v278, %v3438
          %vm3540 = vcmp.eq.s32.totalorder %v278, %v3442
          %vm3541 = vcmp.eq.s32.totalorder %v279, %v3438
          %vm3542 = vcmp.eq.s32.totalorder %v279, %v3442
          %vm3543 = vcmp.eq.s32.totalorder %v280, %v3438
          %vm3544 = vcmp.eq.s32.totalorder %v280, %v3442
          %vm3545 = vcmp.eq.s32.totalorder %v281, %v3438
          %vm3546 = vcmp.eq.s32.totalorder %v281, %v3442
          %vm3547 = vcmp.eq.s32.totalorder %v282, %v3438
          %vm3548 = vcmp.eq.s32.totalorder %v282, %v3442
          %vm3549 = vcmp.eq.s32.totalorder %v283, %v3438
          %vm3550 = vcmp.eq.s32.totalorder %v283, %v3442
          %vm3551 = vcmp.eq.s32.totalorder %v284, %v3438
          %vm3552 = vcmp.eq.s32.totalorder %v284, %v3442
          %vm3553 = vcmp.eq.s32.totalorder %v285, %v3438
          %vm3554 = vcmp.eq.s32.totalorder %v285, %v3442
          %vm3555 = vcmp.eq.s32.totalorder %v286, %v3438
          %vm3556 = vcmp.eq.s32.totalorder %v286, %v3442
          %vm3557 = vcmp.eq.s32.totalorder %v287, %v3438
          %vm3558 = vcmp.eq.s32.totalorder %v287, %v3442
          %vm3559 = vcmp.eq.s32.totalorder %v288, %v3438
          %vm3560 = vcmp.eq.s32.totalorder %v288, %v3442
          %vm3561 = vcmp.eq.s32.totalorder %v289, %v3438
          %vm3562 = vcmp.eq.s32.totalorder %v289, %v3442
          %vm3563 = vcmp.eq.s32.totalorder %v290, %v3438
          %vm3564 = vcmp.eq.s32.totalorder %v290, %v3442
          %vm3565 = vcmp.eq.s32.totalorder %v291, %v3438
          %vm3566 = vcmp.eq.s32.totalorder %v291, %v3442
          %vm3567 = vcmp.eq.s32.totalorder %v292, %v3438
          %vm3568 = vcmp.eq.s32.totalorder %v292, %v3442
          %vm3569 = vcmp.eq.s32.totalorder %v293, %v3438
          %vm3570 = vcmp.eq.s32.totalorder %v293, %v3442
          %v3572 = vlaneseq
          %v3573 = vshrl.u32 %v3572, 7
          %v3574 = vsub.s32 0, %v3573
          %v3575 = vrot.slane %v3425, %v3574
          %v3576 = vlaneseq
          %v3577 = vshrl.u32 %v3576, 7
          %v3578 = vsub.s32 4, %v3577
          %v3579 = vrot.slane %v3425, %v3578
          %v3582 = vlaneseq
          %v3583 = vshrl.u32 %v3582, 7
          %v3584 = vsub.s32 0, %v3583
          %v3585 = vrot.slane %v3575, %v3584
          %v3586 = vlaneseq
          %v3587 = vshrl.u32 %v3586, 7
          %v3588 = vsub.s32 0, %v3587
          %v3589 = vrot.slane %v3579, %v3588
          %v3590 = vsel %vm3443, %v3585, 0.0
          %v3591 = vsel %vm3444, %v3589, 0.0
          %v3592 = vsel %vm3445, %v3585, 0.0
          %v3593 = vsel %vm3446, %v3589, 0.0
          %v3594 = vsel %vm3447, %v3585, 0.0
          %v3595 = vsel %vm3448, %v3589, 0.0
          %v3596 = vsel %vm3449, %v3585, 0.0
          %v3597 = vsel %vm3450, %v3589, 0.0
          %v3598 = vsel %vm3451, %v3585, 0.0
          %v3599 = vsel %vm3452, %v3589, 0.0
          %v3600 = vsel %vm3453, %v3585, 0.0
          %v3601 = vsel %vm3454, %v3589, 0.0
          %v3602 = vsel %vm3455, %v3585, 0.0
          %v3603 = vsel %vm3456, %v3589, 0.0
          %v3604 = vsel %vm3457, %v3585, 0.0
          %v3605 = vsel %vm3458, %v3589, 0.0
          %v3606 = vsel %vm3459, %v3585, 0.0
          %v3607 = vsel %vm3460, %v3589, 0.0
          %v3608 = vsel %vm3461, %v3585, 0.0
          %v3609 = vsel %vm3462, %v3589, 0.0
          %v3610 = vsel %vm3463, %v3585, 0.0
          %v3611 = vsel %vm3464, %v3589, 0.0
          %v3612 = vsel %vm3465, %v3585, 0.0
          %v3613 = vsel %vm3466, %v3589, 0.0
          %v3614 = vsel %vm3467, %v3585, 0.0
          %v3615 = vsel %vm3468, %v3589, 0.0
          %v3616 = vsel %vm3469, %v3585, 0.0
          %v3617 = vsel %vm3470, %v3589, 0.0
          %v3618 = vsel %vm3471, %v3585, 0.0
          %v3619 = vsel %vm3472, %v3589, 0.0
          %v3620 = vsel %vm3473, %v3585, 0.0
          %v3621 = vsel %vm3474, %v3589, 0.0
          %v3622 = vsel %vm3475, %v3585, 0.0
          %v3623 = vsel %vm3476, %v3589, 0.0
          %v3624 = vsel %vm3477, %v3585, 0.0
          %v3625 = vsel %vm3478, %v3589, 0.0
          %v3626 = vsel %vm3479, %v3585, 0.0
          %v3627 = vsel %vm3480, %v3589, 0.0
          %v3628 = vsel %vm3481, %v3585, 0.0
          %v3629 = vsel %vm3482, %v3589, 0.0
          %v3630 = vsel %vm3483, %v3585, 0.0
          %v3631 = vsel %vm3484, %v3589, 0.0
          %v3632 = vsel %vm3485, %v3585, 0.0
          %v3633 = vsel %vm3486, %v3589, 0.0
          %v3634 = vsel %vm3487, %v3585, 0.0
          %v3635 = vsel %vm3488, %v3589, 0.0
          %v3636 = vsel %vm3489, %v3585, 0.0
          %v3637 = vsel %vm3490, %v3589, 0.0
          %v3638 = vsel %vm3491, %v3585, 0.0
          %v3639 = vsel %vm3492, %v3589, 0.0
          %v3640 = vsel %vm3493, %v3585, 0.0
          %v3641 = vsel %vm3494, %v3589, 0.0
          %v3642 = vsel %vm3495, %v3585, 0.0
          %v3643 = vsel %vm3496, %v3589, 0.0
          %v3644 = vsel %vm3497, %v3585, 0.0
          %v3645 = vsel %vm3498, %v3589, 0.0
          %v3646 = vsel %vm3499, %v3585, 0.0
          %v3647 = vsel %vm3500, %v3589, 0.0
          %v3648 = vsel %vm3501, %v3585, 0.0
          %v3649 = vsel %vm3502, %v3589, 0.0
          %v3650 = vsel %vm3503, %v3585, 0.0
          %v3651 = vsel %vm3504, %v3589, 0.0
          %v3652 = vsel %vm3505, %v3585, 0.0
          %v3653 = vsel %vm3506, %v3589, 0.0
          %v3654 = vsel %vm3507, %v3585, 0.0
          %v3655 = vsel %vm3508, %v3589, 0.0
          %v3656 = vsel %vm3509, %v3585, 0.0
          %v3657 = vsel %vm3510, %v3589, 0.0
          %v3658 = vsel %vm3511, %v3585, 0.0
          %v3659 = vsel %vm3512, %v3589, 0.0
          %v3660 = vsel %vm3513, %v3585, 0.0
          %v3661 = vsel %vm3514, %v3589, 0.0
          %v3662 = vsel %vm3515, %v3585, 0.0
          %v3663 = vsel %vm3516, %v3589, 0.0
          %v3664 = vsel %vm3517, %v3585, 0.0
          %v3665 = vsel %vm3518, %v3589, 0.0
          %v3666 = vsel %vm3519, %v3585, 0.0
          %v3667 = vsel %vm3520, %v3589, 0.0
          %v3668 = vsel %vm3521, %v3585, 0.0
          %v3669 = vsel %vm3522, %v3589, 0.0
          %v3670 = vsel %vm3523, %v3585, 0.0
          %v3671 = vsel %vm3524, %v3589, 0.0
          %v3672 = vsel %vm3525, %v3585, 0.0
          %v3673 = vsel %vm3526, %v3589, 0.0
          %v3674 = vsel %vm3527, %v3585, 0.0
          %v3675 = vsel %vm3528, %v3589, 0.0
          %v3676 = vsel %vm3529, %v3585, 0.0
          %v3677 = vsel %vm3530, %v3589, 0.0
          %v3678 = vsel %vm3531, %v3585, 0.0
          %v3679 = vsel %vm3532, %v3589, 0.0
          %v3680 = vsel %vm3533, %v3585, 0.0
          %v3681 = vsel %vm3534, %v3589, 0.0
          %v3682 = vsel %vm3535, %v3585, 0.0
          %v3683 = vsel %vm3536, %v3589, 0.0
          %v3684 = vsel %vm3537, %v3585, 0.0
          %v3685 = vsel %vm3538, %v3589, 0.0
          %v3686 = vsel %vm3539, %v3585, 0.0
          %v3687 = vsel %vm3540, %v3589, 0.0
          %v3688 = vsel %vm3541, %v3585, 0.0
          %v3689 = vsel %vm3542, %v3589, 0.0
          %v3690 = vsel %vm3543, %v3585, 0.0
          %v3691 = vsel %vm3544, %v3589, 0.0
          %v3692 = vsel %vm3545, %v3585, 0.0
          %v3693 = vsel %vm3546, %v3589, 0.0
          %v3694 = vsel %vm3547, %v3585, 0.0
          %v3695 = vsel %vm3548, %v3589, 0.0
          %v3696 = vsel %vm3549, %v3585, 0.0
          %v3697 = vsel %vm3550, %v3589, 0.0
          %v3698 = vsel %vm3551, %v3585, 0.0
          %v3699 = vsel %vm3552, %v3589, 0.0
          %v3700 = vsel %vm3553, %v3585, 0.0
          %v3701 = vsel %vm3554, %v3589, 0.0
          %v3702 = vsel %vm3555, %v3585, 0.0
          %v3703 = vsel %vm3556, %v3589, 0.0
          %v3704 = vsel %vm3557, %v3585, 0.0
          %v3705 = vsel %vm3558, %v3589, 0.0
          %v3706 = vsel %vm3559, %v3585, 0.0
          %v3707 = vsel %vm3560, %v3589, 0.0
          %v3708 = vsel %vm3561, %v3585, 0.0
          %v3709 = vsel %vm3562, %v3589, 0.0
          %v3710 = vsel %vm3563, %v3585, 0.0
          %v3711 = vsel %vm3564, %v3589, 0.0
          %v3712 = vsel %vm3565, %v3585, 0.0
          %v3713 = vsel %vm3566, %v3589, 0.0
          %v3714 = vsel %vm3567, %v3585, 0.0
          %v3715 = vsel %vm3568, %v3589, 0.0
          %v3716 = vsel %vm3569, %v3585, 0.0
          %v3717 = vsel %vm3570, %v3589, 0.0
          %3718 = vmatprep.subr.mxu0 %v3591
          %3719 = vmatpush1.msra.mxu0 %v3590
          %3720 = vmatprep.subr.mxu0 %v3593
          %3721 = vmatpush1.msra.mxu0 %v3592
          %3722 = vmatprep.subr.mxu0 %v3595
          %3723 = vmatpush1.msra.mxu0 %v3594
          %3724 = vmatprep.subr.mxu0 %v3597
          %3725 = vmatpush1.msra.mxu0 %v3596
          %3726 = vmatprep.subr.mxu0 %v3599
          %3727 = vmatpush1.msra.mxu0 %v3598
          %3728 = vmatprep.subr.mxu0 %v3601
          %3729 = vmatpush1.msra.mxu0 %v3600
          %3730 = vmatprep.subr.mxu0 %v3603
          %3731 = vmatpush1.msra.mxu0 %v3602
          %3732 = vmatprep.subr.mxu0 %v3605
          %3733 = vmatpush1.msra.mxu0 %v3604
          %3734 = vmatprep.subr.mxu0 %v3607
          %3735 = vmatpush1.msra.mxu0 %v3606
          %3736 = vmatprep.subr.mxu0 %v3609
          %3737 = vmatpush1.msra.mxu0 %v3608
          %3738 = vmatprep.subr.mxu0 %v3611
          %3739 = vmatpush1.msra.mxu0 %v3610
          %3740 = vmatprep.subr.mxu0 %v3613
          %3741 = vmatpush1.msra.mxu0 %v3612
          %3742 = vmatprep.subr.mxu0 %v3615
          %3743 = vmatpush1.msra.mxu0 %v3614
          %3744 = vmatprep.subr.mxu0 %v3617
          %3745 = vmatpush1.msra.mxu0 %v3616
          %3746 = vmatprep.subr.mxu0 %v3619
          %3747 = vmatpush1.msra.mxu0 %v3618
          %3748 = vmatprep.subr.mxu0 %v3621
          %3749 = vmatpush1.msra.mxu0 %v3620
          %3750 = vmatprep.subr.mxu0 %v3623
          %3751 = vmatpush1.msra.mxu0 %v3622
          %3752 = vmatprep.subr.mxu0 %v3625
          %3753 = vmatpush1.msra.mxu0 %v3624
          %3754 = vmatprep.subr.mxu0 %v3627
          %3755 = vmatpush1.msra.mxu0 %v3626
          %3756 = vmatprep.subr.mxu0 %v3629
          %3757 = vmatpush1.msra.mxu0 %v3628
          %3758 = vmatprep.subr.mxu0 %v3631
          %3759 = vmatpush1.msra.mxu0 %v3630
          %3760 = vmatprep.subr.mxu0 %v3633
          %3761 = vmatpush1.msra.mxu0 %v3632
          %3762 = vmatprep.subr.mxu0 %v3635
          %3763 = vmatpush1.msra.mxu0 %v3634
          %3764 = vmatprep.subr.mxu0 %v3637
          %3765 = vmatpush1.msra.mxu0 %v3636
          %3766 = vmatprep.subr.mxu0 %v3639
          %3767 = vmatpush1.msra.mxu0 %v3638
          %3768 = vmatprep.subr.mxu0 %v3641
          %3769 = vmatpush1.msra.mxu0 %v3640
          %3770 = vmatprep.subr.mxu0 %v3643
          %3771 = vmatpush1.msra.mxu0 %v3642
          %3772 = vmatprep.subr.mxu0 %v3645
          %3773 = vmatpush1.msra.mxu0 %v3644
          %3774 = vmatprep.subr.mxu0 %v3647
          %3775 = vmatpush1.msra.mxu0 %v3646
          %3776 = vmatprep.subr.mxu0 %v3649
          %3777 = vmatpush1.msra.mxu0 %v3648
          %3778 = vmatprep.subr.mxu0 %v3651
          %3779 = vmatpush1.msra.mxu0 %v3650
          %3780 = vmatprep.subr.mxu0 %v3653
          %3781 = vmatpush1.msra.mxu0 %v3652
          %3782 = vmatprep.mubr.f32.mxu0 %v916
          %3783 = vmatmul.mubr.f32.gmra.mrb[0].mxu0 %v183
          %v3784 = vpop.f32.mrb[0].mxu0
          %v3785 = vadd.f32 0.0, %v3784
          %v3786 = vpop.f32.mrb[0].mxu0
          %v3787 = vadd.f32 0.0, %v3786
          %3788 = vdwg.mxu0
          %3789 = vmatprep.subr.mxu0 %v3655
          %3790 = vmatpush1.msra.mxu0 %v3654
          %3791 = vmatprep.subr.mxu0 %v3657
          %3792 = vmatpush1.msra.mxu0 %v3656
          %3793 = vmatprep.subr.mxu0 %v3659
          %3794 = vmatpush1.msra.mxu0 %v3658
          %3795 = vmatprep.subr.mxu0 %v3661
          %3796 = vmatpush1.msra.mxu0 %v3660
          %3797 = vmatprep.subr.mxu0 %v3663
          %3798 = vmatpush1.msra.mxu0 %v3662
          %3799 = vmatprep.subr.mxu0 %v3665
          %3800 = vmatpush1.msra.mxu0 %v3664
          %3801 = vmatprep.subr.mxu0 %v3667
          %3802 = vmatpush1.msra.mxu0 %v3666
          %3803 = vmatprep.subr.mxu0 %v3669
          %3804 = vmatpush1.msra.mxu0 %v3668
          %3805 = vmatprep.subr.mxu0 %v3671
          %3806 = vmatpush1.msra.mxu0 %v3670
          %3807 = vmatprep.subr.mxu0 %v3673
          %3808 = vmatpush1.msra.mxu0 %v3672
          %3809 = vmatprep.subr.mxu0 %v3675
          %3810 = vmatpush1.msra.mxu0 %v3674
          %3811 = vmatprep.subr.mxu0 %v3677
          %3812 = vmatpush1.msra.mxu0 %v3676
          %3813 = vmatprep.subr.mxu0 %v3679
          %3814 = vmatpush1.msra.mxu0 %v3678
          %3815 = vmatprep.subr.mxu0 %v3681
          %3816 = vmatpush1.msra.mxu0 %v3680
          %3817 = vmatprep.subr.mxu0 %v3683
          %3818 = vmatpush1.msra.mxu0 %v3682
          %3819 = vmatprep.subr.mxu0 %v3685
          %3820 = vmatpush1.msra.mxu0 %v3684
          %3821 = vmatprep.subr.mxu0 %v3687
          %3822 = vmatpush1.msra.mxu0 %v3686
          %3823 = vmatprep.subr.mxu0 %v3689
          %3824 = vmatpush1.msra.mxu0 %v3688
          %3825 = vmatprep.subr.mxu0 %v3691
          %3826 = vmatpush1.msra.mxu0 %v3690
          %3827 = vmatprep.subr.mxu0 %v3693
          %3828 = vmatpush1.msra.mxu0 %v3692
          %3829 = vmatprep.subr.mxu0 %v3695
          %3830 = vmatpush1.msra.mxu0 %v3694
          %3831 = vmatprep.subr.mxu0 %v3697
          %3832 = vmatpush1.msra.mxu0 %v3696
          %3833 = vmatprep.subr.mxu0 %v3699
          %3834 = vmatpush1.msra.mxu0 %v3698
          %3835 = vmatprep.subr.mxu0 %v3701
          %3836 = vmatpush1.msra.mxu0 %v3700
          %3837 = vmatprep.subr.mxu0 %v3703
          %3838 = vmatpush1.msra.mxu0 %v3702
          %3839 = vmatprep.subr.mxu0 %v3705
          %3840 = vmatpush1.msra.mxu0 %v3704
          %3841 = vmatprep.subr.mxu0 %v3707
          %3842 = vmatpush1.msra.mxu0 %v3706
          %3843 = vmatprep.subr.mxu0 %v3709
          %3844 = vmatpush1.msra.mxu0 %v3708
          %3845 = vmatprep.subr.mxu0 %v3711
          %3846 = vmatpush1.msra.mxu0 %v3710
          %3847 = vmatprep.subr.mxu0 %v3713
          %3848 = vmatpush1.msra.mxu0 %v3712
          %3849 = vmatprep.subr.mxu0 %v3715
          %3850 = vmatpush1.msra.mxu0 %v3714
          %3851 = vmatprep.subr.mxu0 %v3717
          %3852 = vmatpush1.msra.mxu0 %v3716
          %3853 = vmatprep.mubr.f32.mxu0 %v917
          %3854 = vmatmul.mubr.f32.gmra.mrb[0].mxu0 %v184
          %v3855 = vpop.f32.mrb[0].mxu0
          %v3856 = vadd.f32 %v3785, %v3855
          %v3857 = vpop.f32.mrb[0].mxu0
          %v3858 = vadd.f32 %v3787, %v3857
          %3859 = vdwg.mxu0
          %v3860 = vadd.f32 %v3421, %v3856
          %v3861 = vadd.f32 %v3422, %v3858
          %v3864 = vcombine.low %v3860, %v3861
          %s3866 = smul.addr %s185, 4
          %s3867 = scalar_lea.vmem [#allocation3], %s3866
          %3868 = vst [vmem:[%s3867] sm:$0x77] %v3864
        $region40: #{tpu_custom_call.1} parent=32 // loop_footer
          %s181 = sadd.s32 1, %s177
        $region41: #{tpu_custom_call.1} parent=32 // loop_footer_branch
          %176 = sbr.rel target = $region37
        $region42: #{tpu_custom_call.1} parent=32 // loop_exit
          _
        %v3869 = vld [vmem:[#allocation2] sm:$0x77]
        %v3870 = vld [vmem:[#allocation2 + $0x8] sm:$0x77]
        %v3871 = vld [vmem:[#allocation3] sm:$0x77]
        %v3872 = vld [vmem:[#allocation3 + $0x8] sm:$0x77]
        %v3873 = vadd.f32 %v3869, %v3871
        %v3874 = vadd.f32 %v3870, %v3872
        %3875 = vst [vmem:[#allocation2] sm:$0x77] %v3873
        %3876 = vst [vmem:[#allocation2 + $0x8] sm:$0x77] %v3874
      $region33: #{tpu_custom_call.1} parent=27 // loop_footer
        %s175 = sadd.s32 1, %s171
      $region34: #{tpu_custom_call.1} parent=27 // loop_footer_branch
        %170 = sbr.rel target = $region30
      $region35: #{tpu_custom_call.1} parent=27 // loop_exit
        _
      %v3877 = vld [vmem:[#allocation2] sm:$0x77]
      %v3878 = vld [vmem:[#allocation2 + $0x8] sm:$0x77]
      %3879 = vst [vmem:[%s163] sm:$0x77] %v3877
      %3880 = vst [vmem:[%s163 + $0x8] sm:$0x77] %v3878
      %p3881 = scmp.lt.s32.totalorder %s13, 1
      %s3882 = scalar_select %p3881, %s13, 1
      %s3883 = smul.addr %s3882, 4
      %s3884 = smul.addr %s3883, 4
      %s3885 = scalar_lea.vmem %s2, %s3884
      // Predicated region
      $region43: #{tpu_custom_call.1} parent=27 // pred_check
        %p3886 = pneg %p83
      $region44: #{tpu_custom_call.1} parent=27 // pred_check_branch
        %3888 = sbr.rel (%p3886) target = $region46
      $region45: #{tpu_custom_call.1} parent=27 // pred_region
        _
      $region46: #{tpu_custom_call.1} parent=27 // pred_fallthru
        _
    $region28: #{tpu_custom_call.1} parent=5 // pred_fallthru
      _
    %p3889 = scmp.le.s32.totalorder 2, %s8
    // Predicated region
    $region47: #{tpu_custom_call.1} parent=5 // pred_check
      %p3890 = pneg %p3889
    $region48: #{tpu_custom_call.1} parent=5 // pred_check_branch
      %3892 = sbr.rel (%p3890) target = $region50
    $region49: #{tpu_custom_call.1} parent=5 // pred_region
      %s3893 = ssub.s32 %s8, 2
      // Predicated region
      $region51: #{tpu_custom_call.1} parent=49 // pred_check
        %p3894 = pneg %p89
      $region52: #{tpu_custom_call.1} parent=49 // pred_check_branch
        %3896 = sbr.rel (%p3894) target = $region54
      $region53: #{tpu_custom_call.1} parent=49 // pred_region
        %p3897 = scmp.lt.s32.totalorder %s14, 1
        %s3898 = scalar_select %p3897, %s14, 1
        %s3899 = smul.addr %s3898, 4
        %s3900 = smul.addr %s3899, 4
        %s3901 = scalar_lea.vmem %s2, %s3900
      $region54: #{tpu_custom_call.1} parent=49 // pred_fallthru
        _
    $region50: #{tpu_custom_call.1} parent=5 // pred_fallthru
      _
  $region6: #{tpu_custom_call.1} parent=0 // loop_footer
    %s12 = sadd.s32 1, %s8
  $region7: #{tpu_custom_call.1} parent=0 // loop_footer_branch
    %7 = sbr.rel target = $region3
  $region8: #{tpu_custom_call.1} parent=0 // loop_exit
    _

</llo_original>
